<compile_context>
chip_gen: v7x
topology: tpu7x:2x2x1
jax: 0.10.0
libtpu: 0.0.40
codegen_flags: <defaults>
</compile_context>

<pallas_src>
import functools
import math

import jax
import jax.numpy as jnp
from jax import lax
from jax.experimental import pallas as pl
from jax.experimental.pallas import tpu as pltpu


def _gelu_exact(x):
    return 0.5 * x * (1.0 + lax.erf(x / jnp.sqrt(2.0).astype(x.dtype)))


def _layer_norm(x, w, b, eps):
    mean = jnp.mean(x, axis=-1, keepdims=True)
    var = jnp.mean((x - mean) ** 2, axis=-1, keepdims=True)
    return (x - mean) * lax.rsqrt(var + eps) * w + b


def _encoder_layer_kernel(hs_ref, pb_ref,
                          qw_ref, qb_ref, kw_ref, kb_ref, vw_ref, vb_ref,
                          ow_ref, ob_ref, gw_ref, gb_ref, gc_ref,
                          ln1w_ref, ln1b_ref,
                          ff1w_ref, ff1b_ref, ff2w_ref, ff2b_ref,
                          adw_ref, adb_ref, auw_ref, aub_ref,
                          ln2w_ref, ln2b_ref,
                          out_ref,
                          k_scr, v_scr,
                          *, num_heads, head_dim, q_tile, eps,
                          compute_dtype, exp_dtype, pb_resident):
    cdt = compute_dtype
    nh, hd = num_heads, head_dim
    T = hs_ref.shape[1]
    qi = pl.program_id(1)

    # ---- K / V projections: once per batch element, cached transposed & head-major.
    #      W (out,in) contracted with X (T,in) on 'in' gives proj^T = (out, T) directly,
    #      so the head split is just a tile-aligned row reshape (hd % 8 == 0) and the
    #      caches are lane-dense in T (no masked per-head lane copies, no padding). ----
    @pl.when(qi == 0)
    def _():
        x_all = hs_ref[0].astype(cdt)                                        # (T, H)
        k_t = lax.dot_general(kw_ref[...], x_all, (((1,), (1,)), ((), ())),
                              preferred_element_type=jnp.float32) + kb_ref[...]
        v_t = lax.dot_general(vw_ref[...], x_all, (((1,), (1,)), ((), ())),
                              preferred_element_type=jnp.float32) + vb_ref[...]
        k_scr[...] = k_t.reshape(nh, hd, T).astype(cdt)                      # (nh, hd, T)
        v_scr[...] = v_t.reshape(nh, hd, T).astype(cdt)                      # (nh, hd, T)

    q_start = pl.multiple_of(qi * q_tile, q_tile)
    x_q = hs_ref[0, pl.ds(q_start, q_tile), :].astype(jnp.float32)           # (TQ, H)
    x_q_c = x_q.astype(cdt)

    # ---- Q projection (head_dim**-0.5 folded into weight/bias in the wrapper) ----
    q = (jnp.dot(x_q_c, qw_ref[...], preferred_element_type=jnp.float32)
         + qb_ref[...]).astype(cdt)                                          # (TQ, H)
    q_h = jnp.stack([q[:, h * hd:(h + 1) * hd] for h in range(nh)], axis=0)  # (nh, TQ, hd)

    # ---- attention scores, batched over heads vs the transposed K cache (NN) ----
    scores = jnp.einsum("hqd,hdk->hqk", q_h, k_scr[...],
                        preferred_element_type=jnp.float32)                  # (nh, TQ, T)

    # ---- gated relative position bias: ONE block-diagonal matmul for all heads ----
    gate_logits = jnp.dot(x_q_c, gw_ref[...],
                          preferred_element_type=jnp.float32) + gb_ref[...]  # (TQ, 2*nh)
    gates = jax.nn.sigmoid(gate_logits)
    gate_a = gates[:, :nh]
    gate_b = gates[:, nh:]
    gate_out = gate_a * (gate_b * gc_ref[...] - 1.0) + 2.0                   # (TQ, nh)
    gate_out_h = gate_out.T[:, :, None].astype(cdt)                          # (nh, TQ, 1)

    if pb_resident:
        pb_blk = pb_ref[:, pl.ds(q_start, q_tile), :]                        # (nh, TQ, T)
    else:
        pb_blk = pb_ref[...]

    # bf16 gate*bias product; promotion to f32 only happens in the add with scores.
    logits = scores + gate_out_h * pb_blk
    m = jnp.max(logits, axis=-1, keepdims=True)
    e = jnp.exp((logits - m).astype(exp_dtype))           # bf16 exp on v6e/v7x, f32 on v5e
    denom = jnp.sum(e.astype(jnp.float32), axis=-1, keepdims=True)
    inv = pl.reciprocal(denom, approx=True)
    attn = (e * inv.astype(exp_dtype)).astype(cdt)                           # (nh, TQ, T)

    # ---- AV against the transposed V cache (contract over keys, NT batched) ----
    ctx = jnp.einsum("hqk,hdk->hqd", attn, v_scr[...],
                     preferred_element_type=jnp.float32)                     # (nh, TQ, hd)

    # ---- output projection fused with the head merge: batched matmul + head-sum
    #      (no lane-axis concatenate, no ctx scratch slab). ----
    partial = jnp.einsum("hqd,hdo->hqo", ctx.astype(cdt), ow_ref[...],
                         preferred_element_type=jnp.float32)                 # (nh, TQ, H)
    attn_out = jnp.sum(partial, axis=0) + ob_ref[...]                        # (TQ, H)

    # ---- residual + LayerNorm (f32) ----
    x = x_q + attn_out                                   # dropout == identity (eval)
    x = _layer_norm(x, ln1w_ref[...], ln1b_ref[...], eps)
    x_c = x.astype(cdt)

    # ---- WavLMFeedForward: Linear -> exact GELU -> Linear ----
    ff = jnp.dot(x_c, ff1w_ref[...], preferred_element_type=jnp.float32) + ff1b_ref[...]
    ff = _gelu_exact(ff)
    ff = jnp.dot(ff.astype(cdt), ff2w_ref[...],
                 preferred_element_type=jnp.float32) + ff2b_ref[...]

    # ---- OS_KDFT_Adapter: Linear -> ELU -> Linear (eval: no noise injection) ----
    ad = jnp.dot(x_c, adw_ref[...], preferred_element_type=jnp.float32) + adb_ref[...]
    ad = jnp.where(ad > 0, ad, jnp.exp(jnp.minimum(ad, 0.0)) - 1.0)
    ad = jnp.dot(ad.astype(cdt), auw_ref[...],
                 preferred_element_type=jnp.float32) + aub_ref[...]

    # hidden = ln_x + feed_forward(ln_x) + adapter(ln_x)   (idx_without_adapter=None path)
    x = x + ff + ad
    x = _layer_norm(x, ln2w_ref[...], ln2b_ref[...], eps)
    out_ref[0] = x.astype(out_ref.dtype)


def compute_position_bias(seq_len, num_buckets, max_distance, rel_attn_embed):
    """WavLMAttention.compute_bias: relative-position bucketing + embedding gather."""
    context = jnp.arange(seq_len, dtype=jnp.int32)[:, None]
    memory = jnp.arange(seq_len, dtype=jnp.int32)[None, :]
    relative_position = memory - context
    nb = num_buckets // 2
    relative_buckets = (relative_position > 0).astype(jnp.int32) * nb
    rel_abs = jnp.abs(relative_position)
    max_exact = nb // 2
    is_small = rel_abs < max_exact
    rel_if_large = jnp.log(rel_abs.astype(jnp.float32) / max_exact)
    rel_if_large = rel_if_large / math.log(max_distance / max_exact)
    rel_if_large = rel_if_large * (nb - max_exact)
    rel_if_large = (max_exact + rel_if_large).astype(jnp.int32)
    rel_if_large = jnp.minimum(rel_if_large, nb - 1)
    relative_buckets = relative_buckets + jnp.where(is_small, rel_abs, rel_if_large)
    values = rel_attn_embed[relative_buckets]          # (T, T, num_heads)
    return jnp.transpose(values, (2, 0, 1))            # (num_heads, T, T)


def _pick_q_tiles(T, target):
    cands = {c for c in (target, 512, 256, 128, 64, 32, 16, 8)
             if c <= T and T % c == 0 and c % 8 == 0}
    if not cands:
        return [T]
    return sorted(cands, reverse=True)


def _vmem_capacity_bytes():
    try:
        return int(pltpu.get_tpu_info().vmem_capacity_bytes)
    except Exception:
        pass
    try:
        kind = jax.devices()[0].device_kind.lower()
        if any(s in kind for s in ("v5", "v6")):
            return 128 * 1024 * 1024
    except Exception:
        pass
    return 64 * 1024 * 1024


def _pick_exp_dtype():
    # bf16 EUP exists on v6e / v7x only; stay f32 on older generations.
    try:
        kind = jax.devices()[0].device_kind.lower()
    except Exception:
        return jnp.float32
    if any(s in kind for s in ("v2", "v3", "v4", "v5")):
        return jnp.float32
    if any(s in kind for s in ("v6", "v7", "7x")):
        return jnp.bfloat16
    return jnp.float32


def _estimate_vmem(T, H, intermediate, num_heads, tq, hs_item,
                   weight_bytes, bufs, resident):
    bf16, f32 = 2, 4
    est = weight_bytes * bufs                         # weights (x buffer count)
    est += 2 * T * H * hs_item                        # hidden_states block (double-buffered)
    est += 2 * tq * H * hs_item                       # output block
    if resident:
        est += num_heads * T * T * bf16 * bufs        # resident position bias
    else:
        est += 2 * num_heads * tq * T * bf16          # streamed position-bias block
    est += 2 * H * T * bf16                           # transposed K / V caches
    est += 2 * num_heads * tq * T * f32               # live softmax temporaries
    est += num_heads * tq * H * f32                   # per-head output partials
    est += 2 * tq * max(intermediate, H) * f32        # FF / adapter temporaries
    return est


def wavlm_encoder_layer(hidden_states, params, *, num_heads, num_buckets,
                        max_distance, eps=1e-5, seq_tile=256,
                        compute_dtype=jnp.bfloat16):
    B, T, H = hidden_states.shape
    assert H % num_heads == 0
    head_dim = H // num_heads
    assert head_dim % 8 == 0, "head_dim must be a multiple of the sublane tile (8)"
    scaling = head_dim ** -0.5
    cdt = compute_dtype

    pb = compute_position_bias(T, num_buckets, max_distance, params["rel_attn_embed"])

    # ---- fold the per-head 8-wide gate projection into one block-diagonal matmul ----
    gw, gb = params["gw"], params["gb"]                       # (8, hd), (1, 8)
    wa = gw[0:4, :].sum(axis=0)                               # gate_a weight (hd,)
    wb = gw[4:8, :].sum(axis=0)                               # gate_b weight (hd,)
    eye = jnp.eye(num_heads, dtype=jnp.float32)
    gate_w = jnp.concatenate([jnp.kron(eye, wa[:, None]),
                              jnp.kron(eye, wb[:, None])], axis=1)          # (H, 2*nh)
    gate_b_vec = jnp.concatenate([jnp.full((num_heads,), gb[0, 0:4].sum()),
                                  jnp.full((num_heads,), gb[0, 4:8].sum())])[None, :]

    f32 = lambda a: jnp.asarray(a, jnp.float32)
    col = lambda a: jnp.asarray(a, jnp.float32).reshape(-1, 1)
    wc = lambda a: jnp.asarray(a, cdt)

    intermediate = params["ff1w"].shape[0]

    args = (
        hidden_states,
        pb.astype(cdt),
        wc(params["qw"].T * scaling), f32(params["qb"] * scaling),          # (H,H), (1,H)
        wc(params["kw"]), col(params["kb"]),                                # (H,H), (H,1)
        wc(params["vw"]), col(params["vb"]),                                # (H,H), (H,1)
        wc(params["ow"].T.reshape(num_heads, head_dim, H)), f32(params["ob"]),
        wc(gate_w), f32(gate_b_vec), f32(params["gconst"]),
        f32(params["ln1w"]), f32(params["ln1b"]),
        wc(params["ff1w"].T), f32(params["ff1b"]),
        wc(params["ff2w"].T), f32(params["ff2b"]),
        wc(params["adw"].T), f32(params["adb"]),
        wc(params["auw"].T), f32(params["aub"]),
        f32(params["ln2w"]), f32(params["ln2b"]),
    )

    weight_bytes = sum(int(a.size) * a.dtype.itemsize for a in args[2:])
    hs_item = hidden_states.dtype.itemsize
    exp_dtype = _pick_exp_dtype()

    vmem_cap = _vmem_capacity_bytes()
    vmem_limit = min(int(vmem_cap * 7 // 8), vmem_cap - (4 << 20))
    budget = max(vmem_limit - (2 << 20), 8 << 20)

    def choose(bufs):
        # Prefer the biggest query tile; within a tile prefer a resident position bias.
        for tq in _pick_q_tiles(T, seq_tile):
            for resident in (True, False):
                if _estimate_vmem(T, H, intermediate, num_heads, tq, hs_item,
                                  weight_bytes, bufs, resident) <= budget:
                    return tq, resident
        return _pick_q_tiles(T, seq_tile)[-1], False

    def build(tq, resident, single_buffer_weights):
        n_q = T // tq
        kernel = functools.partial(
            _encoder_layer_kernel, num_heads=num_heads, head_dim=head_dim,
            q_tile=tq, eps=eps, compute_dtype=cdt, exp_dtype=exp_dtype,
            pb_resident=resident)

        pm = pl.Buffered(1) if single_buffer_weights else None

        def const_spec(a):
            idx = lambda b, qi, _nd=a.ndim: (0,) * _nd
            if pm is None:
                return pl.BlockSpec(a.shape, idx)
            return pl.BlockSpec(a.shape, idx, pipeline_mode=pm)

        if resident:
            pb_spec = const_spec(args[1])                                   # whole (nh,T,T)
        else:
            pb_spec = pl.BlockSpec((num_heads, tq, T), lambda b, qi: (0, qi, 0))

        in_specs = [
            pl.BlockSpec((1, T, H), lambda b, qi: (b, 0, 0)),               # hidden_states
            pb_spec,
        ] + [const_spec(a) for a in args[2:]]

        return pl.pallas_call(
            kernel,
            out_shape=jax.ShapeDtypeStruct((B, T, H), hidden_states.dtype),
            grid_spec=pltpu.PrefetchScalarGridSpec(
                num_scalar_prefetch=0,
                grid=(B, n_q),
                in_specs=in_specs,
                out_specs=pl.BlockSpec((1, tq, H), lambda b, qi: (b, qi, 0)),
                scratch_shapes=[
                    pltpu.VMEM((num_heads, head_dim, T), cdt),   # K^T cache (lane-dense)
                    pltpu.VMEM((num_heads, head_dim, T), cdt),   # V^T cache (lane-dense)
                ],
            ),
            compiler_params=pltpu.CompilerParams(
                dimension_semantics=("parallel", "arbitrary"),
                vmem_limit_bytes=vmem_limit,
            ),
        )

    tq, resident = choose(bufs=1)
    try:
        out = build(tq, resident, True)(*args)
    except Exception:
        # Some Pallas builds reject pipeline_mode=pl.Buffered(1).  Re-plan the tiling
        # assuming double-buffered weights / bias so the fallback cannot overrun VMEM;
        # any remaining failure propagates (no silent second-level fallback).
        tq, resident = choose(bufs=2)
        out = build(tq, resident, False)(*args)

    # position_bias returned untiled (num_heads, T, T), f32; broadcast at the consumer
    # if the (bsz*num_heads, T, T) repeated view is needed.
    return out, pb


# ---------------------------- reference (pure JAX, f32) ----------------------------
def _ln_ref(x, w, b, eps):
    mean = jnp.mean(x, axis=-1, keepdims=True)
    var = jnp.mean((x - mean) ** 2, axis=-1, keepdims=True)
    return (x - mean) * lax.rsqrt(var + eps) * w + b


def reference_forward(hs, pb, p, *, num_heads, eps=1e-5):
    B, T, H = hs.shape
    hd = H // num_heads
    scaling = hd ** -0.5

    def linear(x, w, b):
        return jnp.einsum("...i,oi->...o", x, w) + b[0]

    q = linear(hs, p["qw"], p["qb"]) * scaling
    k = linear(hs, p["kw"], p["kb"])
    v = linear(hs, p["vw"], p["vb"])

    def split_heads(x):
        return x.reshape(B, T, num_heads, hd).transpose(0, 2, 1, 3)

    qh, kh, vh, xh = map(split_heads, (q, k, v, hs))
    scores = jnp.einsum("bnqd,bnkd->bnqk", qh, kh)

    proj = jnp.einsum("bntd,od->bnto", xh, p["gw"]) + p["gb"][0]
    g = jax.nn.sigmoid(proj.reshape(B, num_heads, T, 2, 4).sum(-1))
    gate_a, gate_b = g[..., 0:1], g[..., 1:2]
    const = p["gconst"].reshape(1, num_heads, 1, 1)
    gate_out = gate_a * (gate_b * const - 1.0) + 2.0
    gated_pb = gate_out * pb[None]

    attn = jax.nn.softmax(scores + gated_pb, axis=-1)
    ctx = jnp.einsum("bnqk,bnkd->bnqd", attn, vh)
    ctx = ctx.transpose(0, 2, 1, 3).reshape(B, T, H)
    attn_out = linear(ctx, p["ow"], p["ob"])

    x = hs + attn_out
    x = _ln_ref(x, p["ln1w"][0], p["ln1b"][0], eps)

    ff = linear(x, p["ff1w"], p["ff1b"])
    ff = 0.5 * ff * (1.0 + lax.erf(ff / jnp.sqrt(2.0)))
    ff = linear(ff, p["ff2w"], p["ff2b"])

    ad = linear(x, p["adw"], p["adb"])
    ad = jnp.where(ad > 0, ad, jnp.exp(jnp.minimum(ad, 0.0)) - 1.0)
    ad = linear(ad, p["auw"], p["aub"])

    x = x + ff + ad
    x = _ln_ref(x, p["ln2w"][0], p["ln2b"][0], eps)
    return x


# ------------------------------- param init ----------------------------------
def init_params(key, hidden, num_heads, intermediate, adapter_hidden, num_buckets):
    ks = jax.random.split(key, 16)

    def lin(k, out_d, in_d):
        k1, k2 = jax.random.split(k)
        w = jax.random.normal(k1, (out_d, in_d), jnp.float32) * 0.05
        b = jax.random.normal(k2, (1, out_d), jnp.float32) * 0.02
        return w, b

    head_dim = hidden // num_heads
    p = {}
    p["qw"], p["qb"] = lin(ks[0], hidden, hidden)
    p["kw"], p["kb"] = lin(ks[1], hidden, hidden)
    p["vw"], p["vb"] = lin(ks[2], hidden, hidden)
    p["ow"], p["ob"] = lin(ks[3], hidden, hidden)
    p["gw"], p["gb"] = lin(ks[4], 8, head_dim)           # gru_rel_pos_linear
    p["gconst"] = jnp.ones((1, num_heads), jnp.float32)  # gru_rel_pos_const init = ones
    p["rel_attn_embed"] = jax.random.normal(ks[5], (num_buckets, num_heads), jnp.float32) * 0.05
    p["ln1w"] = 1.0 + 0.05 * jax.random.normal(ks[6], (1, hidden), jnp.float32)
    p["ln1b"] = 0.02 * jax.random.normal(ks[7], (1, hidden), jnp.float32)
    p["ff1w"], p["ff1b"] = lin(ks[8], intermediate, hidden)
    p["ff2w"], p["ff2b"] = lin(ks[9], hidden, intermediate)
    p["adw"], p["adb"] = lin(ks[10], adapter_hidden, hidden)   # adapter.down
    p["auw"], p["aub"] = lin(ks[11], hidden, adapter_hidden)   # adapter.up
    p["ln2w"] = 1.0 + 0.05 * jax.random.normal(ks[12], (1, hidden), jnp.float32)
    p["ln2b"] = 0.02 * jax.random.normal(ks[13], (1, hidden), jnp.float32)
    return p


if __name__ == "__main__":
    B, T, H = 2, 8, 32
    num_heads = 4
    intermediate = 64
    adapter_hidden = 16
    num_buckets = 320
    max_distance = 800

    key = jax.random.PRNGKey(0)
    k_x, k_p = jax.random.split(key)
    hidden_states = jax.random.normal(k_x, (B, T, H), jnp.float32)
    params = init_params(k_p, H, num_heads, intermediate, adapter_hidden, num_buckets)

    out, pos_bias = wavlm_encoder_layer(
        hidden_states, params, num_heads=num_heads,
        num_buckets=num_buckets, max_distance=max_distance)
    out = jax.block_until_ready(out)

    assert out.shape == (B, T, H)
    assert pos_bias.shape == (num_heads, T, T)

    ref = reference_forward(hidden_states, pos_bias, params, num_heads=num_heads)
    max_err = float(jnp.max(jnp.abs(out - ref)))
    # bf16 matmuls (+ possibly bf16 exp on v6e/v7x) with f32 accumulation vs f32 reference.
    assert max_err < 5e-2, f"max_err={max_err}"

    # TODO(synk): training-mode adapter noise (torch.normal with python-random std),
    # dropout, attention_mask, output_attentions, and the idx_without_adapter
    # batch-split path are intentionally omitted (eval-mode, mask-free semantics).
    print("KERNEL_OK")
</pallas_src>

<mosaic_0001>
module attributes {stable_mosaic.version = 11 : i64} {
  func.func @_encoder_layer_kernel(%arg0: i32, %arg1: i32, %arg2: memref<1x8x32xf32, #tpu.memory_space<vmem>>, %arg3: memref<4x8x8xbf16, #tpu.memory_space<vmem>>, %arg4: memref<32x32xbf16, #tpu.memory_space<vmem>>, %arg5: memref<1x32xf32, #tpu.memory_space<vmem>>, %arg6: memref<32x32xbf16, #tpu.memory_space<vmem>>, %arg7: memref<32x1xf32, #tpu.memory_space<vmem>>, %arg8: memref<32x32xbf16, #tpu.memory_space<vmem>>, %arg9: memref<32x1xf32, #tpu.memory_space<vmem>>, %arg10: memref<4x8x32xbf16, #tpu.memory_space<vmem>>, %arg11: memref<1x32xf32, #tpu.memory_space<vmem>>, %arg12: memref<32x8xbf16, #tpu.memory_space<vmem>>, %arg13: memref<1x8xf32, #tpu.memory_space<vmem>>, %arg14: memref<1x4xf32, #tpu.memory_space<vmem>>, %arg15: memref<1x32xf32, #tpu.memory_space<vmem>>, %arg16: memref<1x32xf32, #tpu.memory_space<vmem>>, %arg17: memref<32x64xbf16, #tpu.memory_space<vmem>>, %arg18: memref<1x64xf32, #tpu.memory_space<vmem>>, %arg19: memref<64x32xbf16, #tpu.memory_space<vmem>>, %arg20: memref<1x32xf32, #tpu.memory_space<vmem>>, %arg21: memref<32x16xbf16, #tpu.memory_space<vmem>>, %arg22: memref<1x16xf32, #tpu.memory_space<vmem>>, %arg23: memref<16x32xbf16, #tpu.memory_space<vmem>>, %arg24: memref<1x32xf32, #tpu.memory_space<vmem>>, %arg25: memref<1x32xf32, #tpu.memory_space<vmem>>, %arg26: memref<1x32xf32, #tpu.memory_space<vmem>>, %arg27: memref<1x8x32xf32, #tpu.memory_space<vmem>>, %arg28: memref<4x8x8xbf16, #tpu.memory_space<vmem>>, %arg29: memref<4x8x8xbf16, #tpu.memory_space<vmem>>) attributes {dimension_semantics = [#tpu.dimension_semantics<parallel>, #tpu.dimension_semantics<arbitrary>], iteration_bounds = array<i64: 2, 1>, scalar_prefetch = 0 : i64, scratch_operands = 2 : i64, tpu.core_type = #tpu.core_type<tc>, window_params = [{transform_indices = @transform_0, window_bounds = array<i64: 1, 8, 32>}, {pipeline_mode = #tpu.pipeline_mode<synchronous>, transform_indices = @transform_1, window_bounds = array<i64: 4, 8, 8>}, {pipeline_mode = #tpu.pipeline_mode<synchronous>, transform_indices = @transform_2, window_bounds = array<i64: 32, 32>}, {pipeline_mode = #tpu.pipeline_mode<synchronous>, transform_indices = @transform_3, window_bounds = array<i64: 1, 32>}, {pipeline_mode = #tpu.pipeline_mode<synchronous>, transform_indices = @transform_4, window_bounds = array<i64: 32, 32>}, {pipeline_mode = #tpu.pipeline_mode<synchronous>, transform_indices = @transform_5, window_bounds = array<i64: 32, 1>}, {pipeline_mode = #tpu.pipeline_mode<synchronous>, transform_indices = @transform_6, window_bounds = array<i64: 32, 32>}, {pipeline_mode = #tpu.pipeline_mode<synchronous>, transform_indices = @transform_7, window_bounds = array<i64: 32, 1>}, {pipeline_mode = #tpu.pipeline_mode<synchronous>, transform_indices = @transform_8, window_bounds = array<i64: 4, 8, 32>}, {pipeline_mode = #tpu.pipeline_mode<synchronous>, transform_indices = @transform_9, window_bounds = array<i64: 1, 32>}, {pipeline_mode = #tpu.pipeline_mode<synchronous>, transform_indices = @transform_10, window_bounds = array<i64: 32, 8>}, {pipeline_mode = #tpu.pipeline_mode<synchronous>, transform_indices = @transform_11, window_bounds = array<i64: 1, 8>}, {pipeline_mode = #tpu.pipeline_mode<synchronous>, transform_indices = @transform_12, window_bounds = array<i64: 1, 4>}, {pipeline_mode = #tpu.pipeline_mode<synchronous>, transform_indices = @transform_13, window_bounds = array<i64: 1, 32>}, {pipeline_mode = #tpu.pipeline_mode<synchronous>, transform_indices = @transform_14, window_bounds = array<i64: 1, 32>}, {pipeline_mode = #tpu.pipeline_mode<synchronous>, transform_indices = @transform_15, window_bounds = array<i64: 32, 64>}, {pipeline_mode = #tpu.pipeline_mode<synchronous>, transform_indices = @transform_16, window_bounds = array<i64: 1, 64>}, {pipeline_mode = #tpu.pipeline_mode<synchronous>, transform_indices = @transform_17, window_bounds = array<i64: 64, 32>}, {pipeline_mode = #tpu.pipeline_mode<synchronous>, transform_indices = @transform_18, window_bounds = array<i64: 1, 32>}, {pipeline_mode = #tpu.pipeline_mode<synchronous>, transform_indices = @transform_19, window_bounds = array<i64: 32, 16>}, {pipeline_mode = #tpu.pipeline_mode<synchronous>, transform_indices = @transform_20, window_bounds = array<i64: 1, 16>}, {pipeline_mode = #tpu.pipeline_mode<synchronous>, transform_indices = @transform_21, window_bounds = array<i64: 16, 32>}, {pipeline_mode = #tpu.pipeline_mode<synchronous>, transform_indices = @transform_22, window_bounds = array<i64: 1, 32>}, {pipeline_mode = #tpu.pipeline_mode<synchronous>, transform_indices = @transform_23, window_bounds = array<i64: 1, 32>}, {pipeline_mode = #tpu.pipeline_mode<synchronous>, transform_indices = @transform_24, window_bounds = array<i64: 1, 32>}, {transform_indices = @transform_25, window_bounds = array<i64: 1, 8, 32>}]} {
    %c0_i32 = arith.constant 0 : i32
    %0 = arith.cmpi eq, %arg1, %c0_i32 : i32
    %1 = arith.extui %0 : i1 to i32
    %c0_i32_0 = arith.constant 0 : i32
    %2 = arith.cmpi ne, %1, %c0_i32_0 : i32
    scf.if %2 {
      %c0_82 = arith.constant 0 : index
      %c0_83 = arith.constant 0 : index
      %c0_84 = arith.constant 0 : index
      %169 = vector.load %arg2[%c0_82, %c0_83, %c0_84] : memref<1x8x32xf32, #tpu.memory_space<vmem>>, vector<1x8x32xf32>
      %170 = vector.shape_cast %169 : vector<1x8x32xf32> to vector<8x32xf32>
      %171 = arith.truncf %170 : vector<8x32xf32> to vector<8x32xbf16>
      %c0_85 = arith.constant 0 : index
      %c0_86 = arith.constant 0 : index
      %172 = vector.load %arg6[%c0_85, %c0_86] : memref<32x32xbf16, #tpu.memory_space<vmem>>, vector<32x32xbf16>
      %cst_87 = arith.constant dense<0.000000e+00> : vector<32x8xf32>
      %173 = tpu.matmul %172, %171, %cst_87 {dimension_numbers = #tpu.dot_dimension_numbers<[1], [1], [0], [0], [0, 0, 1, 0], [], []>} : vector<32x32xbf16>, vector<8x32xbf16>, vector<32x8xf32> -> vector<32x8xf32>
      %c0_88 = arith.constant 0 : index
      %c0_89 = arith.constant 0 : index
      %174 = vector.load %arg7[%c0_88, %c0_89] : memref<32x1xf32, #tpu.memory_space<vmem>>, vector<32x1xf32>
      %175 = vector.broadcast %174 : vector<32x1xf32> to vector<32x8xf32>
      %176 = arith.addf %173, %175 : vector<32x8xf32>
      %c0_90 = arith.constant 0 : index
      %c0_91 = arith.constant 0 : index
      %177 = vector.load %arg8[%c0_90, %c0_91] : memref<32x32xbf16, #tpu.memory_space<vmem>>, vector<32x32xbf16>
      %cst_92 = arith.constant dense<0.000000e+00> : vector<32x8xf32>
      %178 = tpu.matmul %177, %171, %cst_92 {dimension_numbers = #tpu.dot_dimension_numbers<[1], [1], [0], [0], [0, 0, 1, 0], [], []>} : vector<32x32xbf16>, vector<8x32xbf16>, vector<32x8xf32> -> vector<32x8xf32>
      %c0_93 = arith.constant 0 : index
      %c0_94 = arith.constant 0 : index
      %179 = vector.load %arg9[%c0_93, %c0_94] : memref<32x1xf32, #tpu.memory_space<vmem>>, vector<32x1xf32>
      %180 = vector.broadcast %179 : vector<32x1xf32> to vector<32x8xf32>
      %181 = arith.addf %178, %180 : vector<32x8xf32>
      %182 = vector.shape_cast %176 : vector<32x8xf32> to vector<4x8x8xf32>
      %183 = arith.truncf %182 : vector<4x8x8xf32> to vector<4x8x8xbf16>
      %c0_95 = arith.constant 0 : index
      %c0_96 = arith.constant 0 : index
      %c0_97 = arith.constant 0 : index
      %184 = vector.load %arg28[%c0_95, %c0_96, %c0_97] : memref<4x8x8xbf16, #tpu.memory_space<vmem>>, vector<4x8x8xbf16>
      tpu.vector_store %arg28[%c0_95, %c0_96, %c0_97], %183 {strides = array<i32>} : memref<4x8x8xbf16, #tpu.memory_space<vmem>>, vector<4x8x8xbf16>,
      %185 = vector.shape_cast %181 : vector<32x8xf32> to vector<4x8x8xf32>
      %186 = arith.truncf %185 : vector<4x8x8xf32> to vector<4x8x8xbf16>
      %c0_98 = arith.constant 0 : index
      %c0_99 = arith.constant 0 : index
      %c0_100 = arith.constant 0 : index
      %187 = vector.load %arg29[%c0_98, %c0_99, %c0_100] : memref<4x8x8xbf16, #tpu.memory_space<vmem>>, vector<4x8x8xbf16>
      tpu.vector_store %arg29[%c0_98, %c0_99, %c0_100], %186 {strides = array<i32>} : memref<4x8x8xbf16, #tpu.memory_space<vmem>>, vector<4x8x8xbf16>,
    } else {
    }
    %c8_i32 = arith.constant 8 : i32
    %3 = arith.muli %arg1, %c8_i32 : i32
    %4 = tpu.assume_multiple %3, 8 : i32
    %c0 = arith.constant 0 : index
    %5 = arith.index_cast %4 : i32 to index
    %c0_1 = arith.constant 0 : index
    %6 = vector.load %arg2[%c0, %5, %c0_1] : memref<1x8x32xf32, #tpu.memory_space<vmem>>, vector<1x8x32xf32>
    %7 = vector.shape_cast %6 : vector<1x8x32xf32> to vector<8x32xf32>
    %8 = arith.truncf %7 : vector<8x32xf32> to vector<8x32xbf16>
    %c0_2 = arith.constant 0 : index
    %c0_3 = arith.constant 0 : index
    %9 = vector.load %arg4[%c0_2, %c0_3] : memref<32x32xbf16, #tpu.memory_space<vmem>>, vector<32x32xbf16>
    %cst = arith.constant dense<0.000000e+00> : vector<8x32xf32>
    %10 = tpu.matmul %8, %9, %cst {dimension_numbers = #tpu.dot_dimension_numbers<[1], [0], [0], [1], [0, 0, 1, 1], [], []>} : vector<8x32xbf16>, vector<32x32xbf16>, vector<8x32xf32> -> vector<8x32xf32>
    %c0_4 = arith.constant 0 : index
    %c0_5 = arith.constant 0 : index
    %11 = vector.load %arg5[%c0_4, %c0_5] : memref<1x32xf32, #tpu.memory_space<vmem>>, vector<1x32xf32>
    %12 = vector.broadcast %11 : vector<1x32xf32> to vector<8x32xf32>
    %13 = arith.addf %10, %12 : vector<8x32xf32>
    %14 = arith.truncf %13 : vector<8x32xf32> to vector<8x32xbf16>
    %15 = vector.extract_strided_slice %14 {offsets = [0, 0], sizes = [8, 8], strides = [1, 1]} : vector<8x32xbf16> to vector<8x8xbf16>
    %16 = vector.extract_strided_slice %14 {offsets = [0, 8], sizes = [8, 8], strides = [1, 1]} : vector<8x32xbf16> to vector<8x8xbf16>
    %17 = vector.extract_strided_slice %14 {offsets = [0, 16], sizes = [8, 8], strides = [1, 1]} : vector<8x32xbf16> to vector<8x8xbf16>
    %18 = vector.extract_strided_slice %14 {offsets = [0, 24], sizes = [8, 8], strides = [1, 1]} : vector<8x32xbf16> to vector<8x8xbf16>
    %19 = vector.shape_cast %15 : vector<8x8xbf16> to vector<1x8x8xbf16>
    %20 = vector.shape_cast %16 : vector<8x8xbf16> to vector<1x8x8xbf16>
    %21 = vector.shape_cast %17 : vector<8x8xbf16> to vector<1x8x8xbf16>
    %22 = vector.shape_cast %18 : vector<8x8xbf16> to vector<1x8x8xbf16>
    %23 = tpu.concatenate %19, %20, %21, %22 in 0 : vector<1x8x8xbf16>, vector<1x8x8xbf16>, vector<1x8x8xbf16>, vector<1x8x8xbf16> -> vector<4x8x8xbf16>
    %c0_6 = arith.constant 0 : index
    %c0_7 = arith.constant 0 : index
    %c0_8 = arith.constant 0 : index
    %24 = vector.load %arg28[%c0_6, %c0_7, %c0_8] : memref<4x8x8xbf16, #tpu.memory_space<vmem>>, vector<4x8x8xbf16>
    "tpu.trace_start"() <{level = 10 : i32, message = "hqd,hdk->hqk"}> : () -> ()
    %cst_9 = arith.constant dense<0.000000e+00> : vector<4x8x8xf32>
    %25 = tpu.matmul %23, %24, %cst_9 {dimension_numbers = #tpu.dot_dimension_numbers<[2], [1], [1], [2], [0, 0, 0, 1, 1, 2], [0], [0]>} : vector<4x8x8xbf16>, vector<4x8x8xbf16>, vector<4x8x8xf32> -> vector<4x8x8xf32>
    "tpu.trace_stop"() : () -> ()
    %c0_10 = arith.constant 0 : index
    %c0_11 = arith.constant 0 : index
    %26 = vector.load %arg12[%c0_10, %c0_11] : memref<32x8xbf16, #tpu.memory_space<vmem>>, vector<32x8xbf16>
    %cst_12 = arith.constant dense<0.000000e+00> : vector<8x8xf32>
    %27 = tpu.matmul %8, %26, %cst_12 {dimension_numbers = #tpu.dot_dimension_numbers<[1], [0], [0], [1], [0, 0, 1, 1], [], []>} : vector<8x32xbf16>, vector<32x8xbf16>, vector<8x8xf32> -> vector<8x8xf32>
    %c0_13 = arith.constant 0 : index
    %c0_14 = arith.constant 0 : index
    %28 = vector.load %arg13[%c0_13, %c0_14] : memref<1x8xf32, #tpu.memory_space<vmem>>, vector<1x8xf32>
    %29 = vector.broadcast %28 : vector<1x8xf32> to vector<8x8xf32>
    %30 = arith.addf %27, %29 : vector<8x8xf32>
    %31 = arith.negf %30 : vector<8x8xf32>
    %32 = math.exp %31 : vector<8x8xf32>
    %cst_15 = arith.constant 1.000000e+00 : f32
    %33 = vector.broadcast %cst_15 : f32 to vector<8x8xf32>
    %34 = arith.addf %33, %32 : vector<8x8xf32>
    %35 = arith.divf %33, %34 : vector<8x8xf32>
    %36 = vector.extract_strided_slice %35 {offsets = [0, 0], sizes = [8, 4], strides = [1, 1]} : vector<8x8xf32> to vector<8x4xf32>
    %37 = vector.extract_strided_slice %35 {offsets = [0, 4], sizes = [8, 4], strides = [1, 1]} : vector<8x8xf32> to vector<8x4xf32>
    %c0_16 = arith.constant 0 : index
    %c0_17 = arith.constant 0 : index
    %38 = vector.load %arg14[%c0_16, %c0_17] : memref<1x4xf32, #tpu.memory_space<vmem>>, vector<1x4xf32>
    %39 = vector.broadcast %38 : vector<1x4xf32> to vector<8x4xf32>
    %40 = arith.mulf %37, %39 : vector<8x4xf32>
    %cst_18 = arith.constant 1.000000e+00 : f32
    %41 = vector.broadcast %cst_18 : f32 to vector<8x4xf32>
    %42 = arith.subf %40, %41 : vector<8x4xf32>
    %43 = arith.mulf %36, %42 : vector<8x4xf32>
    %cst_19 = arith.constant 2.000000e+00 : f32
    %44 = vector.broadcast %cst_19 : f32 to vector<8x4xf32>
    %45 = arith.addf %43, %44 : vector<8x4xf32>
    %46 = tpu.transpose %45, [1, 0] : vector<8x4xf32> -> vector<4x8xf32>
    %47 = vector.shape_cast %46 : vector<4x8xf32> to vector<4x8x1xf32>
    %48 = arith.truncf %47 : vector<4x8x1xf32> to vector<4x8x1xbf16>
    %c0_20 = arith.constant 0 : index
    %49 = arith.index_cast %4 : i32 to index
    %c0_21 = arith.constant 0 : index
    %50 = vector.load %arg3[%c0_20, %49, %c0_21] : memref<4x8x8xbf16, #tpu.memory_space<vmem>>, vector<4x8x8xbf16>
    %51 = vector.broadcast %48 : vector<4x8x1xbf16> to vector<4x8x8xbf16>
    %52 = arith.mulf %51, %50 : vector<4x8x8xbf16>
    %53 = arith.extf %52 : vector<4x8x8xbf16> to vector<4x8x8xf32>
    %54 = arith.addf %25, %53 : vector<4x8x8xf32>
    %cst_22 = arith.constant dense<0xFF800000> : vector<4x8xf32>
    %55 = vector.multi_reduction <maximumf>, %54, %cst_22 [2] : vector<4x8x8xf32> to vector<4x8xf32>
    %56 = vector.shape_cast %55 : vector<4x8xf32> to vector<4x8x1xf32>
    %57 = vector.broadcast %56 : vector<4x8x1xf32> to vector<4x8x8xf32>
    %58 = arith.subf %54, %57 : vector<4x8x8xf32>
    %59 = math.exp %58 : vector<4x8x8xf32>
    %cst_23 = arith.constant dense<0.000000e+00> : vector<4x8xf32>
    %60 = vector.multi_reduction <add>, %59, %cst_23 [2] : vector<4x8x8xf32> to vector<4x8xf32>
    %61 = vector.shape_cast %60 : vector<4x8xf32> to vector<4x8x1xf32>
    %62 = tpu.reciprocal %61 {approx = true} : vector<4x8x1xf32> -> vector<4x8x1xf32>
    %63 = vector.broadcast %62 : vector<4x8x1xf32> to vector<4x8x8xf32>
    %64 = arith.mulf %59, %63 : vector<4x8x8xf32>
    %65 = arith.truncf %64 : vector<4x8x8xf32> to vector<4x8x8xbf16>
    %c0_24 = arith.constant 0 : index
    %c0_25 = arith.constant 0 : index
    %c0_26 = arith.constant 0 : index
    %66 = vector.load %arg29[%c0_24, %c0_25, %c0_26] : memref<4x8x8xbf16, #tpu.memory_space<vmem>>, vector<4x8x8xbf16>
    "tpu.trace_start"() <{level = 10 : i32, message = "hqk,hdk->hqd"}> : () -> ()
    %cst_27 = arith.constant dense<0.000000e+00> : vector<4x8x8xf32>
    %67 = tpu.matmul %65, %66, %cst_27 {dimension_numbers = #tpu.dot_dimension_numbers<[2], [2], [1], [1], [0, 0, 0, 1, 1, 1], [0], [0]>} : vector<4x8x8xbf16>, vector<4x8x8xbf16>, vector<4x8x8xf32> -> vector<4x8x8xf32>
    "tpu.trace_stop"() : () -> ()
    %68 = arith.truncf %67 : vector<4x8x8xf32> to vector<4x8x8xbf16>
    %c0_28 = arith.constant 0 : index
    %c0_29 = arith.constant 0 : index
    %c0_30 = arith.constant 0 : index
    %69 = vector.load %arg10[%c0_28, %c0_29, %c0_30] : memref<4x8x32xbf16, #tpu.memory_space<vmem>>, vector<4x8x32xbf16>
    "tpu.trace_start"() <{level = 10 : i32, message = "hqd,hdo->hqo"}> : () -> ()
    %cst_31 = arith.constant dense<0.000000e+00> : vector<4x8x32xf32>
    %70 = tpu.matmul %68, %69, %cst_31 {dimension_numbers = #tpu.dot_dimension_numbers<[2], [1], [1], [2], [0, 0, 0, 1, 1, 2], [0], [0]>} : vector<4x8x8xbf16>, vector<4x8x32xbf16>, vector<4x8x32xf32> -> vector<4x8x32xf32>
    "tpu.trace_stop"() : () -> ()
    %cst_32 = arith.constant dense<0.000000e+00> : vector<8x32xf32>
    %71 = vector.multi_reduction <add>, %70, %cst_32 [0] : vector<4x8x32xf32> to vector<8x32xf32>
    %c0_33 = arith.constant 0 : index
    %c0_34 = arith.constant 0 : index
    %72 = vector.load %arg11[%c0_33, %c0_34] : memref<1x32xf32, #tpu.memory_space<vmem>>, vector<1x32xf32>
    %73 = vector.broadcast %72 : vector<1x32xf32> to vector<8x32xf32>
    %74 = arith.addf %71, %73 : vector<8x32xf32>
    %75 = arith.addf %7, %74 : vector<8x32xf32>
    %c0_35 = arith.constant 0 : index
    %c0_36 = arith.constant 0 : index
    %76 = vector.load %arg15[%c0_35, %c0_36] : memref<1x32xf32, #tpu.memory_space<vmem>>, vector<1x32xf32>
    %c0_37 = arith.constant 0 : index
    %c0_38 = arith.constant 0 : index
    %77 = vector.load %arg16[%c0_37, %c0_38] : memref<1x32xf32, #tpu.memory_space<vmem>>, vector<1x32xf32>
    %cst_39 = arith.constant dense<0.000000e+00> : vector<8xf32>
    %78 = vector.multi_reduction <add>, %75, %cst_39 [1] : vector<8x32xf32> to vector<8xf32>
    %79 = vector.shape_cast %78 : vector<8xf32> to vector<8x1xf32>
    %cst_40 = arith.constant 3.200000e+01 : f32
    %80 = vector.broadcast %cst_40 : f32 to vector<8x1xf32>
    %81 = arith.divf %79, %80 : vector<8x1xf32>
    %82 = vector.broadcast %81 : vector<8x1xf32> to vector<8x32xf32>
    %83 = arith.subf %75, %82 : vector<8x32xf32>
    %84 = arith.mulf %83, %83 : vector<8x32xf32>
    %cst_41 = arith.constant dense<0.000000e+00> : vector<8xf32>
    %85 = vector.multi_reduction <add>, %84, %cst_41 [1] : vector<8x32xf32> to vector<8xf32>
    %86 = vector.shape_cast %85 : vector<8xf32> to vector<8x1xf32>
    %cst_42 = arith.constant 3.200000e+01 : f32
    %87 = vector.broadcast %cst_42 : f32 to vector<8x1xf32>
    %88 = arith.divf %86, %87 : vector<8x1xf32>
    %89 = vector.broadcast %81 : vector<8x1xf32> to vector<8x32xf32>
    %90 = arith.subf %75, %89 : vector<8x32xf32>
    %cst_43 = arith.constant 9.99999974E-6 : f32
    %91 = vector.broadcast %cst_43 : f32 to vector<8x1xf32>
    %92 = arith.addf %88, %91 : vector<8x1xf32>
    %93 = math.rsqrt %92 : vector<8x1xf32>
    %94 = vector.broadcast %93 : vector<8x1xf32> to vector<8x32xf32>
    %95 = arith.mulf %90, %94 : vector<8x32xf32>
    %96 = vector.broadcast %76 : vector<1x32xf32> to vector<8x32xf32>
    %97 = arith.mulf %95, %96 : vector<8x32xf32>
    %98 = vector.broadcast %77 : vector<1x32xf32> to vector<8x32xf32>
    %99 = arith.addf %97, %98 : vector<8x32xf32>
    %100 = arith.truncf %99 : vector<8x32xf32> to vector<8x32xbf16>
    %c0_44 = arith.constant 0 : index
    %c0_45 = arith.constant 0 : index
    %101 = vector.load %arg17[%c0_44, %c0_45] : memref<32x64xbf16, #tpu.memory_space<vmem>>, vector<32x64xbf16>
    %cst_46 = arith.constant dense<0.000000e+00> : vector<8x64xf32>
    %102 = tpu.matmul %100, %101, %cst_46 {dimension_numbers = #tpu.dot_dimension_numbers<[1], [0], [0], [1], [0, 0, 1, 1], [], []>} : vector<8x32xbf16>, vector<32x64xbf16>, vector<8x64xf32> -> vector<8x64xf32>
    %c0_47 = arith.constant 0 : index
    %c0_48 = arith.constant 0 : index
    %103 = vector.load %arg18[%c0_47, %c0_48] : memref<1x64xf32, #tpu.memory_space<vmem>>, vector<1x64xf32>
    %104 = vector.broadcast %103 : vector<1x64xf32> to vector<8x64xf32>
    %105 = arith.addf %102, %104 : vector<8x64xf32>
    %cst_49 = arith.constant 5.000000e-01 : f32
    %106 = vector.broadcast %cst_49 : f32 to vector<8x64xf32>
    %107 = arith.mulf %106, %105 : vector<8x64xf32>
    %cst_50 = arith.constant 2.000000e+00 : f32
    %108 = math.sqrt %cst_50 : f32
    %109 = vector.broadcast %108 : f32 to vector<8x64xf32>
    %110 = arith.divf %105, %109 : vector<8x64xf32>
    %111 = math.erf %110 : vector<8x64xf32>
    %cst_51 = arith.constant 1.000000e+00 : f32
    %112 = vector.broadcast %cst_51 : f32 to vector<8x64xf32>
    %113 = arith.addf %112, %111 : vector<8x64xf32>
    %114 = arith.mulf %107, %113 : vector<8x64xf32>
    %115 = arith.truncf %114 : vector<8x64xf32> to vector<8x64xbf16>
    %c0_52 = arith.constant 0 : index
    %c0_53 = arith.constant 0 : index
    %116 = vector.load %arg19[%c0_52, %c0_53] : memref<64x32xbf16, #tpu.memory_space<vmem>>, vector<64x32xbf16>
    %cst_54 = arith.constant dense<0.000000e+00> : vector<8x32xf32>
    %117 = tpu.matmul %115, %116, %cst_54 {dimension_numbers = #tpu.dot_dimension_numbers<[1], [0], [0], [1], [0, 0, 1, 1], [], []>} : vector<8x64xbf16>, vector<64x32xbf16>, vector<8x32xf32> -> vector<8x32xf32>
    %c0_55 = arith.constant 0 : index
    %c0_56 = arith.constant 0 : index
    %118 = vector.load %arg20[%c0_55, %c0_56] : memref<1x32xf32, #tpu.memory_space<vmem>>, vector<1x32xf32>
    %119 = vector.broadcast %118 : vector<1x32xf32> to vector<8x32xf32>
    %120 = arith.addf %117, %119 : vector<8x32xf32>
    %c0_57 = arith.constant 0 : index
    %c0_58 = arith.constant 0 : index
    %121 = vector.load %arg21[%c0_57, %c0_58] : memref<32x16xbf16, #tpu.memory_space<vmem>>, vector<32x16xbf16>
    %cst_59 = arith.constant dense<0.000000e+00> : vector<8x16xf32>
    %122 = tpu.matmul %100, %121, %cst_59 {dimension_numbers = #tpu.dot_dimension_numbers<[1], [0], [0], [1], [0, 0, 1, 1], [], []>} : vector<8x32xbf16>, vector<32x16xbf16>, vector<8x16xf32> -> vector<8x16xf32>
    %c0_60 = arith.constant 0 : index
    %c0_61 = arith.constant 0 : index
    %123 = vector.load %arg22[%c0_60, %c0_61] : memref<1x16xf32, #tpu.memory_space<vmem>>, vector<1x16xf32>
    %124 = vector.broadcast %123 : vector<1x16xf32> to vector<8x16xf32>
    %125 = arith.addf %122, %124 : vector<8x16xf32>
    %cst_62 = arith.constant 0.000000e+00 : f32
    %126 = vector.broadcast %cst_62 : f32 to vector<8x16xf32>
    %127 = arith.cmpf ogt, %125, %126 : vector<8x16xf32>
    %cst_63 = arith.constant 0.000000e+00 : f32
    %128 = vector.broadcast %cst_63 : f32 to vector<8x16xf32>
    %129 = arith.minimumf %125, %128 : vector<8x16xf32>
    %130 = math.exp %129 : vector<8x16xf32>
    %cst_64 = arith.constant 1.000000e+00 : f32
    %131 = vector.broadcast %cst_64 : f32 to vector<8x16xf32>
    %132 = arith.subf %130, %131 : vector<8x16xf32>
    %133 = arith.select %127, %125, %132 : vector<8x16xi1>, vector<8x16xf32>
    %134 = arith.truncf %133 : vector<8x16xf32> to vector<8x16xbf16>
    %c0_65 = arith.constant 0 : index
    %c0_66 = arith.constant 0 : index
    %135 = vector.load %arg23[%c0_65, %c0_66] : memref<16x32xbf16, #tpu.memory_space<vmem>>, vector<16x32xbf16>
    %cst_67 = arith.constant dense<0.000000e+00> : vector<8x32xf32>
    %136 = tpu.matmul %134, %135, %cst_67 {dimension_numbers = #tpu.dot_dimension_numbers<[1], [0], [0], [1], [0, 0, 1, 1], [], []>} : vector<8x16xbf16>, vector<16x32xbf16>, vector<8x32xf32> -> vector<8x32xf32>
    %c0_68 = arith.constant 0 : index
    %c0_69 = arith.constant 0 : index
    %137 = vector.load %arg24[%c0_68, %c0_69] : memref<1x32xf32, #tpu.memory_space<vmem>>, vector<1x32xf32>
    %138 = vector.broadcast %137 : vector<1x32xf32> to vector<8x32xf32>
    %139 = arith.addf %136, %138 : vector<8x32xf32>
    %140 = arith.addf %99, %120 : vector<8x32xf32>
    %141 = arith.addf %140, %139 : vector<8x32xf32>
    %c0_70 = arith.constant 0 : index
    %c0_71 = arith.constant 0 : index
    %142 = vector.load %arg25[%c0_70, %c0_71] : memref<1x32xf32, #tpu.memory_space<vmem>>, vector<1x32xf32>
    %c0_72 = arith.constant 0 : index
    %c0_73 = arith.constant 0 : index
    %143 = vector.load %arg26[%c0_72, %c0_73] : memref<1x32xf32, #tpu.memory_space<vmem>>, vector<1x32xf32>
    %cst_74 = arith.constant dense<0.000000e+00> : vector<8xf32>
    %144 = vector.multi_reduction <add>, %141, %cst_74 [1] : vector<8x32xf32> to vector<8xf32>
    %145 = vector.shape_cast %144 : vector<8xf32> to vector<8x1xf32>
    %cst_75 = arith.constant 3.200000e+01 : f32
    %146 = vector.broadcast %cst_75 : f32 to vector<8x1xf32>
    %147 = arith.divf %145, %146 : vector<8x1xf32>
    %148 = vector.broadcast %147 : vector<8x1xf32> to vector<8x32xf32>
    %149 = arith.subf %141, %148 : vector<8x32xf32>
    %150 = arith.mulf %149, %149 : vector<8x32xf32>
    %cst_76 = arith.constant dense<0.000000e+00> : vector<8xf32>
    %151 = vector.multi_reduction <add>, %150, %cst_76 [1] : vector<8x32xf32> to vector<8xf32>
    %152 = vector.shape_cast %151 : vector<8xf32> to vector<8x1xf32>
    %cst_77 = arith.constant 3.200000e+01 : f32
    %153 = vector.broadcast %cst_77 : f32 to vector<8x1xf32>
    %154 = arith.divf %152, %153 : vector<8x1xf32>
    %155 = vector.broadcast %147 : vector<8x1xf32> to vector<8x32xf32>
    %156 = arith.subf %141, %155 : vector<8x32xf32>
    %cst_78 = arith.constant 9.99999974E-6 : f32
    %157 = vector.broadcast %cst_78 : f32 to vector<8x1xf32>
    %158 = arith.addf %154, %157 : vector<8x1xf32>
    %159 = math.rsqrt %158 : vector<8x1xf32>
    %160 = vector.broadcast %159 : vector<8x1xf32> to vector<8x32xf32>
    %161 = arith.mulf %156, %160 : vector<8x32xf32>
    %162 = vector.broadcast %142 : vector<1x32xf32> to vector<8x32xf32>
    %163 = arith.mulf %161, %162 : vector<8x32xf32>
    %164 = vector.broadcast %143 : vector<1x32xf32> to vector<8x32xf32>
    %165 = arith.addf %163, %164 : vector<8x32xf32>
    %c0_79 = arith.constant 0 : index
    %c0_80 = arith.constant 0 : index
    %c0_81 = arith.constant 0 : index
    %166 = vector.load %arg27[%c0_79, %c0_80, %c0_81] : memref<1x8x32xf32, #tpu.memory_space<vmem>>, vector<1x8x32xf32>
    %167 = vector.shape_cast %166 : vector<1x8x32xf32> to vector<8x32xf32>
    %168 = vector.shape_cast %165 : vector<8x32xf32> to vector<1x8x32xf32>
    tpu.vector_store %arg27[%c0_79, %c0_80, %c0_81], %168 {strides = array<i32>} : memref<1x8x32xf32, #tpu.memory_space<vmem>>, vector<1x8x32xf32>,
    return
  }
  func.func @transform_0(%arg0: i32, %arg1: i32) -> (i32, i32, i32) {
    %c0_i32 = arith.constant 0 : i32
    %c0_i32_0 = arith.constant 0 : i32
    %c0_i32_1 = arith.constant 0 : i32
    return %arg0, %c0_i32, %c0_i32_0 : i32, i32, i32
  }
  func.func @transform_1(%arg0: i32, %arg1: i32) -> (i32, i32, i32) {
    %c0_i32 = arith.constant 0 : i32
    %c0_i32_0 = arith.constant 0 : i32
    %c0_i32_1 = arith.constant 0 : i32
    %c0_i32_2 = arith.constant 0 : i32
    return %c0_i32, %c0_i32_0, %c0_i32_1 : i32, i32, i32
  }
  func.func @transform_2(%arg0: i32, %arg1: i32) -> (i32, i32) {
    %c0_i32 = arith.constant 0 : i32
    %c0_i32_0 = arith.constant 0 : i32
    %c0_i32_1 = arith.constant 0 : i32
    return %c0_i32, %c0_i32_0 : i32, i32
  }
  func.func @transform_3(%arg0: i32, %arg1: i32) -> (i32, i32) {
    %c0_i32 = arith.constant 0 : i32
    %c0_i32_0 = arith.constant 0 : i32
    %c0_i32_1 = arith.constant 0 : i32
    return %c0_i32, %c0_i32_0 : i32, i32
  }
  func.func @transform_4(%arg0: i32, %arg1: i32) -> (i32, i32) {
    %c0_i32 = arith.constant 0 : i32
    %c0_i32_0 = arith.constant 0 : i32
    %c0_i32_1 = arith.constant 0 : i32
    return %c0_i32, %c0_i32_0 : i32, i32
  }
  func.func @transform_5(%arg0: i32, %arg1: i32) -> (i32, i32) {
    %c0_i32 = arith.constant 0 : i32
    %c0_i32_0 = arith.constant 0 : i32
    %c0_i32_1 = arith.constant 0 : i32
    return %c0_i32, %c0_i32_0 : i32, i32
  }
  func.func @transform_6(%arg0: i32, %arg1: i32) -> (i32, i32) {
    %c0_i32 = arith.constant 0 : i32
    %c0_i32_0 = arith.constant 0 : i32
    %c0_i32_1 = arith.constant 0 : i32
    return %c0_i32, %c0_i32_0 : i32, i32
  }
  func.func @transform_7(%arg0: i32, %arg1: i32) -> (i32, i32) {
    %c0_i32 = arith.constant 0 : i32
    %c0_i32_0 = arith.constant 0 : i32
    %c0_i32_1 = arith.constant 0 : i32
    return %c0_i32, %c0_i32_0 : i32, i32
  }
  func.func @transform_8(%arg0: i32, %arg1: i32) -> (i32, i32, i32) {
    %c0_i32 = arith.constant 0 : i32
    %c0_i32_0 = arith.constant 0 : i32
    %c0_i32_1 = arith.constant 0 : i32
    %c0_i32_2 = arith.constant 0 : i32
    return %c0_i32, %c0_i32_0, %c0_i32_1 : i32, i32, i32
  }
  func.func @transform_9(%arg0: i32, %arg1: i32) -> (i32, i32) {
    %c0_i32 = arith.constant 0 : i32
    %c0_i32_0 = arith.constant 0 : i32
    %c0_i32_1 = arith.constant 0 : i32
    return %c0_i32, %c0_i32_0 : i32, i32
  }
  func.func @transform_10(%arg0: i32, %arg1: i32) -> (i32, i32) {
    %c0_i32 = arith.constant 0 : i32
    %c0_i32_0 = arith.constant 0 : i32
    %c0_i32_1 = arith.constant 0 : i32
    return %c0_i32, %c0_i32_0 : i32, i32
  }
  func.func @transform_11(%arg0: i32, %arg1: i32) -> (i32, i32) {
    %c0_i32 = arith.constant 0 : i32
    %c0_i32_0 = arith.constant 0 : i32
    %c0_i32_1 = arith.constant 0 : i32
    return %c0_i32, %c0_i32_0 : i32, i32
  }
  func.func @transform_12(%arg0: i32, %arg1: i32) -> (i32, i32) {
    %c0_i32 = arith.constant 0 : i32
    %c0_i32_0 = arith.constant 0 : i32
    %c0_i32_1 = arith.constant 0 : i32
    return %c0_i32, %c0_i32_0 : i32, i32
  }
  func.func @transform_13(%arg0: i32, %arg1: i32) -> (i32, i32) {
    %c0_i32 = arith.constant 0 : i32
    %c0_i32_0 = arith.constant 0 : i32
    %c0_i32_1 = arith.constant 0 : i32
    return %c0_i32, %c0_i32_0 : i32, i32
  }
  func.func @transform_14(%arg0: i32, %arg1: i32) -> (i32, i32) {
    %c0_i32 = arith.constant 0 : i32
    %c0_i32_0 = arith.constant 0 : i32
    %c0_i32_1 = arith.constant 0 : i32
    return %c0_i32, %c0_i32_0 : i32, i32
  }
  func.func @transform_15(%arg0: i32, %arg1: i32) -> (i32, i32) {
    %c0_i32 = arith.constant 0 : i32
    %c0_i32_0 = arith.constant 0 : i32
    %c0_i32_1 = arith.constant 0 : i32
    return %c0_i32, %c0_i32_0 : i32, i32
  }
  func.func @transform_16(%arg0: i32, %arg1: i32) -> (i32, i32) {
    %c0_i32 = arith.constant 0 : i32
    %c0_i32_0 = arith.constant 0 : i32
    %c0_i32_1 = arith.constant 0 : i32
    return %c0_i32, %c0_i32_0 : i32, i32
  }
  func.func @transform_17(%arg0: i32, %arg1: i32) -> (i32, i32) {
    %c0_i32 = arith.constant 0 : i32
    %c0_i32_0 = arith.constant 0 : i32
    %c0_i32_1 = arith.constant 0 : i32
    return %c0_i32, %c0_i32_0 : i32, i32
  }
  func.func @transform_18(%arg0: i32, %arg1: i32) -> (i32, i32) {
    %c0_i32 = arith.constant 0 : i32
    %c0_i32_0 = arith.constant 0 : i32
    %c0_i32_1 = arith.constant 0 : i32
    return %c0_i32, %c0_i32_0 : i32, i32
  }
  func.func @transform_19(%arg0: i32, %arg1: i32) -> (i32, i32) {
    %c0_i32 = arith.constant 0 : i32
    %c0_i32_0 = arith.constant 0 : i32
    %c0_i32_1 = arith.constant 0 : i32
    return %c0_i32, %c0_i32_0 : i32, i32
  }
  func.func @transform_20(%arg0: i32, %arg1: i32) -> (i32, i32) {
    %c0_i32 = arith.constant 0 : i32
    %c0_i32_0 = arith.constant 0 : i32
    %c0_i32_1 = arith.constant 0 : i32
    return %c0_i32, %c0_i32_0 : i32, i32
  }
  func.func @transform_21(%arg0: i32, %arg1: i32) -> (i32, i32) {
    %c0_i32 = arith.constant 0 : i32
    %c0_i32_0 = arith.constant 0 : i32
    %c0_i32_1 = arith.constant 0 : i32
    return %c0_i32, %c0_i32_0 : i32, i32
  }
  func.func @transform_22(%arg0: i32, %arg1: i32) -> (i32, i32) {
    %c0_i32 = arith.constant 0 : i32
    %c0_i32_0 = arith.constant 0 : i32
    %c0_i32_1 = arith.constant 0 : i32
    return %c0_i32, %c0_i32_0 : i32, i32
  }
  func.func @transform_23(%arg0: i32, %arg1: i32) -> (i32, i32) {
    %c0_i32 = arith.constant 0 : i32
    %c0_i32_0 = arith.constant 0 : i32
    %c0_i32_1 = arith.constant 0 : i32
    return %c0_i32, %c0_i32_0 : i32, i32
  }
  func.func @transform_24(%arg0: i32, %arg1: i32) -> (i32, i32) {
    %c0_i32 = arith.constant 0 : i32
    %c0_i32_0 = arith.constant 0 : i32
    %c0_i32_1 = arith.constant 0 : i32
    return %c0_i32, %c0_i32_0 : i32, i32
  }
  func.func @transform_25(%arg0: i32, %arg1: i32) -> (i32, i32, i32) {
    %c0_i32 = arith.constant 0 : i32
    %c0_i32_0 = arith.constant 0 : i32
    return %arg0, %arg1, %c0_i32 : i32, i32, i32
  }
}

module attributes {stable_mosaic.version = 11 : i64} {
  func.func @_encoder_layer_kernel(%arg0: i32, %arg1: i32, %arg2: memref<1x8x32xf32, #tpu.memory_space<vmem>>, %arg3: memref<4x8x8xbf16, #tpu.memory_space<vmem>>, %arg4: memref<32x32xbf16, #tpu.memory_space<vmem>>, %arg5: memref<1x32xf32, #tpu.memory_space<vmem>>, %arg6: memref<32x32xbf16, #tpu.memory_space<vmem>>, %arg7: memref<32x1xf32, #tpu.memory_space<vmem>>, %arg8: memref<32x32xbf16, #tpu.memory_space<vmem>>, %arg9: memref<32x1xf32, #tpu.memory_space<vmem>>, %arg10: memref<4x8x32xbf16, #tpu.memory_space<vmem>>, %arg11: memref<1x32xf32, #tpu.memory_space<vmem>>, %arg12: memref<32x8xbf16, #tpu.memory_space<vmem>>, %arg13: memref<1x8xf32, #tpu.memory_space<vmem>>, %arg14: memref<1x4xf32, #tpu.memory_space<vmem>>, %arg15: memref<1x32xf32, #tpu.memory_space<vmem>>, %arg16: memref<1x32xf32, #tpu.memory_space<vmem>>, %arg17: memref<32x64xbf16, #tpu.memory_space<vmem>>, %arg18: memref<1x64xf32, #tpu.memory_space<vmem>>, %arg19: memref<64x32xbf16, #tpu.memory_space<vmem>>, %arg20: memref<1x32xf32, #tpu.memory_space<vmem>>, %arg21: memref<32x16xbf16, #tpu.memory_space<vmem>>, %arg22: memref<1x16xf32, #tpu.memory_space<vmem>>, %arg23: memref<16x32xbf16, #tpu.memory_space<vmem>>, %arg24: memref<1x32xf32, #tpu.memory_space<vmem>>, %arg25: memref<1x32xf32, #tpu.memory_space<vmem>>, %arg26: memref<1x32xf32, #tpu.memory_space<vmem>>, %arg27: memref<1x8x32xf32, #tpu.memory_space<vmem>>, %arg28: memref<4x8x8xbf16, #tpu.memory_space<vmem>>, %arg29: memref<4x8x8xbf16, #tpu.memory_space<vmem>>) attributes {dimension_semantics = [#tpu.dimension_semantics<parallel>, #tpu.dimension_semantics<arbitrary>], iteration_bounds = array<i64: 2, 1>, scalar_prefetch = 0 : i64, scratch_operands = 2 : i64, tpu.core_type = #tpu.core_type<tc>, window_params = [{transform_indices = @transform_0, window_bounds = array<i64: 1, 8, 32>}, {pipeline_mode = #tpu.pipeline_mode<synchronous>, transform_indices = @transform_1, window_bounds = array<i64: 4, 8, 8>}, {pipeline_mode = #tpu.pipeline_mode<synchronous>, transform_indices = @transform_2, window_bounds = array<i64: 32, 32>}, {pipeline_mode = #tpu.pipeline_mode<synchronous>, transform_indices = @transform_3, window_bounds = array<i64: 1, 32>}, {pipeline_mode = #tpu.pipeline_mode<synchronous>, transform_indices = @transform_4, window_bounds = array<i64: 32, 32>}, {pipeline_mode = #tpu.pipeline_mode<synchronous>, transform_indices = @transform_5, window_bounds = array<i64: 32, 1>}, {pipeline_mode = #tpu.pipeline_mode<synchronous>, transform_indices = @transform_6, window_bounds = array<i64: 32, 32>}, {pipeline_mode = #tpu.pipeline_mode<synchronous>, transform_indices = @transform_7, window_bounds = array<i64: 32, 1>}, {pipeline_mode = #tpu.pipeline_mode<synchronous>, transform_indices = @transform_8, window_bounds = array<i64: 4, 8, 32>}, {pipeline_mode = #tpu.pipeline_mode<synchronous>, transform_indices = @transform_9, window_bounds = array<i64: 1, 32>}, {pipeline_mode = #tpu.pipeline_mode<synchronous>, transform_indices = @transform_10, window_bounds = array<i64: 32, 8>}, {pipeline_mode = #tpu.pipeline_mode<synchronous>, transform_indices = @transform_11, window_bounds = array<i64: 1, 8>}, {pipeline_mode = #tpu.pipeline_mode<synchronous>, transform_indices = @transform_12, window_bounds = array<i64: 1, 4>}, {pipeline_mode = #tpu.pipeline_mode<synchronous>, transform_indices = @transform_13, window_bounds = array<i64: 1, 32>}, {pipeline_mode = #tpu.pipeline_mode<synchronous>, transform_indices = @transform_14, window_bounds = array<i64: 1, 32>}, {pipeline_mode = #tpu.pipeline_mode<synchronous>, transform_indices = @transform_15, window_bounds = array<i64: 32, 64>}, {pipeline_mode = #tpu.pipeline_mode<synchronous>, transform_indices = @transform_16, window_bounds = array<i64: 1, 64>}, {pipeline_mode = #tpu.pipeline_mode<synchronous>, transform_indices = @transform_17, window_bounds = array<i64: 64, 32>}, {pipeline_mode = #tpu.pipeline_mode<synchronous>, transform_indices = @transform_18, window_bounds = array<i64: 1, 32>}, {pipeline_mode = #tpu.pipeline_mode<synchronous>, transform_indices = @transform_19, window_bounds = array<i64: 32, 16>}, {pipeline_mode = #tpu.pipeline_mode<synchronous>, transform_indices = @transform_20, window_bounds = array<i64: 1, 16>}, {pipeline_mode = #tpu.pipeline_mode<synchronous>, transform_indices = @transform_21, window_bounds = array<i64: 16, 32>}, {pipeline_mode = #tpu.pipeline_mode<synchronous>, transform_indices = @transform_22, window_bounds = array<i64: 1, 32>}, {pipeline_mode = #tpu.pipeline_mode<synchronous>, transform_indices = @transform_23, window_bounds = array<i64: 1, 32>}, {pipeline_mode = #tpu.pipeline_mode<synchronous>, transform_indices = @transform_24, window_bounds = array<i64: 1, 32>}, {transform_indices = @transform_25, window_bounds = array<i64: 1, 8, 32>}]} {
    %c0_i32 = arith.constant 0 : i32
    %0 = arith.cmpi eq, %arg1, %c0_i32 : i32
    %1 = arith.extui %0 : i1 to i32
    %c0_i32_0 = arith.constant 0 : i32
    %2 = arith.cmpi ne, %1, %c0_i32_0 : i32
    scf.if %2 {
      %c0_82 = arith.constant 0 : index
      %c0_83 = arith.constant 0 : index
      %c0_84 = arith.constant 0 : index
      %169 = vector.load %arg2[%c0_82, %c0_83, %c0_84] : memref<1x8x32xf32, #tpu.memory_space<vmem>>, vector<1x8x32xf32>
      %170 = vector.shape_cast %169 : vector<1x8x32xf32> to vector<8x32xf32>
      %171 = arith.truncf %170 : vector<8x32xf32> to vector<8x32xbf16>
      %c0_85 = arith.constant 0 : index
      %c0_86 = arith.constant 0 : index
      %172 = vector.load %arg6[%c0_85, %c0_86] : memref<32x32xbf16, #tpu.memory_space<vmem>>, vector<32x32xbf16>
      %cst_87 = arith.constant dense<0.000000e+00> : vector<32x8xf32>
      %173 = tpu.matmul %172, %171, %cst_87 {dimension_numbers = #tpu.dot_dimension_numbers<[1], [1], [0], [0], [0, 0, 1, 0], [], []>} : vector<32x32xbf16>, vector<8x32xbf16>, vector<32x8xf32> -> vector<32x8xf32>
      %c0_88 = arith.constant 0 : index
      %c0_89 = arith.constant 0 : index
      %174 = vector.load %arg7[%c0_88, %c0_89] : memref<32x1xf32, #tpu.memory_space<vmem>>, vector<32x1xf32>
      %175 = vector.broadcast %174 : vector<32x1xf32> to vector<32x8xf32>
      %176 = arith.addf %173, %175 : vector<32x8xf32>
      %c0_90 = arith.constant 0 : index
      %c0_91 = arith.constant 0 : index
      %177 = vector.load %arg8[%c0_90, %c0_91] : memref<32x32xbf16, #tpu.memory_space<vmem>>, vector<32x32xbf16>
      %cst_92 = arith.constant dense<0.000000e+00> : vector<32x8xf32>
      %178 = tpu.matmul %177, %171, %cst_92 {dimension_numbers = #tpu.dot_dimension_numbers<[1], [1], [0], [0], [0, 0, 1, 0], [], []>} : vector<32x32xbf16>, vector<8x32xbf16>, vector<32x8xf32> -> vector<32x8xf32>
      %c0_93 = arith.constant 0 : index
      %c0_94 = arith.constant 0 : index
      %179 = vector.load %arg9[%c0_93, %c0_94] : memref<32x1xf32, #tpu.memory_space<vmem>>, vector<32x1xf32>
      %180 = vector.broadcast %179 : vector<32x1xf32> to vector<32x8xf32>
      %181 = arith.addf %178, %180 : vector<32x8xf32>
      %182 = vector.shape_cast %176 : vector<32x8xf32> to vector<4x8x8xf32>
      %183 = arith.truncf %182 : vector<4x8x8xf32> to vector<4x8x8xbf16>
      %c0_95 = arith.constant 0 : index
      %c0_96 = arith.constant 0 : index
      %c0_97 = arith.constant 0 : index
      %184 = vector.load %arg28[%c0_95, %c0_96, %c0_97] : memref<4x8x8xbf16, #tpu.memory_space<vmem>>, vector<4x8x8xbf16>
      tpu.vector_store %arg28[%c0_95, %c0_96, %c0_97], %183 {strides = array<i32>} : memref<4x8x8xbf16, #tpu.memory_space<vmem>>, vector<4x8x8xbf16>,
      %185 = vector.shape_cast %181 : vector<32x8xf32> to vector<4x8x8xf32>
      %186 = arith.truncf %185 : vector<4x8x8xf32> to vector<4x8x8xbf16>
      %c0_98 = arith.constant 0 : index
      %c0_99 = arith.constant 0 : index
      %c0_100 = arith.constant 0 : index
      %187 = vector.load %arg29[%c0_98, %c0_99, %c0_100] : memref<4x8x8xbf16, #tpu.memory_space<vmem>>, vector<4x8x8xbf16>
      tpu.vector_store %arg29[%c0_98, %c0_99, %c0_100], %186 {strides = array<i32>} : memref<4x8x8xbf16, #tpu.memory_space<vmem>>, vector<4x8x8xbf16>,
    } else {
    }
    %c8_i32 = arith.constant 8 : i32
    %3 = arith.muli %arg1, %c8_i32 : i32
    %4 = tpu.assume_multiple %3, 8 : i32
    %c0 = arith.constant 0 : index
    %5 = arith.index_cast %4 : i32 to index
    %c0_1 = arith.constant 0 : index
    %6 = vector.load %arg2[%c0, %5, %c0_1] : memref<1x8x32xf32, #tpu.memory_space<vmem>>, vector<1x8x32xf32>
    %7 = vector.shape_cast %6 : vector<1x8x32xf32> to vector<8x32xf32>
    %8 = arith.truncf %7 : vector<8x32xf32> to vector<8x32xbf16>
    %c0_2 = arith.constant 0 : index
    %c0_3 = arith.constant 0 : index
    %9 = vector.load %arg4[%c0_2, %c0_3] : memref<32x32xbf16, #tpu.memory_space<vmem>>, vector<32x32xbf16>
    %cst = arith.constant dense<0.000000e+00> : vector<8x32xf32>
    %10 = tpu.matmul %8, %9, %cst {dimension_numbers = #tpu.dot_dimension_numbers<[1], [0], [0], [1], [0, 0, 1, 1], [], []>} : vector<8x32xbf16>, vector<32x32xbf16>, vector<8x32xf32> -> vector<8x32xf32>
    %c0_4 = arith.constant 0 : index
    %c0_5 = arith.constant 0 : index
    %11 = vector.load %arg5[%c0_4, %c0_5] : memref<1x32xf32, #tpu.memory_space<vmem>>, vector<1x32xf32>
    %12 = vector.broadcast %11 : vector<1x32xf32> to vector<8x32xf32>
    %13 = arith.addf %10, %12 : vector<8x32xf32>
    %14 = arith.truncf %13 : vector<8x32xf32> to vector<8x32xbf16>
    %15 = vector.extract_strided_slice %14 {offsets = [0, 0], sizes = [8, 8], strides = [1, 1]} : vector<8x32xbf16> to vector<8x8xbf16>
    %16 = vector.extract_strided_slice %14 {offsets = [0, 8], sizes = [8, 8], strides = [1, 1]} : vector<8x32xbf16> to vector<8x8xbf16>
    %17 = vector.extract_strided_slice %14 {offsets = [0, 16], sizes = [8, 8], strides = [1, 1]} : vector<8x32xbf16> to vector<8x8xbf16>
    %18 = vector.extract_strided_slice %14 {offsets = [0, 24], sizes = [8, 8], strides = [1, 1]} : vector<8x32xbf16> to vector<8x8xbf16>
    %19 = vector.shape_cast %15 : vector<8x8xbf16> to vector<1x8x8xbf16>
    %20 = vector.shape_cast %16 : vector<8x8xbf16> to vector<1x8x8xbf16>
    %21 = vector.shape_cast %17 : vector<8x8xbf16> to vector<1x8x8xbf16>
    %22 = vector.shape_cast %18 : vector<8x8xbf16> to vector<1x8x8xbf16>
    %23 = tpu.concatenate %19, %20, %21, %22 in 0 : vector<1x8x8xbf16>, vector<1x8x8xbf16>, vector<1x8x8xbf16>, vector<1x8x8xbf16> -> vector<4x8x8xbf16>
    %c0_6 = arith.constant 0 : index
    %c0_7 = arith.constant 0 : index
    %c0_8 = arith.constant 0 : index
    %24 = vector.load %arg28[%c0_6, %c0_7, %c0_8] : memref<4x8x8xbf16, #tpu.memory_space<vmem>>, vector<4x8x8xbf16>
    "tpu.trace_start"() <{level = 10 : i32, message = "hqd,hdk->hqk"}> : () -> ()
    %cst_9 = arith.constant dense<0.000000e+00> : vector<4x8x8xf32>
    %25 = tpu.matmul %23, %24, %cst_9 {dimension_numbers = #tpu.dot_dimension_numbers<[2], [1], [1], [2], [0, 0, 0, 1, 1, 2], [0], [0]>} : vector<4x8x8xbf16>, vector<4x8x8xbf16>, vector<4x8x8xf32> -> vector<4x8x8xf32>
    "tpu.trace_stop"() : () -> ()
    %c0_10 = arith.constant 0 : index
    %c0_11 = arith.constant 0 : index
    %26 = vector.load %arg12[%c0_10, %c0_11] : memref<32x8xbf16, #tpu.memory_space<vmem>>, vector<32x8xbf16>
    %cst_12 = arith.constant dense<0.000000e+00> : vector<8x8xf32>
    %27 = tpu.matmul %8, %26, %cst_12 {dimension_numbers = #tpu.dot_dimension_numbers<[1], [0], [0], [1], [0, 0, 1, 1], [], []>} : vector<8x32xbf16>, vector<32x8xbf16>, vector<8x8xf32> -> vector<8x8xf32>
    %c0_13 = arith.constant 0 : index
    %c0_14 = arith.constant 0 : index
    %28 = vector.load %arg13[%c0_13, %c0_14] : memref<1x8xf32, #tpu.memory_space<vmem>>, vector<1x8xf32>
    %29 = vector.broadcast %28 : vector<1x8xf32> to vector<8x8xf32>
    %30 = arith.addf %27, %29 : vector<8x8xf32>
    %31 = arith.negf %30 : vector<8x8xf32>
    %32 = math.exp %31 : vector<8x8xf32>
    %cst_15 = arith.constant 1.000000e+00 : f32
    %33 = vector.broadcast %cst_15 : f32 to vector<8x8xf32>
    %34 = arith.addf %33, %32 : vector<8x8xf32>
    %35 = arith.divf %33, %34 : vector<8x8xf32>
    %36 = vector.extract_strided_slice %35 {offsets = [0, 0], sizes = [8, 4], strides = [1, 1]} : vector<8x8xf32> to vector<8x4xf32>
    %37 = vector.extract_strided_slice %35 {offsets = [0, 4], sizes = [8, 4], strides = [1, 1]} : vector<8x8xf32> to vector<8x4xf32>
    %c0_16 = arith.constant 0 : index
    %c0_17 = arith.constant 0 : index
    %38 = vector.load %arg14[%c0_16, %c0_17] : memref<1x4xf32, #tpu.memory_space<vmem>>, vector<1x4xf32>
    %39 = vector.broadcast %38 : vector<1x4xf32> to vector<8x4xf32>
    %40 = arith.mulf %37, %39 : vector<8x4xf32>
    %cst_18 = arith.constant 1.000000e+00 : f32
    %41 = vector.broadcast %cst_18 : f32 to vector<8x4xf32>
    %42 = arith.subf %40, %41 : vector<8x4xf32>
    %43 = arith.mulf %36, %42 : vector<8x4xf32>
    %cst_19 = arith.constant 2.000000e+00 : f32
    %44 = vector.broadcast %cst_19 : f32 to vector<8x4xf32>
    %45 = arith.addf %43, %44 : vector<8x4xf32>
    %46 = tpu.transpose %45, [1, 0] : vector<8x4xf32> -> vector<4x8xf32>
    %47 = vector.shape_cast %46 : vector<4x8xf32> to vector<4x8x1xf32>
    %48 = arith.truncf %47 : vector<4x8x1xf32> to vector<4x8x1xbf16>
    %c0_20 = arith.constant 0 : index
    %49 = arith.index_cast %4 : i32 to index
    %c0_21 = arith.constant 0 : index
    %50 = vector.load %arg3[%c0_20, %49, %c0_21] : memref<4x8x8xbf16, #tpu.memory_space<vmem>>, vector<4x8x8xbf16>
    %51 = vector.broadcast %48 : vector<4x8x1xbf16> to vector<4x8x8xbf16>
    %52 = arith.mulf %51, %50 : vector<4x8x8xbf16>
    %53 = arith.extf %52 : vector<4x8x8xbf16> to vector<4x8x8xf32>
    %54 = arith.addf %25, %53 : vector<4x8x8xf32>
    %cst_22 = arith.constant dense<0xFF800000> : vector<4x8xf32>
    %55 = vector.multi_reduction <maximumf>, %54, %cst_22 [2] : vector<4x8x8xf32> to vector<4x8xf32>
    %56 = vector.shape_cast %55 : vector<4x8xf32> to vector<4x8x1xf32>
    %57 = vector.broadcast %56 : vector<4x8x1xf32> to vector<4x8x8xf32>
    %58 = arith.subf %54, %57 : vector<4x8x8xf32>
    %59 = math.exp %58 : vector<4x8x8xf32>
    %cst_23 = arith.constant dense<0.000000e+00> : vector<4x8xf32>
    %60 = vector.multi_reduction <add>, %59, %cst_23 [2] : vector<4x8x8xf32> to vector<4x8xf32>
    %61 = vector.shape_cast %60 : vector<4x8xf32> to vector<4x8x1xf32>
    %62 = tpu.reciprocal %61 {approx = true} : vector<4x8x1xf32> -> vector<4x8x1xf32>
    %63 = vector.broadcast %62 : vector<4x8x1xf32> to vector<4x8x8xf32>
    %64 = arith.mulf %59, %63 : vector<4x8x8xf32>
    %65 = arith.truncf %64 : vector<4x8x8xf32> to vector<4x8x8xbf16>
    %c0_24 = arith.constant 0 : index
    %c0_25 = arith.constant 0 : index
    %c0_26 = arith.constant 0 : index
    %66 = vector.load %arg29[%c0_24, %c0_25, %c0_26] : memref<4x8x8xbf16, #tpu.memory_space<vmem>>, vector<4x8x8xbf16>
    "tpu.trace_start"() <{level = 10 : i32, message = "hqk,hdk->hqd"}> : () -> ()
    %cst_27 = arith.constant dense<0.000000e+00> : vector<4x8x8xf32>
    %67 = tpu.matmul %65, %66, %cst_27 {dimension_numbers = #tpu.dot_dimension_numbers<[2], [2], [1], [1], [0, 0, 0, 1, 1, 1], [0], [0]>} : vector<4x8x8xbf16>, vector<4x8x8xbf16>, vector<4x8x8xf32> -> vector<4x8x8xf32>
    "tpu.trace_stop"() : () -> ()
    %68 = arith.truncf %67 : vector<4x8x8xf32> to vector<4x8x8xbf16>
    %c0_28 = arith.constant 0 : index
    %c0_29 = arith.constant 0 : index
    %c0_30 = arith.constant 0 : index
    %69 = vector.load %arg10[%c0_28, %c0_29, %c0_30] : memref<4x8x32xbf16, #tpu.memory_space<vmem>>, vector<4x8x32xbf16>
    "tpu.trace_start"() <{level = 10 : i32, message = "hqd,hdo->hqo"}> : () -> ()
    %cst_31 = arith.constant dense<0.000000e+00> : vector<4x8x32xf32>
    %70 = tpu.matmul %68, %69, %cst_31 {dimension_numbers = #tpu.dot_dimension_numbers<[2], [1], [1], [2], [0, 0, 0, 1, 1, 2], [0], [0]>} : vector<4x8x8xbf16>, vector<4x8x32xbf16>, vector<4x8x32xf32> -> vector<4x8x32xf32>
    "tpu.trace_stop"() : () -> ()
    %cst_32 = arith.constant dense<0.000000e+00> : vector<8x32xf32>
    %71 = vector.multi_reduction <add>, %70, %cst_32 [0] : vector<4x8x32xf32> to vector<8x32xf32>
    %c0_33 = arith.constant 0 : index
    %c0_34 = arith.constant 0 : index
    %72 = vector.load %arg11[%c0_33, %c0_34] : memref<1x32xf32, #tpu.memory_space<vmem>>, vector<1x32xf32>
    %73 = vector.broadcast %72 : vector<1x32xf32> to vector<8x32xf32>
    %74 = arith.addf %71, %73 : vector<8x32xf32>
    %75 = arith.addf %7, %74 : vector<8x32xf32>
    %c0_35 = arith.constant 0 : index
    %c0_36 = arith.constant 0 : index
    %76 = vector.load %arg15[%c0_35, %c0_36] : memref<1x32xf32, #tpu.memory_space<vmem>>, vector<1x32xf32>
    %c0_37 = arith.constant 0 : index
    %c0_38 = arith.constant 0 : index
    %77 = vector.load %arg16[%c0_37, %c0_38] : memref<1x32xf32, #tpu.memory_space<vmem>>, vector<1x32xf32>
    %cst_39 = arith.constant dense<0.000000e+00> : vector<8xf32>
    %78 = vector.multi_reduction <add>, %75, %cst_39 [1] : vector<8x32xf32> to vector<8xf32>
    %79 = vector.shape_cast %78 : vector<8xf32> to vector<8x1xf32>
    %cst_40 = arith.constant 3.200000e+01 : f32
    %80 = vector.broadcast %cst_40 : f32 to vector<8x1xf32>
    %81 = arith.divf %79, %80 : vector<8x1xf32>
    %82 = vector.broadcast %81 : vector<8x1xf32> to vector<8x32xf32>
    %83 = arith.subf %75, %82 : vector<8x32xf32>
    %84 = arith.mulf %83, %83 : vector<8x32xf32>
    %cst_41 = arith.constant dense<0.000000e+00> : vector<8xf32>
    %85 = vector.multi_reduction <add>, %84, %cst_41 [1] : vector<8x32xf32> to vector<8xf32>
    %86 = vector.shape_cast %85 : vector<8xf32> to vector<8x1xf32>
    %cst_42 = arith.constant 3.200000e+01 : f32
    %87 = vector.broadcast %cst_42 : f32 to vector<8x1xf32>
    %88 = arith.divf %86, %87 : vector<8x1xf32>
    %89 = vector.broadcast %81 : vector<8x1xf32> to vector<8x32xf32>
    %90 = arith.subf %75, %89 : vector<8x32xf32>
    %cst_43 = arith.constant 9.99999974E-6 : f32
    %91 = vector.broadcast %cst_43 : f32 to vector<8x1xf32>
    %92 = arith.addf %88, %91 : vector<8x1xf32>
    %93 = math.rsqrt %92 : vector<8x1xf32>
    %94 = vector.broadcast %93 : vector<8x1xf32> to vector<8x32xf32>
    %95 = arith.mulf %90, %94 : vector<8x32xf32>
    %96 = vector.broadcast %76 : vector<1x32xf32> to vector<8x32xf32>
    %97 = arith.mulf %95, %96 : vector<8x32xf32>
    %98 = vector.broadcast %77 : vector<1x32xf32> to vector<8x32xf32>
    %99 = arith.addf %97, %98 : vector<8x32xf32>
    %100 = arith.truncf %99 : vector<8x32xf32> to vector<8x32xbf16>
    %c0_44 = arith.constant 0 : index
    %c0_45 = arith.constant 0 : index
    %101 = vector.load %arg17[%c0_44, %c0_45] : memref<32x64xbf16, #tpu.memory_space<vmem>>, vector<32x64xbf16>
    %cst_46 = arith.constant dense<0.000000e+00> : vector<8x64xf32>
    %102 = tpu.matmul %100, %101, %cst_46 {dimension_numbers = #tpu.dot_dimension_numbers<[1], [0], [0], [1], [0, 0, 1, 1], [], []>} : vector<8x32xbf16>, vector<32x64xbf16>, vector<8x64xf32> -> vector<8x64xf32>
    %c0_47 = arith.constant 0 : index
    %c0_48 = arith.constant 0 : index
    %103 = vector.load %arg18[%c0_47, %c0_48] : memref<1x64xf32, #tpu.memory_space<vmem>>, vector<1x64xf32>
    %104 = vector.broadcast %103 : vector<1x64xf32> to vector<8x64xf32>
    %105 = arith.addf %102, %104 : vector<8x64xf32>
    %cst_49 = arith.constant 5.000000e-01 : f32
    %106 = vector.broadcast %cst_49 : f32 to vector<8x64xf32>
    %107 = arith.mulf %106, %105 : vector<8x64xf32>
    %cst_50 = arith.constant 2.000000e+00 : f32
    %108 = math.sqrt %cst_50 : f32
    %109 = vector.broadcast %108 : f32 to vector<8x64xf32>
    %110 = arith.divf %105, %109 : vector<8x64xf32>
    %111 = math.erf %110 : vector<8x64xf32>
    %cst_51 = arith.constant 1.000000e+00 : f32
    %112 = vector.broadcast %cst_51 : f32 to vector<8x64xf32>
    %113 = arith.addf %112, %111 : vector<8x64xf32>
    %114 = arith.mulf %107, %113 : vector<8x64xf32>
    %115 = arith.truncf %114 : vector<8x64xf32> to vector<8x64xbf16>
    %c0_52 = arith.constant 0 : index
    %c0_53 = arith.constant 0 : index
    %116 = vector.load %arg19[%c0_52, %c0_53] : memref<64x32xbf16, #tpu.memory_space<vmem>>, vector<64x32xbf16>
    %cst_54 = arith.constant dense<0.000000e+00> : vector<8x32xf32>
    %117 = tpu.matmul %115, %116, %cst_54 {dimension_numbers = #tpu.dot_dimension_numbers<[1], [0], [0], [1], [0, 0, 1, 1], [], []>} : vector<8x64xbf16>, vector<64x32xbf16>, vector<8x32xf32> -> vector<8x32xf32>
    %c0_55 = arith.constant 0 : index
    %c0_56 = arith.constant 0 : index
    %118 = vector.load %arg20[%c0_55, %c0_56] : memref<1x32xf32, #tpu.memory_space<vmem>>, vector<1x32xf32>
    %119 = vector.broadcast %118 : vector<1x32xf32> to vector<8x32xf32>
    %120 = arith.addf %117, %119 : vector<8x32xf32>
    %c0_57 = arith.constant 0 : index
    %c0_58 = arith.constant 0 : index
    %121 = vector.load %arg21[%c0_57, %c0_58] : memref<32x16xbf16, #tpu.memory_space<vmem>>, vector<32x16xbf16>
    %cst_59 = arith.constant dense<0.000000e+00> : vector<8x16xf32>
    %122 = tpu.matmul %100, %121, %cst_59 {dimension_numbers = #tpu.dot_dimension_numbers<[1], [0], [0], [1], [0, 0, 1, 1], [], []>} : vector<8x32xbf16>, vector<32x16xbf16>, vector<8x16xf32> -> vector<8x16xf32>
    %c0_60 = arith.constant 0 : index
    %c0_61 = arith.constant 0 : index
    %123 = vector.load %arg22[%c0_60, %c0_61] : memref<1x16xf32, #tpu.memory_space<vmem>>, vector<1x16xf32>
    %124 = vector.broadcast %123 : vector<1x16xf32> to vector<8x16xf32>
    %125 = arith.addf %122, %124 : vector<8x16xf32>
    %cst_62 = arith.constant 0.000000e+00 : f32
    %126 = vector.broadcast %cst_62 : f32 to vector<8x16xf32>
    %127 = arith.cmpf ogt, %125, %126 : vector<8x16xf32>
    %cst_63 = arith.constant 0.000000e+00 : f32
    %128 = vector.broadcast %cst_63 : f32 to vector<8x16xf32>
    %129 = arith.minimumf %125, %128 : vector<8x16xf32>
    %130 = math.exp %129 : vector<8x16xf32>
    %cst_64 = arith.constant 1.000000e+00 : f32
    %131 = vector.broadcast %cst_64 : f32 to vector<8x16xf32>
    %132 = arith.subf %130, %131 : vector<8x16xf32>
    %133 = arith.select %127, %125, %132 : vector<8x16xi1>, vector<8x16xf32>
    %134 = arith.truncf %133 : vector<8x16xf32> to vector<8x16xbf16>
    %c0_65 = arith.constant 0 : index
    %c0_66 = arith.constant 0 : index
    %135 = vector.load %arg23[%c0_65, %c0_66] : memref<16x32xbf16, #tpu.memory_space<vmem>>, vector<16x32xbf16>
    %cst_67 = arith.constant dense<0.000000e+00> : vector<8x32xf32>
    %136 = tpu.matmul %134, %135, %cst_67 {dimension_numbers = #tpu.dot_dimension_numbers<[1], [0], [0], [1], [0, 0, 1, 1], [], []>} : vector<8x16xbf16>, vector<16x32xbf16>, vector<8x32xf32> -> vector<8x32xf32>
    %c0_68 = arith.constant 0 : index
    %c0_69 = arith.constant 0 : index
    %137 = vector.load %arg24[%c0_68, %c0_69] : memref<1x32xf32, #tpu.memory_space<vmem>>, vector<1x32xf32>
    %138 = vector.broadcast %137 : vector<1x32xf32> to vector<8x32xf32>
    %139 = arith.addf %136, %138 : vector<8x32xf32>
    %140 = arith.addf %99, %120 : vector<8x32xf32>
    %141 = arith.addf %140, %139 : vector<8x32xf32>
    %c0_70 = arith.constant 0 : index
    %c0_71 = arith.constant 0 : index
    %142 = vector.load %arg25[%c0_70, %c0_71] : memref<1x32xf32, #tpu.memory_space<vmem>>, vector<1x32xf32>
    %c0_72 = arith.constant 0 : index
    %c0_73 = arith.constant 0 : index
    %143 = vector.load %arg26[%c0_72, %c0_73] : memref<1x32xf32, #tpu.memory_space<vmem>>, vector<1x32xf32>
    %cst_74 = arith.constant dense<0.000000e+00> : vector<8xf32>
    %144 = vector.multi_reduction <add>, %141, %cst_74 [1] : vector<8x32xf32> to vector<8xf32>
    %145 = vector.shape_cast %144 : vector<8xf32> to vector<8x1xf32>
    %cst_75 = arith.constant 3.200000e+01 : f32
    %146 = vector.broadcast %cst_75 : f32 to vector<8x1xf32>
    %147 = arith.divf %145, %146 : vector<8x1xf32>
    %148 = vector.broadcast %147 : vector<8x1xf32> to vector<8x32xf32>
    %149 = arith.subf %141, %148 : vector<8x32xf32>
    %150 = arith.mulf %149, %149 : vector<8x32xf32>
    %cst_76 = arith.constant dense<0.000000e+00> : vector<8xf32>
    %151 = vector.multi_reduction <add>, %150, %cst_76 [1] : vector<8x32xf32> to vector<8xf32>
    %152 = vector.shape_cast %151 : vector<8xf32> to vector<8x1xf32>
    %cst_77 = arith.constant 3.200000e+01 : f32
    %153 = vector.broadcast %cst_77 : f32 to vector<8x1xf32>
    %154 = arith.divf %152, %153 : vector<8x1xf32>
    %155 = vector.broadcast %147 : vector<8x1xf32> to vector<8x32xf32>
    %156 = arith.subf %141, %155 : vector<8x32xf32>
    %cst_78 = arith.constant 9.99999974E-6 : f32
    %157 = vector.broadcast %cst_78 : f32 to vector<8x1xf32>
    %158 = arith.addf %154, %157 : vector<8x1xf32>
    %159 = math.rsqrt %158 : vector<8x1xf32>
    %160 = vector.broadcast %159 : vector<8x1xf32> to vector<8x32xf32>
    %161 = arith.mulf %156, %160 : vector<8x32xf32>
    %162 = vector.broadcast %142 : vector<1x32xf32> to vector<8x32xf32>
    %163 = arith.mulf %161, %162 : vector<8x32xf32>
    %164 = vector.broadcast %143 : vector<1x32xf32> to vector<8x32xf32>
    %165 = arith.addf %163, %164 : vector<8x32xf32>
    %c0_79 = arith.constant 0 : index
    %c0_80 = arith.constant 0 : index
    %c0_81 = arith.constant 0 : index
    %166 = vector.load %arg27[%c0_79, %c0_80, %c0_81] : memref<1x8x32xf32, #tpu.memory_space<vmem>>, vector<1x8x32xf32>
    %167 = vector.shape_cast %166 : vector<1x8x32xf32> to vector<8x32xf32>
    %168 = vector.shape_cast %165 : vector<8x32xf32> to vector<1x8x32xf32>
    tpu.vector_store %arg27[%c0_79, %c0_80, %c0_81], %168 {strides = array<i32>} : memref<1x8x32xf32, #tpu.memory_space<vmem>>, vector<1x8x32xf32>,
    return
  }
  func.func @transform_0(%arg0: i32, %arg1: i32) -> (i32, i32, i32) {
    %c0_i32 = arith.constant 0 : i32
    %c0_i32_0 = arith.constant 0 : i32
    %c0_i32_1 = arith.constant 0 : i32
    return %arg0, %c0_i32, %c0_i32_0 : i32, i32, i32
  }
  func.func @transform_1(%arg0: i32, %arg1: i32) -> (i32, i32, i32) {
    %c0_i32 = arith.constant 0 : i32
    %c0_i32_0 = arith.constant 0 : i32
    %c0_i32_1 = arith.constant 0 : i32
    %c0_i32_2 = arith.constant 0 : i32
    return %c0_i32, %c0_i32_0, %c0_i32_1 : i32, i32, i32
  }
  func.func @transform_2(%arg0: i32, %arg1: i32) -> (i32, i32) {
    %c0_i32 = arith.constant 0 : i32
    %c0_i32_0 = arith.constant 0 : i32
    %c0_i32_1 = arith.constant 0 : i32
    return %c0_i32, %c0_i32_0 : i32, i32
  }
  func.func @transform_3(%arg0: i32, %arg1: i32) -> (i32, i32) {
    %c0_i32 = arith.constant 0 : i32
    %c0_i32_0 = arith.constant 0 : i32
    %c0_i32_1 = arith.constant 0 : i32
    return %c0_i32, %c0_i32_0 : i32, i32
  }
  func.func @transform_4(%arg0: i32, %arg1: i32) -> (i32, i32) {
    %c0_i32 = arith.constant 0 : i32
    %c0_i32_0 = arith.constant 0 : i32
    %c0_i32_1 = arith.constant 0 : i32
    return %c0_i32, %c0_i32_0 : i32, i32
  }
  func.func @transform_5(%arg0: i32, %arg1: i32) -> (i32, i32) {
    %c0_i32 = arith.constant 0 : i32
    %c0_i32_0 = arith.constant 0 : i32
    %c0_i32_1 = arith.constant 0 : i32
    return %c0_i32, %c0_i32_0 : i32, i32
  }
  func.func @transform_6(%arg0: i32, %arg1: i32) -> (i32, i32) {
    %c0_i32 = arith.constant 0 : i32
    %c0_i32_0 = arith.constant 0 : i32
    %c0_i32_1 = arith.constant 0 : i32
    return %c0_i32, %c0_i32_0 : i32, i32
  }
  func.func @transform_7(%arg0: i32, %arg1: i32) -> (i32, i32) {
    %c0_i32 = arith.constant 0 : i32
    %c0_i32_0 = arith.constant 0 : i32
    %c0_i32_1 = arith.constant 0 : i32
    return %c0_i32, %c0_i32_0 : i32, i32
  }
  func.func @transform_8(%arg0: i32, %arg1: i32) -> (i32, i32, i32) {
    %c0_i32 = arith.constant 0 : i32
    %c0_i32_0 = arith.constant 0 : i32
    %c0_i32_1 = arith.constant 0 : i32
    %c0_i32_2 = arith.constant 0 : i32
    return %c0_i32, %c0_i32_0, %c0_i32_1 : i32, i32, i32
  }
  func.func @transform_9(%arg0: i32, %arg1: i32) -> (i32, i32) {
    %c0_i32 = arith.constant 0 : i32
    %c0_i32_0 = arith.constant 0 : i32
    %c0_i32_1 = arith.constant 0 : i32
    return %c0_i32, %c0_i32_0 : i32, i32
  }
  func.func @transform_10(%arg0: i32, %arg1: i32) -> (i32, i32) {
    %c0_i32 = arith.constant 0 : i32
    %c0_i32_0 = arith.constant 0 : i32
    %c0_i32_1 = arith.constant 0 : i32
    return %c0_i32, %c0_i32_0 : i32, i32
  }
  func.func @transform_11(%arg0: i32, %arg1: i32) -> (i32, i32) {
    %c0_i32 = arith.constant 0 : i32
    %c0_i32_0 = arith.constant 0 : i32
    %c0_i32_1 = arith.constant 0 : i32
    return %c0_i32, %c0_i32_0 : i32, i32
  }
  func.func @transform_12(%arg0: i32, %arg1: i32) -> (i32, i32) {
    %c0_i32 = arith.constant 0 : i32
    %c0_i32_0 = arith.constant 0 : i32
    %c0_i32_1 = arith.constant 0 : i32
    return %c0_i32, %c0_i32_0 : i32, i32
  }
  func.func @transform_13(%arg0: i32, %arg1: i32) -> (i32, i32) {
    %c0_i32 = arith.constant 0 : i32
    %c0_i32_0 = arith.constant 0 : i32
    %c0_i32_1 = arith.constant 0 : i32
    return %c0_i32, %c0_i32_0 : i32, i32
  }
  func.func @transform_14(%arg0: i32, %arg1: i32) -> (i32, i32) {
    %c0_i32 = arith.constant 0 : i32
    %c0_i32_0 = arith.constant 0 : i32
    %c0_i32_1 = arith.constant 0 : i32
    return %c0_i32, %c0_i32_0 : i32, i32
  }
  func.func @transform_15(%arg0: i32, %arg1: i32) -> (i32, i32) {
    %c0_i32 = arith.constant 0 : i32
    %c0_i32_0 = arith.constant 0 : i32
    %c0_i32_1 = arith.constant 0 : i32
    return %c0_i32, %c0_i32_0 : i32, i32
  }
  func.func @transform_16(%arg0: i32, %arg1: i32) -> (i32, i32) {
    %c0_i32 = arith.constant 0 : i32
    %c0_i32_0 = arith.constant 0 : i32
    %c0_i32_1 = arith.constant 0 : i32
    return %c0_i32, %c0_i32_0 : i32, i32
  }
  func.func @transform_17(%arg0: i32, %arg1: i32) -> (i32, i32) {
    %c0_i32 = arith.constant 0 : i32
    %c0_i32_0 = arith.constant 0 : i32
    %c0_i32_1 = arith.constant 0 : i32
    return %c0_i32, %c0_i32_0 : i32, i32
  }
  func.func @transform_18(%arg0: i32, %arg1: i32) -> (i32, i32) {
    %c0_i32 = arith.constant 0 : i32
    %c0_i32_0 = arith.constant 0 : i32
    %c0_i32_1 = arith.constant 0 : i32
    return %c0_i32, %c0_i32_0 : i32, i32
  }
  func.func @transform_19(%arg0: i32, %arg1: i32) -> (i32, i32) {
    %c0_i32 = arith.constant 0 : i32
    %c0_i32_0 = arith.constant 0 : i32
    %c0_i32_1 = arith.constant 0 : i32
    return %c0_i32, %c0_i32_0 : i32, i32
  }
  func.func @transform_20(%arg0: i32, %arg1: i32) -> (i32, i32) {
    %c0_i32 = arith.constant 0 : i32
    %c0_i32_0 = arith.constant 0 : i32
    %c0_i32_1 = arith.constant 0 : i32
    return %c0_i32, %c0_i32_0 : i32, i32
  }
  func.func @transform_21(%arg0: i32, %arg1: i32) -> (i32, i32) {
    %c0_i32 = arith.constant 0 : i32
    %c0_i32_0 = arith.constant 0 : i32
    %c0_i32_1 = arith.constant 0 : i32
    return %c0_i32, %c0_i32_0 : i32, i32
  }
  func.func @transform_22(%arg0: i32, %arg1: i32) -> (i32, i32) {
    %c0_i32 = arith.constant 0 : i32
    %c0_i32_0 = arith.constant 0 : i32
    %c0_i32_1 = arith.constant 0 : i32
    return %c0_i32, %c0_i32_0 : i32, i32
  }
  func.func @transform_23(%arg0: i32, %arg1: i32) -> (i32, i32) {
    %c0_i32 = arith.constant 0 : i32
    %c0_i32_0 = arith.constant 0 : i32
    %c0_i32_1 = arith.constant 0 : i32
    return %c0_i32, %c0_i32_0 : i32, i32
  }
  func.func @transform_24(%arg0: i32, %arg1: i32) -> (i32, i32) {
    %c0_i32 = arith.constant 0 : i32
    %c0_i32_0 = arith.constant 0 : i32
    %c0_i32_1 = arith.constant 0 : i32
    return %c0_i32, %c0_i32_0 : i32, i32
  }
  func.func @transform_25(%arg0: i32, %arg1: i32) -> (i32, i32, i32) {
    %c0_i32 = arith.constant 0 : i32
    %c0_i32_0 = arith.constant 0 : i32
    return %arg0, %arg1, %c0_i32 : i32, i32, i32
  }
}

</mosaic_0001>

<llo_original>
// kernel: tpu_custom_call.1
$region0: #{tpu_custom_call.1}
  #allocation0 [shape = 'u32[]', space=smem, size = 0x4, offset = 0x4, fixed_abs, tag = 'smem constant byte address 0x4 - core index']
  #allocation1 [shape = 'u32[144,128]{1,0:T(1,128)}', space=vmem, size = 0x12000, scoped, tag = 'internal scratch']
  #allocation2 [shape = 'bf16[4,8,8]{2,1,0:T(8,128)(2,1)}', space=vmem, size = 0x2000, scoped, tag = 'scratch operand']
  #allocation3 [shape = 'bf16[4,8,8]{2,1,0:T(8,128)(2,1)}', space=vmem, size = 0x2000, scoped, tag = 'scratch operand']
  %s0 = inlined_call_operand.vmem [shape: f32[2,8,32], index: 0, kind: input, shape index: {}]
  %s1 = inlined_call_operand.vmem [shape: bf16[4,8,8], index: 1, kind: input, shape index: {}]
  %s2 = inlined_call_operand.vmem [shape: bf16[32,32], index: 2, kind: input, shape index: {}]
  %s3 = inlined_call_operand.vmem [shape: f32[1,32], index: 3, kind: input, shape index: {}]
  %s4 = inlined_call_operand.vmem [shape: bf16[32,32], index: 4, kind: input, shape index: {}]
  %s5 = inlined_call_operand.vmem [shape: f32[32,1], index: 5, kind: input, shape index: {}]
  %s6 = inlined_call_operand.vmem [shape: bf16[32,32], index: 6, kind: input, shape index: {}]
  %s7 = inlined_call_operand.vmem [shape: f32[32,1], index: 7, kind: input, shape index: {}]
  %s8 = inlined_call_operand.vmem [shape: bf16[4,8,32], index: 8, kind: input, shape index: {}]
  %s9 = inlined_call_operand.vmem [shape: f32[1,32], index: 9, kind: input, shape index: {}]
  %s10 = inlined_call_operand.vmem [shape: bf16[32,8], index: 10, kind: input, shape index: {}]
  %s11 = inlined_call_operand.vmem [shape: f32[1,8], index: 11, kind: input, shape index: {}]
  %s12 = inlined_call_operand.vmem [shape: f32[1,4], index: 12, kind: input, shape index: {}]
  %s13 = inlined_call_operand.vmem [shape: f32[1,32], index: 13, kind: input, shape index: {}]
  %s14 = inlined_call_operand.vmem [shape: f32[1,32], index: 14, kind: input, shape index: {}]
  %s15 = inlined_call_operand.vmem [shape: bf16[32,64], index: 15, kind: input, shape index: {}]
  %s16 = inlined_call_operand.vmem [shape: f32[1,64], index: 16, kind: input, shape index: {}]
  %s17 = inlined_call_operand.vmem [shape: bf16[64,32], index: 17, kind: input, shape index: {}]
  %s18 = inlined_call_operand.vmem [shape: f32[1,32], index: 18, kind: input, shape index: {}]
  %s19 = inlined_call_operand.vmem [shape: bf16[32,16], index: 19, kind: input, shape index: {}]
  %s20 = inlined_call_operand.vmem [shape: f32[1,16], index: 20, kind: input, shape index: {}]
  %s21 = inlined_call_operand.vmem [shape: bf16[16,32], index: 21, kind: input, shape index: {}]
  %s22 = inlined_call_operand.vmem [shape: f32[1,32], index: 22, kind: input, shape index: {}]
  %s23 = inlined_call_operand.vmem [shape: f32[1,32], index: 23, kind: input, shape index: {}]
  %s24 = inlined_call_operand.vmem [shape: f32[1,32], index: 24, kind: input, shape index: {}]
  %s25 = inlined_call_operand.hbm [shape: f32[2,8,32], index: 25, kind: output, shape index: {}]
  %s26 = sld [smem:[#allocation0]]
  $region137: #{tpu_custom_call.1} parent=0
    _
  %s28 = ssub.s32 1, %s26
  %s29 = scalar_select 0, %s28, %s26
  $region1: #{tpu_custom_call.1} parent=0
    #allocation4 [shape = 'u8[8192]{0}', space=vmem, size = 0x2000, scoped, tag = 'output window, operand 0']
    #allocation5 [shape = 's32[2]{0}', space=sflag, size = 0x8, scoped, tag = 'scoped memory for tpu_custom_call.1']
    %30 = vsyncpa [#allocation5], 0
    %s31 = scalar_lea.sflag [#allocation5], 1
    %32 = vsyncpa %s31, 0
    loop: start=0, step=1, limit=4
    $region2: #{tpu_custom_call.1} parent=1 // loop_pre_header
      _
    $region3: #{tpu_custom_call.1} parent=1 // loop_header
      %s34 = sphi 0, %s38
      %p35 = scmp.ge.s32.totalorder %s34, 4
      %s41 = sphi 0, %s53
      %s42 = sphi 0, %s49
      %s43 = sphi 0, %s41
      %s44 = sphi 0, %s42
      %s45 = sphi 0, %s43
      %s46 = sphi 0, %s44
      %s56 = sphi 0, %s58
      %s59 = sphi 0, %s56
      %s60 = sphi 0, %s59
      %s76 = sphi 0, %s60
      %s80 = sphi 0, %s80
      %s82 = sphi 0, %s80
      %s83 = sphi 0, %s82
      %s97 = sphi 0, %s83
      %s101 = sphi 0, %s101
      %s103 = sphi 0, %s101
      %s104 = sphi 0, %s103
      %s118 = sphi 0, %s104
      %s122 = sphi 0, %s122
      %s124 = sphi 0, %s122
      %s125 = sphi 0, %s124
      %s139 = sphi 0, %s125
      %s143 = sphi 0, %s143
      %s145 = sphi 0, %s143
      %s146 = sphi 0, %s145
      %s160 = sphi 0, %s146
      %s164 = sphi 0, %s164
      %s166 = sphi 0, %s164
      %s167 = sphi 0, %s166
      %s181 = sphi 0, %s167
      %s185 = sphi 0, %s185
      %s187 = sphi 0, %s185
      %s188 = sphi 0, %s187
      %s202 = sphi 0, %s188
      %s206 = sphi 0, %s206
      %s208 = sphi 0, %s206
      %s209 = sphi 0, %s208
      %s223 = sphi 0, %s209
      %s227 = sphi 0, %s227
      %s229 = sphi 0, %s227
      %s230 = sphi 0, %s229
      %s244 = sphi 0, %s230
      %s248 = sphi 0, %s248
      %s250 = sphi 0, %s248
      %s251 = sphi 0, %s250
      %s265 = sphi 0, %s251
      %s269 = sphi 0, %s269
      %s271 = sphi 0, %s269
      %s272 = sphi 0, %s271
      %s286 = sphi 0, %s272
      %s290 = sphi 0, %s290
      %s292 = sphi 0, %s290
      %s293 = sphi 0, %s292
      %s307 = sphi 0, %s293
      %s311 = sphi 0, %s311
      %s313 = sphi 0, %s311
      %s314 = sphi 0, %s313
      %s328 = sphi 0, %s314
      %s332 = sphi 0, %s332
      %s334 = sphi 0, %s332
      %s335 = sphi 0, %s334
      %s349 = sphi 0, %s335
      %s353 = sphi 0, %s353
      %s355 = sphi 0, %s353
      %s356 = sphi 0, %s355
      %s370 = sphi 0, %s356
      %s374 = sphi 0, %s374
      %s376 = sphi 0, %s374
      %s377 = sphi 0, %s376
      %s391 = sphi 0, %s377
      %s395 = sphi 0, %s395
      %s397 = sphi 0, %s395
      %s398 = sphi 0, %s397
      %s412 = sphi 0, %s398
      %s416 = sphi 0, %s416
      %s418 = sphi 0, %s416
      %s419 = sphi 0, %s418
      %s433 = sphi 0, %s419
      %s437 = sphi 0, %s437
      %s439 = sphi 0, %s437
      %s440 = sphi 0, %s439
      %s454 = sphi 0, %s440
      %s458 = sphi 0, %s458
      %s460 = sphi 0, %s458
      %s461 = sphi 0, %s460
      %s475 = sphi 0, %s461
      %s479 = sphi 0, %s479
      %s481 = sphi 0, %s479
      %s482 = sphi 0, %s481
      %s496 = sphi 0, %s482
      %s500 = sphi 0, %s500
      %s502 = sphi 0, %s500
      %s503 = sphi 0, %s502
      %s517 = sphi 0, %s503
      %s521 = sphi 0, %s521
      %s523 = sphi 0, %s521
      %s524 = sphi 0, %s523
      %s538 = sphi 0, %s524
      %s542 = sphi 0, %s542
      %s544 = sphi 0, %s542
      %s545 = sphi 0, %s544
      %s559 = sphi 0, %s545
      %s563 = sphi 0, %s563
      %s565 = sphi 0, %s563
      %s566 = sphi 0, %s565
      %s580 = sphi 0, %s566
      %s588 = sphi 0, %s590
      %s591 = sphi 0, %s588
      %s592 = sphi 0, %s591
      %s608 = sphi 0, %s592
    $region4: #{tpu_custom_call.1} parent=1 // loop_header_branch
      %37 = sbr.rel (%p35) target = $region8
    $region5: #{tpu_custom_call.1} parent=1 // loop_body
      %s39 = ssub.s32 %s34, 1
      %s40 = ssub.s32 %s34, 2
      %s47 = sadd.s32 1, %s42
      %p48 = scmp.ge.s32.totalorder %s47, 1
      %s49 = scalar_select %p48, 0, %s47
      %s50 = sadd.s32 1, %s41
      %s51 = scalar_select %p48, %s50, %s41
      %p52 = scmp.ge.s32.totalorder %s51, 2
      %s53 = scalar_select %p52, 0, %s51
      %s54 = ssub.s32 %s41, %s53
      %p55 = scmp.eq.s32.totalorder %s54, 0
      %s57 = sadd.s32 %s56, 1
      %s58 = scalar_select %p55, %s56, %s57
      %p61 = pneg %p55
      %p62 = scmp.eq.s32.totalorder %s34, 1
      %p63 = por %p61, %p62
      %p64 = scmp.ne.s32.totalorder %s56, %s59
      %p65 = scmp.eq.s32.totalorder %s34, 0
      %p66 = por %p64, %p65
      %p67 = scmp.ne.s32.totalorder %s56, %s59
      %p68 = scmp.eq.s32.totalorder %s39, 1
      %p69 = por %p67, %p68
      %p70 = scmp.ne.s32.totalorder %s59, %s60
      %p71 = scmp.eq.s32.totalorder %s39, 0
      %p72 = por %p70, %p71
      %p73 = scmp.ne.s32.totalorder %s59, %s60
      %p74 = scmp.eq.s32.totalorder %s40, 1
      %p75 = por %p73, %p74
      %p77 = scmp.ne.s32.totalorder %s60, %s76
      %p78 = scmp.eq.s32.totalorder %s40, 0
      %p79 = por %p77, %p78
      %s81 = sadd.s32 %s80, 1
      %p84 = scmp.eq.s32.totalorder %s34, 1
      %p85 = scmp.ne.s32.totalorder %s80, %s82
      %p86 = scmp.eq.s32.totalorder %s34, 0
      %p87 = por %p85, %p86
      %p88 = scmp.ne.s32.totalorder %s80, %s82
      %p89 = scmp.eq.s32.totalorder %s39, 1
      %p90 = por %p88, %p89
      %p91 = scmp.ne.s32.totalorder %s82, %s83
      %p92 = scmp.eq.s32.totalorder %s39, 0
      %p93 = por %p91, %p92
      %p94 = scmp.ne.s32.totalorder %s82, %s83
      %p95 = scmp.eq.s32.totalorder %s40, 1
      %p96 = por %p94, %p95
      %p98 = scmp.ne.s32.totalorder %s83, %s97
      %p99 = scmp.eq.s32.totalorder %s40, 0
      %p100 = por %p98, %p99
      %s102 = sadd.s32 %s101, 1
      %p105 = scmp.eq.s32.totalorder %s34, 1
      %p106 = scmp.ne.s32.totalorder %s101, %s103
      %p107 = scmp.eq.s32.totalorder %s34, 0
      %p108 = por %p106, %p107
      %p109 = scmp.ne.s32.totalorder %s101, %s103
      %p110 = scmp.eq.s32.totalorder %s39, 1
      %p111 = por %p109, %p110
      %p112 = scmp.ne.s32.totalorder %s103, %s104
      %p113 = scmp.eq.s32.totalorder %s39, 0
      %p114 = por %p112, %p113
      %p115 = scmp.ne.s32.totalorder %s103, %s104
      %p116 = scmp.eq.s32.totalorder %s40, 1
      %p117 = por %p115, %p116
      %p119 = scmp.ne.s32.totalorder %s104, %s118
      %p120 = scmp.eq.s32.totalorder %s40, 0
      %p121 = por %p119, %p120
      %s123 = sadd.s32 %s122, 1
      %p126 = scmp.eq.s32.totalorder %s34, 1
      %p127 = scmp.ne.s32.totalorder %s122, %s124
      %p128 = scmp.eq.s32.totalorder %s34, 0
      %p129 = por %p127, %p128
      %p130 = scmp.ne.s32.totalorder %s122, %s124
      %p131 = scmp.eq.s32.totalorder %s39, 1
      %p132 = por %p130, %p131
      %p133 = scmp.ne.s32.totalorder %s124, %s125
      %p134 = scmp.eq.s32.totalorder %s39, 0
      %p135 = por %p133, %p134
      %p136 = scmp.ne.s32.totalorder %s124, %s125
      %p137 = scmp.eq.s32.totalorder %s40, 1
      %p138 = por %p136, %p137
      %p140 = scmp.ne.s32.totalorder %s125, %s139
      %p141 = scmp.eq.s32.totalorder %s40, 0
      %p142 = por %p140, %p141
      %s144 = sadd.s32 %s143, 1
      %p147 = scmp.eq.s32.totalorder %s34, 1
      %p148 = scmp.ne.s32.totalorder %s143, %s145
      %p149 = scmp.eq.s32.totalorder %s34, 0
      %p150 = por %p148, %p149
      %p151 = scmp.ne.s32.totalorder %s143, %s145
      %p152 = scmp.eq.s32.totalorder %s39, 1
      %p153 = por %p151, %p152
      %p154 = scmp.ne.s32.totalorder %s145, %s146
      %p155 = scmp.eq.s32.totalorder %s39, 0
      %p156 = por %p154, %p155
      %p157 = scmp.ne.s32.totalorder %s145, %s146
      %p158 = scmp.eq.s32.totalorder %s40, 1
      %p159 = por %p157, %p158
      %p161 = scmp.ne.s32.totalorder %s146, %s160
      %p162 = scmp.eq.s32.totalorder %s40, 0
      %p163 = por %p161, %p162
      %s165 = sadd.s32 %s164, 1
      %p168 = scmp.eq.s32.totalorder %s34, 1
      %p169 = scmp.ne.s32.totalorder %s164, %s166
      %p170 = scmp.eq.s32.totalorder %s34, 0
      %p171 = por %p169, %p170
      %p172 = scmp.ne.s32.totalorder %s164, %s166
      %p173 = scmp.eq.s32.totalorder %s39, 1
      %p174 = por %p172, %p173
      %p175 = scmp.ne.s32.totalorder %s166, %s167
      %p176 = scmp.eq.s32.totalorder %s39, 0
      %p177 = por %p175, %p176
      %p178 = scmp.ne.s32.totalorder %s166, %s167
      %p179 = scmp.eq.s32.totalorder %s40, 1
      %p180 = por %p178, %p179
      %p182 = scmp.ne.s32.totalorder %s167, %s181
      %p183 = scmp.eq.s32.totalorder %s40, 0
      %p184 = por %p182, %p183
      %s186 = sadd.s32 %s185, 1
      %p189 = scmp.eq.s32.totalorder %s34, 1
      %p190 = scmp.ne.s32.totalorder %s185, %s187
      %p191 = scmp.eq.s32.totalorder %s34, 0
      %p192 = por %p190, %p191
      %p193 = scmp.ne.s32.totalorder %s185, %s187
      %p194 = scmp.eq.s32.totalorder %s39, 1
      %p195 = por %p193, %p194
      %p196 = scmp.ne.s32.totalorder %s187, %s188
      %p197 = scmp.eq.s32.totalorder %s39, 0
      %p198 = por %p196, %p197
      %p199 = scmp.ne.s32.totalorder %s187, %s188
      %p200 = scmp.eq.s32.totalorder %s40, 1
      %p201 = por %p199, %p200
      %p203 = scmp.ne.s32.totalorder %s188, %s202
      %p204 = scmp.eq.s32.totalorder %s40, 0
      %p205 = por %p203, %p204
      %s207 = sadd.s32 %s206, 1
      %p210 = scmp.eq.s32.totalorder %s34, 1
      %p211 = scmp.ne.s32.totalorder %s206, %s208
      %p212 = scmp.eq.s32.totalorder %s34, 0
      %p213 = por %p211, %p212
      %p214 = scmp.ne.s32.totalorder %s206, %s208
      %p215 = scmp.eq.s32.totalorder %s39, 1
      %p216 = por %p214, %p215
      %p217 = scmp.ne.s32.totalorder %s208, %s209
      %p218 = scmp.eq.s32.totalorder %s39, 0
      %p219 = por %p217, %p218
      %p220 = scmp.ne.s32.totalorder %s208, %s209
      %p221 = scmp.eq.s32.totalorder %s40, 1
      %p222 = por %p220, %p221
      %p224 = scmp.ne.s32.totalorder %s209, %s223
      %p225 = scmp.eq.s32.totalorder %s40, 0
      %p226 = por %p224, %p225
      %s228 = sadd.s32 %s227, 1
      %p231 = scmp.eq.s32.totalorder %s34, 1
      %p232 = scmp.ne.s32.totalorder %s227, %s229
      %p233 = scmp.eq.s32.totalorder %s34, 0
      %p234 = por %p232, %p233
      %p235 = scmp.ne.s32.totalorder %s227, %s229
      %p236 = scmp.eq.s32.totalorder %s39, 1
      %p237 = por %p235, %p236
      %p238 = scmp.ne.s32.totalorder %s229, %s230
      %p239 = scmp.eq.s32.totalorder %s39, 0
      %p240 = por %p238, %p239
      %p241 = scmp.ne.s32.totalorder %s229, %s230
      %p242 = scmp.eq.s32.totalorder %s40, 1
      %p243 = por %p241, %p242
      %p245 = scmp.ne.s32.totalorder %s230, %s244
      %p246 = scmp.eq.s32.totalorder %s40, 0
      %p247 = por %p245, %p246
      %s249 = sadd.s32 %s248, 1
      %p252 = scmp.eq.s32.totalorder %s34, 1
      %p253 = scmp.ne.s32.totalorder %s248, %s250
      %p254 = scmp.eq.s32.totalorder %s34, 0
      %p255 = por %p253, %p254
      %p256 = scmp.ne.s32.totalorder %s248, %s250
      %p257 = scmp.eq.s32.totalorder %s39, 1
      %p258 = por %p256, %p257
      %p259 = scmp.ne.s32.totalorder %s250, %s251
      %p260 = scmp.eq.s32.totalorder %s39, 0
      %p261 = por %p259, %p260
      %p262 = scmp.ne.s32.totalorder %s250, %s251
      %p263 = scmp.eq.s32.totalorder %s40, 1
      %p264 = por %p262, %p263
      %p266 = scmp.ne.s32.totalorder %s251, %s265
      %p267 = scmp.eq.s32.totalorder %s40, 0
      %p268 = por %p266, %p267
      %s270 = sadd.s32 %s269, 1
      %p273 = scmp.eq.s32.totalorder %s34, 1
      %p274 = scmp.ne.s32.totalorder %s269, %s271
      %p275 = scmp.eq.s32.totalorder %s34, 0
      %p276 = por %p274, %p275
      %p277 = scmp.ne.s32.totalorder %s269, %s271
      %p278 = scmp.eq.s32.totalorder %s39, 1
      %p279 = por %p277, %p278
      %p280 = scmp.ne.s32.totalorder %s271, %s272
      %p281 = scmp.eq.s32.totalorder %s39, 0
      %p282 = por %p280, %p281
      %p283 = scmp.ne.s32.totalorder %s271, %s272
      %p284 = scmp.eq.s32.totalorder %s40, 1
      %p285 = por %p283, %p284
      %p287 = scmp.ne.s32.totalorder %s272, %s286
      %p288 = scmp.eq.s32.totalorder %s40, 0
      %p289 = por %p287, %p288
      %s291 = sadd.s32 %s290, 1
      %p294 = scmp.eq.s32.totalorder %s34, 1
      %p295 = scmp.ne.s32.totalorder %s290, %s292
      %p296 = scmp.eq.s32.totalorder %s34, 0
      %p297 = por %p295, %p296
      %p298 = scmp.ne.s32.totalorder %s290, %s292
      %p299 = scmp.eq.s32.totalorder %s39, 1
      %p300 = por %p298, %p299
      %p301 = scmp.ne.s32.totalorder %s292, %s293
      %p302 = scmp.eq.s32.totalorder %s39, 0
      %p303 = por %p301, %p302
      %p304 = scmp.ne.s32.totalorder %s292, %s293
      %p305 = scmp.eq.s32.totalorder %s40, 1
      %p306 = por %p304, %p305
      %p308 = scmp.ne.s32.totalorder %s293, %s307
      %p309 = scmp.eq.s32.totalorder %s40, 0
      %p310 = por %p308, %p309
      %s312 = sadd.s32 %s311, 1
      %p315 = scmp.eq.s32.totalorder %s34, 1
      %p316 = scmp.ne.s32.totalorder %s311, %s313
      %p317 = scmp.eq.s32.totalorder %s34, 0
      %p318 = por %p316, %p317
      %p319 = scmp.ne.s32.totalorder %s311, %s313
      %p320 = scmp.eq.s32.totalorder %s39, 1
      %p321 = por %p319, %p320
      %p322 = scmp.ne.s32.totalorder %s313, %s314
      %p323 = scmp.eq.s32.totalorder %s39, 0
      %p324 = por %p322, %p323
      %p325 = scmp.ne.s32.totalorder %s313, %s314
      %p326 = scmp.eq.s32.totalorder %s40, 1
      %p327 = por %p325, %p326
      %p329 = scmp.ne.s32.totalorder %s314, %s328
      %p330 = scmp.eq.s32.totalorder %s40, 0
      %p331 = por %p329, %p330
      %s333 = sadd.s32 %s332, 1
      %p336 = scmp.eq.s32.totalorder %s34, 1
      %p337 = scmp.ne.s32.totalorder %s332, %s334
      %p338 = scmp.eq.s32.totalorder %s34, 0
      %p339 = por %p337, %p338
      %p340 = scmp.ne.s32.totalorder %s332, %s334
      %p341 = scmp.eq.s32.totalorder %s39, 1
      %p342 = por %p340, %p341
      %p343 = scmp.ne.s32.totalorder %s334, %s335
      %p344 = scmp.eq.s32.totalorder %s39, 0
      %p345 = por %p343, %p344
      %p346 = scmp.ne.s32.totalorder %s334, %s335
      %p347 = scmp.eq.s32.totalorder %s40, 1
      %p348 = por %p346, %p347
      %p350 = scmp.ne.s32.totalorder %s335, %s349
      %p351 = scmp.eq.s32.totalorder %s40, 0
      %p352 = por %p350, %p351
      %s354 = sadd.s32 %s353, 1
      %p357 = scmp.eq.s32.totalorder %s34, 1
      %p358 = scmp.ne.s32.totalorder %s353, %s355
      %p359 = scmp.eq.s32.totalorder %s34, 0
      %p360 = por %p358, %p359
      %p361 = scmp.ne.s32.totalorder %s353, %s355
      %p362 = scmp.eq.s32.totalorder %s39, 1
      %p363 = por %p361, %p362
      %p364 = scmp.ne.s32.totalorder %s355, %s356
      %p365 = scmp.eq.s32.totalorder %s39, 0
      %p366 = por %p364, %p365
      %p367 = scmp.ne.s32.totalorder %s355, %s356
      %p368 = scmp.eq.s32.totalorder %s40, 1
      %p369 = por %p367, %p368
      %p371 = scmp.ne.s32.totalorder %s356, %s370
      %p372 = scmp.eq.s32.totalorder %s40, 0
      %p373 = por %p371, %p372
      %s375 = sadd.s32 %s374, 1
      %p378 = scmp.eq.s32.totalorder %s34, 1
      %p379 = scmp.ne.s32.totalorder %s374, %s376
      %p380 = scmp.eq.s32.totalorder %s34, 0
      %p381 = por %p379, %p380
      %p382 = scmp.ne.s32.totalorder %s374, %s376
      %p383 = scmp.eq.s32.totalorder %s39, 1
      %p384 = por %p382, %p383
      %p385 = scmp.ne.s32.totalorder %s376, %s377
      %p386 = scmp.eq.s32.totalorder %s39, 0
      %p387 = por %p385, %p386
      %p388 = scmp.ne.s32.totalorder %s376, %s377
      %p389 = scmp.eq.s32.totalorder %s40, 1
      %p390 = por %p388, %p389
      %p392 = scmp.ne.s32.totalorder %s377, %s391
      %p393 = scmp.eq.s32.totalorder %s40, 0
      %p394 = por %p392, %p393
      %s396 = sadd.s32 %s395, 1
      %p399 = scmp.eq.s32.totalorder %s34, 1
      %p400 = scmp.ne.s32.totalorder %s395, %s397
      %p401 = scmp.eq.s32.totalorder %s34, 0
      %p402 = por %p400, %p401
      %p403 = scmp.ne.s32.totalorder %s395, %s397
      %p404 = scmp.eq.s32.totalorder %s39, 1
      %p405 = por %p403, %p404
      %p406 = scmp.ne.s32.totalorder %s397, %s398
      %p407 = scmp.eq.s32.totalorder %s39, 0
      %p408 = por %p406, %p407
      %p409 = scmp.ne.s32.totalorder %s397, %s398
      %p410 = scmp.eq.s32.totalorder %s40, 1
      %p411 = por %p409, %p410
      %p413 = scmp.ne.s32.totalorder %s398, %s412
      %p414 = scmp.eq.s32.totalorder %s40, 0
      %p415 = por %p413, %p414
      %s417 = sadd.s32 %s416, 1
      %p420 = scmp.eq.s32.totalorder %s34, 1
      %p421 = scmp.ne.s32.totalorder %s416, %s418
      %p422 = scmp.eq.s32.totalorder %s34, 0
      %p423 = por %p421, %p422
      %p424 = scmp.ne.s32.totalorder %s416, %s418
      %p425 = scmp.eq.s32.totalorder %s39, 1
      %p426 = por %p424, %p425
      %p427 = scmp.ne.s32.totalorder %s418, %s419
      %p428 = scmp.eq.s32.totalorder %s39, 0
      %p429 = por %p427, %p428
      %p430 = scmp.ne.s32.totalorder %s418, %s419
      %p431 = scmp.eq.s32.totalorder %s40, 1
      %p432 = por %p430, %p431
      %p434 = scmp.ne.s32.totalorder %s419, %s433
      %p435 = scmp.eq.s32.totalorder %s40, 0
      %p436 = por %p434, %p435
      %s438 = sadd.s32 %s437, 1
      %p441 = scmp.eq.s32.totalorder %s34, 1
      %p442 = scmp.ne.s32.totalorder %s437, %s439
      %p443 = scmp.eq.s32.totalorder %s34, 0
      %p444 = por %p442, %p443
      %p445 = scmp.ne.s32.totalorder %s437, %s439
      %p446 = scmp.eq.s32.totalorder %s39, 1
      %p447 = por %p445, %p446
      %p448 = scmp.ne.s32.totalorder %s439, %s440
      %p449 = scmp.eq.s32.totalorder %s39, 0
      %p450 = por %p448, %p449
      %p451 = scmp.ne.s32.totalorder %s439, %s440
      %p452 = scmp.eq.s32.totalorder %s40, 1
      %p453 = por %p451, %p452
      %p455 = scmp.ne.s32.totalorder %s440, %s454
      %p456 = scmp.eq.s32.totalorder %s40, 0
      %p457 = por %p455, %p456
      %s459 = sadd.s32 %s458, 1
      %p462 = scmp.eq.s32.totalorder %s34, 1
      %p463 = scmp.ne.s32.totalorder %s458, %s460
      %p464 = scmp.eq.s32.totalorder %s34, 0
      %p465 = por %p463, %p464
      %p466 = scmp.ne.s32.totalorder %s458, %s460
      %p467 = scmp.eq.s32.totalorder %s39, 1
      %p468 = por %p466, %p467
      %p469 = scmp.ne.s32.totalorder %s460, %s461
      %p470 = scmp.eq.s32.totalorder %s39, 0
      %p471 = por %p469, %p470
      %p472 = scmp.ne.s32.totalorder %s460, %s461
      %p473 = scmp.eq.s32.totalorder %s40, 1
      %p474 = por %p472, %p473
      %p476 = scmp.ne.s32.totalorder %s461, %s475
      %p477 = scmp.eq.s32.totalorder %s40, 0
      %p478 = por %p476, %p477
      %s480 = sadd.s32 %s479, 1
      %p483 = scmp.eq.s32.totalorder %s34, 1
      %p484 = scmp.ne.s32.totalorder %s479, %s481
      %p485 = scmp.eq.s32.totalorder %s34, 0
      %p486 = por %p484, %p485
      %p487 = scmp.ne.s32.totalorder %s479, %s481
      %p488 = scmp.eq.s32.totalorder %s39, 1
      %p489 = por %p487, %p488
      %p490 = scmp.ne.s32.totalorder %s481, %s482
      %p491 = scmp.eq.s32.totalorder %s39, 0
      %p492 = por %p490, %p491
      %p493 = scmp.ne.s32.totalorder %s481, %s482
      %p494 = scmp.eq.s32.totalorder %s40, 1
      %p495 = por %p493, %p494
      %p497 = scmp.ne.s32.totalorder %s482, %s496
      %p498 = scmp.eq.s32.totalorder %s40, 0
      %p499 = por %p497, %p498
      %s501 = sadd.s32 %s500, 1
      %p504 = scmp.eq.s32.totalorder %s34, 1
      %p505 = scmp.ne.s32.totalorder %s500, %s502
      %p506 = scmp.eq.s32.totalorder %s34, 0
      %p507 = por %p505, %p506
      %p508 = scmp.ne.s32.totalorder %s500, %s502
      %p509 = scmp.eq.s32.totalorder %s39, 1
      %p510 = por %p508, %p509
      %p511 = scmp.ne.s32.totalorder %s502, %s503
      %p512 = scmp.eq.s32.totalorder %s39, 0
      %p513 = por %p511, %p512
      %p514 = scmp.ne.s32.totalorder %s502, %s503
      %p515 = scmp.eq.s32.totalorder %s40, 1
      %p516 = por %p514, %p515
      %p518 = scmp.ne.s32.totalorder %s503, %s517
      %p519 = scmp.eq.s32.totalorder %s40, 0
      %p520 = por %p518, %p519
      %s522 = sadd.s32 %s521, 1
      %p525 = scmp.eq.s32.totalorder %s34, 1
      %p526 = scmp.ne.s32.totalorder %s521, %s523
      %p527 = scmp.eq.s32.totalorder %s34, 0
      %p528 = por %p526, %p527
      %p529 = scmp.ne.s32.totalorder %s521, %s523
      %p530 = scmp.eq.s32.totalorder %s39, 1
      %p531 = por %p529, %p530
      %p532 = scmp.ne.s32.totalorder %s523, %s524
      %p533 = scmp.eq.s32.totalorder %s39, 0
      %p534 = por %p532, %p533
      %p535 = scmp.ne.s32.totalorder %s523, %s524
      %p536 = scmp.eq.s32.totalorder %s40, 1
      %p537 = por %p535, %p536
      %p539 = scmp.ne.s32.totalorder %s524, %s538
      %p540 = scmp.eq.s32.totalorder %s40, 0
      %p541 = por %p539, %p540
      %s543 = sadd.s32 %s542, 1
      %p546 = scmp.eq.s32.totalorder %s34, 1
      %p547 = scmp.ne.s32.totalorder %s542, %s544
      %p548 = scmp.eq.s32.totalorder %s34, 0
      %p549 = por %p547, %p548
      %p550 = scmp.ne.s32.totalorder %s542, %s544
      %p551 = scmp.eq.s32.totalorder %s39, 1
      %p552 = por %p550, %p551
      %p553 = scmp.ne.s32.totalorder %s544, %s545
      %p554 = scmp.eq.s32.totalorder %s39, 0
      %p555 = por %p553, %p554
      %p556 = scmp.ne.s32.totalorder %s544, %s545
      %p557 = scmp.eq.s32.totalorder %s40, 1
      %p558 = por %p556, %p557
      %p560 = scmp.ne.s32.totalorder %s545, %s559
      %p561 = scmp.eq.s32.totalorder %s40, 0
      %p562 = por %p560, %p561
      %s564 = sadd.s32 %s563, 1
      %p567 = scmp.eq.s32.totalorder %s34, 1
      %p568 = scmp.ne.s32.totalorder %s563, %s565
      %p569 = scmp.eq.s32.totalorder %s34, 0
      %p570 = por %p568, %p569
      %p571 = scmp.ne.s32.totalorder %s563, %s565
      %p572 = scmp.eq.s32.totalorder %s39, 1
      %p573 = por %p571, %p572
      %p574 = scmp.ne.s32.totalorder %s565, %s566
      %p575 = scmp.eq.s32.totalorder %s39, 0
      %p576 = por %p574, %p575
      %p577 = scmp.ne.s32.totalorder %s565, %s566
      %p578 = scmp.eq.s32.totalorder %s40, 1
      %p579 = por %p577, %p578
      %p581 = scmp.ne.s32.totalorder %s566, %s580
      %p582 = scmp.eq.s32.totalorder %s40, 0
      %p583 = por %p581, %p582
      %s584 = ssub.s32 %s41, %s53
      %s585 = ssub.s32 %s42, %s49
      %s586 = sor.u32 %s584, %s585
      %p587 = scmp.eq.s32.totalorder %s586, 0
      %s589 = sadd.s32 %s588, 1
      %s590 = scalar_select %p587, %s588, %s589
      %p593 = pneg %p587
      %p594 = scmp.eq.s32.totalorder %s34, 1
      %p595 = por %p593, %p594
      %p596 = scmp.ne.s32.totalorder %s588, %s591
      %p597 = scmp.eq.s32.totalorder %s34, 0
      %p598 = por %p596, %p597
      %p599 = scmp.ne.s32.totalorder %s588, %s591
      %p600 = scmp.eq.s32.totalorder %s39, 1
      %p601 = por %p599, %p600
      %p602 = scmp.ne.s32.totalorder %s591, %s592
      %p603 = scmp.eq.s32.totalorder %s39, 0
      %p604 = por %p602, %p603
      %p605 = scmp.ne.s32.totalorder %s591, %s592
      %p606 = scmp.eq.s32.totalorder %s40, 1
      %p607 = por %p605, %p606
      %p609 = scmp.ne.s32.totalorder %s592, %s608
      %p610 = scmp.eq.s32.totalorder %s40, 0
      %p611 = por %p609, %p610
      %p612 = scmp.le.s32.totalorder 1, %s34
      %p613 = scmp.lt.s32.totalorder %s34, 3
      %p614 = pnand %p612, %p613
      %p615 = pneg %p614
      // Predicated region
      $region9: #{tpu_custom_call.1} parent=5 // pred_check
        _
      $region10: #{tpu_custom_call.1} parent=5 // pred_check_branch
        %617 = sbr.rel (%p614) target = $region12
      $region11: #{tpu_custom_call.1} parent=5 // pred_region
        %s618 = ssub.s32 %s34, 1
        // Predicated region
        $region13: #{tpu_custom_call.1} parent=11 // pred_check
          %p619 = pneg %p93
        $region14: #{tpu_custom_call.1} parent=11 // pred_check_branch
          %621 = sbr.rel (%p619) target = $region16
        $region15: #{tpu_custom_call.1} parent=11 // pred_region
          _
        $region16: #{tpu_custom_call.1} parent=11 // pred_fallthru
          _
        // Predicated region
        $region17: #{tpu_custom_call.1} parent=11 // pred_check
          %p622 = pneg %p114
        $region18: #{tpu_custom_call.1} parent=11 // pred_check_branch
          %624 = sbr.rel (%p622) target = $region20
        $region19: #{tpu_custom_call.1} parent=11 // pred_region
          _
        $region20: #{tpu_custom_call.1} parent=11 // pred_fallthru
          _
        // Predicated region
        $region21: #{tpu_custom_call.1} parent=11 // pred_check
          %p625 = pneg %p135
        $region22: #{tpu_custom_call.1} parent=11 // pred_check_branch
          %627 = sbr.rel (%p625) target = $region24
        $region23: #{tpu_custom_call.1} parent=11 // pred_region
          _
        $region24: #{tpu_custom_call.1} parent=11 // pred_fallthru
          _
        // Predicated region
        $region25: #{tpu_custom_call.1} parent=11 // pred_check
          %p628 = pneg %p156
        $region26: #{tpu_custom_call.1} parent=11 // pred_check_branch
          %630 = sbr.rel (%p628) target = $region28
        $region27: #{tpu_custom_call.1} parent=11 // pred_region
          _
        $region28: #{tpu_custom_call.1} parent=11 // pred_fallthru
          _
        // Predicated region
        $region29: #{tpu_custom_call.1} parent=11 // pred_check
          %p631 = pneg %p177
        $region30: #{tpu_custom_call.1} parent=11 // pred_check_branch
          %633 = sbr.rel (%p631) target = $region32
        $region31: #{tpu_custom_call.1} parent=11 // pred_region
          _
        $region32: #{tpu_custom_call.1} parent=11 // pred_fallthru
          _
        // Predicated region
        $region33: #{tpu_custom_call.1} parent=11 // pred_check
          %p634 = pneg %p198
        $region34: #{tpu_custom_call.1} parent=11 // pred_check_branch
          %636 = sbr.rel (%p634) target = $region36
        $region35: #{tpu_custom_call.1} parent=11 // pred_region
          _
        $region36: #{tpu_custom_call.1} parent=11 // pred_fallthru
          _
        // Predicated region
        $region37: #{tpu_custom_call.1} parent=11 // pred_check
          %p637 = pneg %p219
        $region38: #{tpu_custom_call.1} parent=11 // pred_check_branch
          %639 = sbr.rel (%p637) target = $region40
        $region39: #{tpu_custom_call.1} parent=11 // pred_region
          _
        $region40: #{tpu_custom_call.1} parent=11 // pred_fallthru
          _
        // Predicated region
        $region41: #{tpu_custom_call.1} parent=11 // pred_check
          %p640 = pneg %p240
        $region42: #{tpu_custom_call.1} parent=11 // pred_check_branch
          %642 = sbr.rel (%p640) target = $region44
        $region43: #{tpu_custom_call.1} parent=11 // pred_region
          _
        $region44: #{tpu_custom_call.1} parent=11 // pred_fallthru
          _
        // Predicated region
        $region45: #{tpu_custom_call.1} parent=11 // pred_check
          %p643 = pneg %p261
        $region46: #{tpu_custom_call.1} parent=11 // pred_check_branch
          %645 = sbr.rel (%p643) target = $region48
        $region47: #{tpu_custom_call.1} parent=11 // pred_region
          _
        $region48: #{tpu_custom_call.1} parent=11 // pred_fallthru
          _
        // Predicated region
        $region49: #{tpu_custom_call.1} parent=11 // pred_check
          %p646 = pneg %p282
        $region50: #{tpu_custom_call.1} parent=11 // pred_check_branch
          %648 = sbr.rel (%p646) target = $region52
        $region51: #{tpu_custom_call.1} parent=11 // pred_region
          _
        $region52: #{tpu_custom_call.1} parent=11 // pred_fallthru
          _
        // Predicated region
        $region53: #{tpu_custom_call.1} parent=11 // pred_check
          %p649 = pneg %p303
        $region54: #{tpu_custom_call.1} parent=11 // pred_check_branch
          %651 = sbr.rel (%p649) target = $region56
        $region55: #{tpu_custom_call.1} parent=11 // pred_region
          _
        $region56: #{tpu_custom_call.1} parent=11 // pred_fallthru
          _
        // Predicated region
        $region57: #{tpu_custom_call.1} parent=11 // pred_check
          %p652 = pneg %p324
        $region58: #{tpu_custom_call.1} parent=11 // pred_check_branch
          %654 = sbr.rel (%p652) target = $region60
        $region59: #{tpu_custom_call.1} parent=11 // pred_region
          _
        $region60: #{tpu_custom_call.1} parent=11 // pred_fallthru
          _
        // Predicated region
        $region61: #{tpu_custom_call.1} parent=11 // pred_check
          %p655 = pneg %p345
        $region62: #{tpu_custom_call.1} parent=11 // pred_check_branch
          %657 = sbr.rel (%p655) target = $region64
        $region63: #{tpu_custom_call.1} parent=11 // pred_region
          _
        $region64: #{tpu_custom_call.1} parent=11 // pred_fallthru
          _
        // Predicated region
        $region65: #{tpu_custom_call.1} parent=11 // pred_check
          %p658 = pneg %p366
        $region66: #{tpu_custom_call.1} parent=11 // pred_check_branch
          %660 = sbr.rel (%p658) target = $region68
        $region67: #{tpu_custom_call.1} parent=11 // pred_region
          _
        $region68: #{tpu_custom_call.1} parent=11 // pred_fallthru
          _
        // Predicated region
        $region69: #{tpu_custom_call.1} parent=11 // pred_check
          %p661 = pneg %p387
        $region70: #{tpu_custom_call.1} parent=11 // pred_check_branch
          %663 = sbr.rel (%p661) target = $region72
        $region71: #{tpu_custom_call.1} parent=11 // pred_region
          _
        $region72: #{tpu_custom_call.1} parent=11 // pred_fallthru
          _
        // Predicated region
        $region73: #{tpu_custom_call.1} parent=11 // pred_check
          %p664 = pneg %p408
        $region74: #{tpu_custom_call.1} parent=11 // pred_check_branch
          %666 = sbr.rel (%p664) target = $region76
        $region75: #{tpu_custom_call.1} parent=11 // pred_region
          _
        $region76: #{tpu_custom_call.1} parent=11 // pred_fallthru
          _
        // Predicated region
        $region77: #{tpu_custom_call.1} parent=11 // pred_check
          %p667 = pneg %p429
        $region78: #{tpu_custom_call.1} parent=11 // pred_check_branch
          %669 = sbr.rel (%p667) target = $region80
        $region79: #{tpu_custom_call.1} parent=11 // pred_region
          _
        $region80: #{tpu_custom_call.1} parent=11 // pred_fallthru
          _
        // Predicated region
        $region81: #{tpu_custom_call.1} parent=11 // pred_check
          %p670 = pneg %p450
        $region82: #{tpu_custom_call.1} parent=11 // pred_check_branch
          %672 = sbr.rel (%p670) target = $region84
        $region83: #{tpu_custom_call.1} parent=11 // pred_region
          _
        $region84: #{tpu_custom_call.1} parent=11 // pred_fallthru
          _
        // Predicated region
        $region85: #{tpu_custom_call.1} parent=11 // pred_check
          %p673 = pneg %p471
        $region86: #{tpu_custom_call.1} parent=11 // pred_check_branch
          %675 = sbr.rel (%p673) target = $region88
        $region87: #{tpu_custom_call.1} parent=11 // pred_region
          _
        $region88: #{tpu_custom_call.1} parent=11 // pred_fallthru
          _
        // Predicated region
        $region89: #{tpu_custom_call.1} parent=11 // pred_check
          %p676 = pneg %p492
        $region90: #{tpu_custom_call.1} parent=11 // pred_check_branch
          %678 = sbr.rel (%p676) target = $region92
        $region91: #{tpu_custom_call.1} parent=11 // pred_region
          _
        $region92: #{tpu_custom_call.1} parent=11 // pred_fallthru
          _
        // Predicated region
        $region93: #{tpu_custom_call.1} parent=11 // pred_check
          %p679 = pneg %p513
        $region94: #{tpu_custom_call.1} parent=11 // pred_check_branch
          %681 = sbr.rel (%p679) target = $region96
        $region95: #{tpu_custom_call.1} parent=11 // pred_region
          _
        $region96: #{tpu_custom_call.1} parent=11 // pred_fallthru
          _
        // Predicated region
        $region97: #{tpu_custom_call.1} parent=11 // pred_check
          %p682 = pneg %p534
        $region98: #{tpu_custom_call.1} parent=11 // pred_check_branch
          %684 = sbr.rel (%p682) target = $region100
        $region99: #{tpu_custom_call.1} parent=11 // pred_region
          _
        $region100: #{tpu_custom_call.1} parent=11 // pred_fallthru
          _
        // Predicated region
        $region101: #{tpu_custom_call.1} parent=11 // pred_check
          %p685 = pneg %p555
        $region102: #{tpu_custom_call.1} parent=11 // pred_check_branch
          %687 = sbr.rel (%p685) target = $region104
        $region103: #{tpu_custom_call.1} parent=11 // pred_region
          _
        $region104: #{tpu_custom_call.1} parent=11 // pred_fallthru
          _
        // Predicated region
        $region105: #{tpu_custom_call.1} parent=11 // pred_check
          %p688 = pneg %p576
        $region106: #{tpu_custom_call.1} parent=11 // pred_check_branch
          %690 = sbr.rel (%p688) target = $region108
        $region107: #{tpu_custom_call.1} parent=11 // pred_region
          _
        $region108: #{tpu_custom_call.1} parent=11 // pred_fallthru
          _
      $region12: #{tpu_custom_call.1} parent=5 // pred_fallthru
        _
      %p691 = scmp.lt.s32.totalorder %s34, 2
      // Predicated region
      $region109: #{tpu_custom_call.1} parent=5 // pred_check
        %p692 = pneg %p691
      $region110: #{tpu_custom_call.1} parent=5 // pred_check_branch
        %694 = sbr.rel (%p692) target = $region112
      $region111: #{tpu_custom_call.1} parent=5 // pred_region
        // Predicated region
        $region113: #{tpu_custom_call.1} parent=111 // pred_check
          %p695 = pneg %p66
        $region114: #{tpu_custom_call.1} parent=111 // pred_check_branch
          %697 = sbr.rel (%p695) target = $region116
        $region115: #{tpu_custom_call.1} parent=111 // pred_region
          %p698 = scmp.lt.s32.totalorder %s41, 1
          %s699 = scalar_select %p698, %s41, 1
          %s700 = smul.addr %s699, 8
          %s701 = scalar_lea.vmem %s0, %s700
        $region116: #{tpu_custom_call.1} parent=111 // pred_fallthru
          _
      $region112: #{tpu_custom_call.1} parent=5 // pred_fallthru
        _
      %p702 = scmp.le.s32.totalorder 1, %s34
      %p703 = scmp.lt.s32.totalorder %s34, 3
      %p704 = pnand %p702, %p703
      %p705 = pneg %p704
      // Predicated region
      $region117: #{tpu_custom_call.1} parent=5 // pred_check
        _
      $region118: #{tpu_custom_call.1} parent=5 // pred_check_branch
        %707 = sbr.rel (%p704) target = $region120
      $region119: #{tpu_custom_call.1} parent=5 // pred_region
        %s708 = ssub.s32 %s34, 1
        %p709 = scmp.lt.s32.totalorder %s43, 1
        %s710 = scalar_select %p709, %s43, 1
        %s711 = smul.addr %s710, 8
        %s712 = scalar_lea.vmem %s0, %s711
        %p713 = pneg %p72
        %p714 = pneg %p69
        %p715 = pneg %p93
        %p716 = pneg %p90
        %p717 = pneg %p114
        %p718 = pneg %p111
        %p719 = pneg %p135
        %p720 = pneg %p132
        %p721 = pneg %p156
        %p722 = pneg %p153
        %p723 = pneg %p177
        %p724 = pneg %p174
        %p725 = pneg %p198
        %p726 = pneg %p195
        %p727 = pneg %p219
        %p728 = pneg %p216
        %p729 = pneg %p240
        %p730 = pneg %p237
        %p731 = pneg %p261
        %p732 = pneg %p258
        %p733 = pneg %p282
        %p734 = pneg %p279
        %p735 = pneg %p303
        %p736 = pneg %p300
        %p737 = pneg %p324
        %p738 = pneg %p321
        %p739 = pneg %p345
        %p740 = pneg %p342
        %p741 = pneg %p366
        %p742 = pneg %p363
        %p743 = pneg %p387
        %p744 = pneg %p384
        %p745 = pneg %p408
        %p746 = pneg %p405
        %p747 = pneg %p429
        %p748 = pneg %p426
        %p749 = pneg %p450
        %p750 = pneg %p447
        %p751 = pneg %p471
        %p752 = pneg %p468
        %p753 = pneg %p492
        %p754 = pneg %p489
        %p755 = pneg %p513
        %p756 = pneg %p510
        %p757 = pneg %p534
        %p758 = pneg %p531
        %p759 = pneg %p555
        %p760 = pneg %p552
        %p761 = pneg %p576
        %p762 = pneg %p573
        %p763 = pneg %p604
        %p764 = pneg %p601
        %s765 = sand.u32 %s591, 1
        %s766 = scalar_lea.sflag [#allocation5], %s765
        %s767 = sand.u32 %s591, 1
        %s768 = smul.addr %s767, 8
        %s769 = scalar_lea.vmem [#allocation4], %s768
        %p770 = scmp.lt.s32.totalorder %s43, 1
        %s771 = scalar_select %p770, %s43, 1
        %s772 = smul.addr %s771, 8
        %s773 = scalar_lea.vmem %s0, %s772
        %p775 = scmp.eq.s32.totalorder %s44, 0
        // Predicated region
        $region121: #{tpu_custom_call.1} parent=119 // pred_check
          %p776 = pneg %p775
        $region122: #{tpu_custom_call.1} parent=119 // pred_check_branch
          %778 = sbr.rel (%p776) target = $region124
        $region123: #{tpu_custom_call.1} parent=119 // pred_region
          %v779 = vld [vmem:[%s773] sm:$0xff]
          %v780 = vpack.c.bf16 %v779, %v779
          %v781 = vld [vmem:[%s4] sm:$0xf]
          %v782 = vld [vmem:[%s4 + $0x4] sm:$0xf]
          %v783 = vld [vmem:[%s4 + $0x8] sm:$0xf]
          %v784 = vld [vmem:[%s4 + $0xc] sm:$0xf]
          %v785 = vld [vmem:[%s5] sm:$0xff]
          %v786 = vld [vmem:[%s5 + $0x8] sm:$0xff]
          %v787 = vld [vmem:[%s5 + $0x10] sm:$0xff]
          %v788 = vld [vmem:[%s5 + $0x18] sm:$0xff]
          %790 = vset.pattern.permute.xlu0 0
          %791 = vperm.xlu0 %790, %v785
          %v792 = vpop.permute.xlu0 %791
          %795 = vset.pattern.permute.xlu0 0
          %796 = vperm.xlu0 %795, %v786
          %v797 = vpop.permute.xlu0 %796
          %800 = vset.pattern.permute.xlu0 0
          %801 = vperm.xlu0 %800, %v787
          %v802 = vpop.permute.xlu0 %801
          %805 = vset.pattern.permute.xlu0 0
          %806 = vperm.xlu0 %805, %v788
          %v807 = vpop.permute.xlu0 %806
          %v813 = vunpack.c.l.b16 %v781
          %v814 = vunpack.c.l.b16 %v782
          %v815 = vunpack.c.l.b16 %v783
          %v816 = vunpack.c.l.b16 %v784
          %v817 = vpack.c.b16 %v814, %v813
          %v818 = vpack.c.b16 %v816, %v815
          %vm819 = vcmask 261120
          %v821 = vsel %vm819, %v817, 0
          %v824 = vsel %vm819, %v818, 0
          %v827 = vsel %vm819, %v780, 0
          %829 = vmatprep.subr.bf16.mxu0 0
          %830 = vmatpush1.bf16.xpose.msra.mxu0 %v827
          %831 = vmatprep.subr.bf16.mxu0 0
          %832 = vmatpush1.bf16.xpose.msra.mxu0 0
          %833 = vmatprep.subr.bf16.mxu0 0
          %834 = vmatpush1.bf16.xpose.msra.mxu0 0
          %835 = vmatprep.subr.bf16.mxu0 0
          %836 = vmatpush1.bf16.xpose.msra.mxu0 0
          %837 = vmatprep.subr.bf16.mxu0 0
          %838 = vmatpush1.bf16.xpose.msra.mxu0 0
          %839 = vmatprep.subr.bf16.mxu0 0
          %840 = vmatpush1.bf16.xpose.msra.mxu0 0
          %841 = vmatprep.subr.bf16.mxu0 0
          %842 = vmatpush1.bf16.xpose.msra.mxu0 0
          %843 = vmatprep.subr.bf16.mxu0 0
          %844 = vmatpush1.bf16.xpose.msra.mxu0 0
          %845 = vmatprep.subr.bf16.mxu0 0
          %846 = vmatpush1.bf16.xpose.msra.mxu0 0
          %847 = vmatprep.subr.bf16.mxu0 0
          %848 = vmatpush1.bf16.xpose.msra.mxu0 0
          %849 = vmatprep.subr.bf16.mxu0 0
          %850 = vmatpush1.bf16.xpose.msra.mxu0 0
          %851 = vmatprep.subr.bf16.mxu0 0
          %852 = vmatpush1.bf16.xpose.msra.mxu0 0
          %853 = vmatprep.subr.bf16.mxu0 0
          %854 = vmatpush1.bf16.xpose.msra.mxu0 0
          %855 = vmatprep.subr.bf16.mxu0 0
          %856 = vmatpush1.bf16.xpose.msra.mxu0 0
          %857 = vmatprep.subr.bf16.mxu0 0
          %858 = vmatpush1.bf16.xpose.msra.mxu0 0
          %859 = vmatprep.subr.bf16.mxu0 0
          %860 = vmatpush1.bf16.xpose.msra.mxu0 0
          %861 = vmatprep.mubr.bf16.mxu0 0
          %862 = vmatmul.mubr.bf16.gmra.mrb[0].mxu0 %v821
          %v863 = vpop.f32.mrb[0].mxu0
          %v864 = vadd.f32 %v792, %v863
          %v865 = vpop.f32.mrb[0].mxu0
          %v866 = vpop.f32.mrb[0].mxu0
          %v867 = vadd.f32 %v797, %v866
          %v868 = vpop.f32.mrb[0].mxu0
          %869 = vmatprep.mubr.bf16.mxu0 0
          %870 = vmatmul.mubr.bf16.gmra.mrb[0].mxu0 %v824
          %v871 = vpop.f32.mrb[0].mxu0
          %v872 = vadd.f32 %v802, %v871
          %v873 = vpop.f32.mrb[0].mxu0
          %v874 = vpop.f32.mrb[0].mxu0
          %v875 = vadd.f32 %v807, %v874
          %v876 = vpop.f32.mrb[0].mxu0
          %877 = vdwg.mxu0
          %v878 = vld [vmem:[%s6] sm:$0xf]
          %v879 = vld [vmem:[%s6 + $0x4] sm:$0xf]
          %v880 = vld [vmem:[%s6 + $0x8] sm:$0xf]
          %v881 = vld [vmem:[%s6 + $0xc] sm:$0xf]
          %v882 = vld [vmem:[%s7] sm:$0xff]
          %v883 = vld [vmem:[%s7 + $0x8] sm:$0xff]
          %v884 = vld [vmem:[%s7 + $0x10] sm:$0xff]
          %v885 = vld [vmem:[%s7 + $0x18] sm:$0xff]
          %887 = vset.pattern.permute.xlu0 0
          %888 = vperm.xlu0 %887, %v882
          %v889 = vpop.permute.xlu0 %888
          %892 = vset.pattern.permute.xlu0 0
          %893 = vperm.xlu0 %892, %v883
          %v894 = vpop.permute.xlu0 %893
          %897 = vset.pattern.permute.xlu0 0
          %898 = vperm.xlu0 %897, %v884
          %v899 = vpop.permute.xlu0 %898
          %902 = vset.pattern.permute.xlu0 0
          %903 = vperm.xlu0 %902, %v885
          %v904 = vpop.permute.xlu0 %903
          %v910 = vunpack.c.l.b16 %v878
          %v911 = vunpack.c.l.b16 %v879
          %v912 = vunpack.c.l.b16 %v880
          %v913 = vunpack.c.l.b16 %v881
          %v914 = vpack.c.b16 %v911, %v910
          %v915 = vpack.c.b16 %v913, %v912
          %v917 = vsel %vm819, %v914, 0
          %v920 = vsel %vm819, %v915, 0
          %922 = vmatprep.subr.bf16.mxu0 0
          %923 = vmatpush1.bf16.xpose.msra.mxu0 %v827
          %924 = vmatprep.subr.bf16.mxu0 0
          %925 = vmatpush1.bf16.xpose.msra.mxu0 0
          %926 = vmatprep.subr.bf16.mxu0 0
          %927 = vmatpush1.bf16.xpose.msra.mxu0 0
          %928 = vmatprep.subr.bf16.mxu0 0
          %929 = vmatpush1.bf16.xpose.msra.mxu0 0
          %930 = vmatprep.subr.bf16.mxu0 0
          %931 = vmatpush1.bf16.xpose.msra.mxu0 0
          %932 = vmatprep.subr.bf16.mxu0 0
          %933 = vmatpush1.bf16.xpose.msra.mxu0 0
          %934 = vmatprep.subr.bf16.mxu0 0
          %935 = vmatpush1.bf16.xpose.msra.mxu0 0
          %936 = vmatprep.subr.bf16.mxu0 0
          %937 = vmatpush1.bf16.xpose.msra.mxu0 0
          %938 = vmatprep.subr.bf16.mxu0 0
          %939 = vmatpush1.bf16.xpose.msra.mxu0 0
          %940 = vmatprep.subr.bf16.mxu0 0
          %941 = vmatpush1.bf16.xpose.msra.mxu0 0
          %942 = vmatprep.subr.bf16.mxu0 0
          %943 = vmatpush1.bf16.xpose.msra.mxu0 0
          %944 = vmatprep.subr.bf16.mxu0 0
          %945 = vmatpush1.bf16.xpose.msra.mxu0 0
          %946 = vmatprep.subr.bf16.mxu0 0
          %947 = vmatpush1.bf16.xpose.msra.mxu0 0
          %948 = vmatprep.subr.bf16.mxu0 0
          %949 = vmatpush1.bf16.xpose.msra.mxu0 0
          %950 = vmatprep.subr.bf16.mxu0 0
          %951 = vmatpush1.bf16.xpose.msra.mxu0 0
          %952 = vmatprep.subr.bf16.mxu0 0
          %953 = vmatpush1.bf16.xpose.msra.mxu0 0
          %954 = vmatprep.mubr.bf16.mxu0 0
          %955 = vmatmul.mubr.bf16.gmra.mrb[0].mxu0 %v917
          %v956 = vpop.f32.mrb[0].mxu0
          %v957 = vadd.f32 %v889, %v956
          %v958 = vpop.f32.mrb[0].mxu0
          %v959 = vpop.f32.mrb[0].mxu0
          %v960 = vadd.f32 %v894, %v959
          %v961 = vpop.f32.mrb[0].mxu0
          %962 = vmatprep.mubr.bf16.mxu0 0
          %963 = vmatmul.mubr.bf16.gmra.mrb[0].mxu0 %v920
          %v964 = vpop.f32.mrb[0].mxu0
          %v965 = vadd.f32 %v899, %v964
          %v966 = vpop.f32.mrb[0].mxu0
          %v967 = vpop.f32.mrb[0].mxu0
          %v968 = vadd.f32 %v904, %v967
          %v969 = vpop.f32.mrb[0].mxu0
          %970 = vdwg.mxu0
          %v971 = vpack.c.bf16 %v864, %v864
          %v972 = vpack.c.bf16 %v867, %v867
          %v973 = vpack.c.bf16 %v872, %v872
          %v974 = vpack.c.bf16 %v875, %v875
          %vm975 = vcmask 60416
          %976 = vst.msk [vmem:[#allocation2] sm:$0xf] %vm975, %v971
          %977 = vst.msk [vmem:[#allocation2 + $0x4] sm:$0xf] %vm975, %v972
          %978 = vst.msk [vmem:[#allocation2 + $0x8] sm:$0xf] %vm975, %v973
          %979 = vst.msk [vmem:[#allocation2 + $0xc] sm:$0xf] %vm975, %v974
          %v980 = vpack.c.bf16 %v957, %v957
          %v981 = vpack.c.bf16 %v960, %v960
          %v982 = vpack.c.bf16 %v965, %v965
          %v983 = vpack.c.bf16 %v968, %v968
          %984 = vst.msk [vmem:[#allocation3] sm:$0xf] %vm975, %v980
          %985 = vst.msk [vmem:[#allocation3 + $0x4] sm:$0xf] %vm975, %v981
          %986 = vst.msk [vmem:[#allocation3 + $0x8] sm:$0xf] %vm975, %v982
          %987 = vst.msk [vmem:[#allocation3 + $0xc] sm:$0xf] %vm975, %v983
        $region124: #{tpu_custom_call.1} parent=119 // pred_fallthru
          _
        %s988 = smul.u32 %s44, 8
        %s989 = scalar_lea.vmem %s773, %s988
        %v990 = vld [vmem:[%s989] sm:$0xff]
        %v991 = vpack.c.bf16 %v990, %v990
        %v992 = vld [vmem:[%s2] sm:$0xf]
        %v993 = vld [vmem:[%s2 + $0x4] sm:$0xf]
        %v994 = vld [vmem:[%s2 + $0x8] sm:$0xf]
        %v995 = vld [vmem:[%s2 + $0xc] sm:$0xf]
        %v996 = vld [vmem:[%s3] sm:$0x1]
        %v998 = vlaneseq
        %v999 = vshrl.u32 %v998, 7
        %v1000 = vsub.s32 0, %v999
        %v1001 = vrot.slane %v996, %v1000
        %v1007 = vunpack.c.l.b16 %v992
        %v1008 = vunpack.c.l.b16 %v993
        %v1009 = vunpack.c.l.b16 %v994
        %v1010 = vunpack.c.l.b16 %v995
        %v1011 = vpack.c.b16 %v1008, %v1007
        %v1012 = vpack.c.b16 %v1010, %v1009
        %vm1015 = vcmask 261120
        %v1017 = vsel %vm1015, %v991, 0
        %1019 = vmatprep.subr.bf16.mxu0 0
        %1020 = vmatpush1.bf16.msra.mxu0 %v1011
        %1021 = vmatprep.subr.bf16.mxu0 0
        %1022 = vmatpush1.bf16.msra.mxu0 %v1012
        %1023 = vmatprep.subr.bf16.mxu0 0
        %1024 = vmatpush1.bf16.msra.mxu0 0
        %1025 = vmatprep.subr.bf16.mxu0 0
        %1026 = vmatpush1.bf16.msra.mxu0 0
        %1027 = vmatprep.subr.bf16.mxu0 0
        %1028 = vmatpush1.bf16.msra.mxu0 0
        %1029 = vmatprep.subr.bf16.mxu0 0
        %1030 = vmatpush1.bf16.msra.mxu0 0
        %1031 = vmatprep.subr.bf16.mxu0 0
        %1032 = vmatpush1.bf16.msra.mxu0 0
        %1033 = vmatprep.subr.bf16.mxu0 0
        %1034 = vmatpush1.bf16.msra.mxu0 0
        %1035 = vmatprep.subr.bf16.mxu0 0
        %1036 = vmatpush1.bf16.msra.mxu0 0
        %1037 = vmatprep.subr.bf16.mxu0 0
        %1038 = vmatpush1.bf16.msra.mxu0 0
        %1039 = vmatprep.subr.bf16.mxu0 0
        %1040 = vmatpush1.bf16.msra.mxu0 0
        %1041 = vmatprep.subr.bf16.mxu0 0
        %1042 = vmatpush1.bf16.msra.mxu0 0
        %1043 = vmatprep.subr.bf16.mxu0 0
        %1044 = vmatpush1.bf16.msra.mxu0 0
        %1045 = vmatprep.subr.bf16.mxu0 0
        %1046 = vmatpush1.bf16.msra.mxu0 0
        %1047 = vmatprep.subr.bf16.mxu0 0
        %1048 = vmatpush1.bf16.msra.mxu0 0
        %1049 = vmatprep.subr.bf16.mxu0 0
        %1050 = vmatpush1.bf16.msra.mxu0 0
        %1051 = vmatprep.mubr.bf16.mxu0 0
        %1052 = vmatmul.mubr.bf16.gmra.mrb[0].mxu0 %v1017
        %v1053 = vpop.f32.mrb[0].mxu0
        %v1054 = vadd.f32 %v1001, %v1053
        %v1055 = vpop.f32.mrb[0].mxu0
        %v1056 = vpop.f32.mrb[0].mxu0
        %v1057 = vpop.f32.mrb[0].mxu0
        %1058 = vdwg.mxu0
        %v1059 = vpack.c.bf16 %v1054, %v1054
        %1061 = vrot.lane.b32.xlu0 %v1059, 120
        %v1062 = vpop.permute.xlu0 %1061
        %1063 = vrot.lane.b32.xlu0 %v1059, 112
        %v1064 = vpop.permute.xlu0 %1063
        %1065 = vrot.lane.b32.xlu0 %v1059, 104
        %v1066 = vpop.permute.xlu0 %1065
        %v1067 = vld [vmem:[#allocation2] sm:$0xf]
        %v1068 = vld [vmem:[#allocation2 + $0x4] sm:$0xf]
        %v1069 = vld [vmem:[#allocation2 + $0x8] sm:$0xf]
        %v1070 = vld [vmem:[#allocation2 + $0xc] sm:$0xf]
        %v1071 = vld [vmem:[%s10] sm:$0xf]
        %v1072 = vld [vmem:[%s10 + $0x4] sm:$0xf]
        %v1073 = vld [vmem:[%s10 + $0x8] sm:$0xf]
        %v1074 = vld [vmem:[%s10 + $0xc] sm:$0xf]
        %v1075 = vld [vmem:[%s11] sm:$0x1]
        %v1077 = vlaneseq
        %v1078 = vshrl.u32 %v1077, 7
        %v1079 = vsub.s32 0, %v1078
        %v1080 = vrot.slane %v1075, %v1079
        %v1086 = vunpack.c.l.b16 %v1071
        %v1087 = vunpack.c.l.b16 %v1072
        %v1088 = vunpack.c.l.b16 %v1073
        %v1089 = vunpack.c.l.b16 %v1074
        %v1090 = vpack.c.b16 %v1087, %v1086
        %v1091 = vpack.c.b16 %v1089, %v1088
        %1094 = vmatprep.subr.bf16.mxu0 0
        %1095 = vmatpush1.bf16.msra.mxu0 %v1090
        %1096 = vmatprep.subr.bf16.mxu0 0
        %1097 = vmatpush1.bf16.msra.mxu0 %v1091
        %1098 = vmatprep.subr.bf16.mxu0 0
        %1099 = vmatpush1.bf16.msra.mxu0 0
        %1100 = vmatprep.subr.bf16.mxu0 0
        %1101 = vmatpush1.bf16.msra.mxu0 0
        %1102 = vmatprep.subr.bf16.mxu0 0
        %1103 = vmatpush1.bf16.msra.mxu0 0
        %1104 = vmatprep.subr.bf16.mxu0 0
        %1105 = vmatpush1.bf16.msra.mxu0 0
        %1106 = vmatprep.subr.bf16.mxu0 0
        %1107 = vmatpush1.bf16.msra.mxu0 0
        %1108 = vmatprep.subr.bf16.mxu0 0
        %1109 = vmatpush1.bf16.msra.mxu0 0
        %1110 = vmatprep.subr.bf16.mxu0 0
        %1111 = vmatpush1.bf16.msra.mxu0 0
        %1112 = vmatprep.subr.bf16.mxu0 0
        %1113 = vmatpush1.bf16.msra.mxu0 0
        %1114 = vmatprep.subr.bf16.mxu0 0
        %1115 = vmatpush1.bf16.msra.mxu0 0
        %1116 = vmatprep.subr.bf16.mxu0 0
        %1117 = vmatpush1.bf16.msra.mxu0 0
        %1118 = vmatprep.subr.bf16.mxu0 0
        %1119 = vmatpush1.bf16.msra.mxu0 0
        %1120 = vmatprep.subr.bf16.mxu0 0
        %1121 = vmatpush1.bf16.msra.mxu0 0
        %1122 = vmatprep.subr.bf16.mxu0 0
        %1123 = vmatpush1.bf16.msra.mxu0 0
        %1124 = vmatprep.subr.bf16.mxu0 0
        %1125 = vmatpush1.bf16.msra.mxu0 0
        %1126 = vmatprep.mubr.bf16.mxu0 0
        %1127 = vmatmul.mubr.bf16.gmra.mrb[0].mxu0 %v1017
        %v1128 = vpop.f32.mrb[0].mxu0
        %v1129 = vadd.f32 %v1080, %v1128
        %v1130 = vpop.f32.mrb[0].mxu0
        %v1131 = vpop.f32.mrb[0].mxu0
        %v1132 = vpop.f32.mrb[0].mxu0
        %1133 = vdwg.mxu0
        %v1134 = vxor.u32 %v1129, 2147483648
        %v1135 = vmul.f32 %v1134, 1.442695
        %v1136 = vpow.pop %v1135
        %v1137 = vadd.f32 %v1136, 1.0
        %v1138 = vrcp.pop %v1137
        %v1139 = vmul.f32 1.0, %v1138
        %v1140 = vld [vmem:[%s12] sm:$0x1]
        %v1142 = vlaneseq
        %v1143 = vshrl.u32 %v1142, 7
        %v1144 = vsub.s32 0, %v1143
        %v1145 = vrot.slane %v1140, %v1144
        %1146 = vrot.lane.b32.xlu0 %v1145, 4
        %v1147 = vpop.permute.xlu0 %1146
        %v1149 = vmul.f32 %v1139, %v1147
        %v1150 = vsub.f32 %v1149, 1.0
        %1152 = vrot.lane.b32.xlu0 %v1150, 124
        %v1153 = vpop.permute.xlu0 %1152
        %v1155 = vmul.f32 %v1139, %v1153
        %v1156 = vadd.f32 %v1155, 2.0
        %1157 = vxpose.xlu0.b32.start [1/16] %v1156, 128
        %1158 = vxpose.xlu0.b32.cont [2/16] 0.0, 128
        %1159 = vxpose.xlu0.b32.cont [3/16] 0.0, 128
        %1160 = vxpose.xlu0.b32.cont [4/16] 0.0, 128
        %1161 = vxpose.xlu0.b32.cont [5/16] 0.0, 128
        %1162 = vxpose.xlu0.b32.cont [6/16] 0.0, 128
        %1163 = vxpose.xlu0.b32.cont [7/16] 0.0, 128
        %1164 = vxpose.xlu0.b32.cont [8/16] 0.0, 128
        %1165 = vxpose.xlu0.b32.cont [9/16] 0.0, 128
        %1166 = vxpose.xlu0.b32.cont [10/16] 0.0, 128
        %1167 = vxpose.xlu0.b32.cont [11/16] 0.0, 128
        %1168 = vxpose.xlu0.b32.cont [12/16] 0.0, 128
        %1169 = vxpose.xlu0.b32.cont [13/16] 0.0, 128
        %1170 = vxpose.xlu0.b32.cont [14/16] 0.0, 128
        %1171 = vxpose.xlu0.b32.cont [15/16] 0.0, 128
        %1172 = vxpose.xlu0.b32.end [16/16] 0.0, 128
        %v1173 = vpop.trf.xlu0
        %v1174 = vpop.trf.xlu0
        %v1175 = vpop.trf.xlu0
        %v1176 = vpop.trf.xlu0
        %v1177 = vpop.trf.xlu0
        %v1178 = vpop.trf.xlu0
        %v1179 = vpop.trf.xlu0
        %v1180 = vpop.trf.xlu0
        %v1181 = vpop.trf.xlu0
        %v1182 = vpop.trf.xlu0
        %v1183 = vpop.trf.xlu0
        %v1184 = vpop.trf.xlu0
        %v1185 = vpop.trf.xlu0
        %v1186 = vpop.trf.xlu0
        %v1187 = vpop.trf.xlu0
        %v1188 = vpop.trf.xlu0
        %v1189 = vlaneseq
        %v1190 = vshrl.u32 %v1189, 7
        %v1191 = vsub.s32 0, %v1190
        %v1192 = vrot.slane %v1173, %v1191
        %1194 = vbcast.lane.b32.xlu0 %v1192, 256
        %v1195 = vpop.permute.xlu0 %1194
        %v1196 = vlaneseq
        %v1197 = vshrl.u32 %v1196, 7
        %v1198 = vsub.s32 1, %v1197
        %v1199 = vrot.slane %v1173, %v1198
        %1201 = vbcast.lane.b32.xlu0 %v1199, 256
        %v1202 = vpop.permute.xlu0 %1201
        %v1203 = vlaneseq
        %v1204 = vshrl.u32 %v1203, 7
        %v1205 = vsub.s32 2, %v1204
        %v1206 = vrot.slane %v1173, %v1205
        %1208 = vbcast.lane.b32.xlu0 %v1206, 256
        %v1209 = vpop.permute.xlu0 %1208
        %v1210 = vlaneseq
        %v1211 = vshrl.u32 %v1210, 7
        %v1212 = vsub.s32 3, %v1211
        %v1213 = vrot.slane %v1173, %v1212
        %1215 = vbcast.lane.b32.xlu0 %v1213, 256
        %v1216 = vpop.permute.xlu0 %1215
        %v1217 = vpack.c.bf16 %v1195, %v1195
        %v1218 = vpack.c.bf16 %v1202, %v1202
        %v1219 = vpack.c.bf16 %v1209, %v1209
        %v1220 = vpack.c.bf16 %v1216, %v1216
        %s1221 = sshra.s32 %s988, 3
        %s1222 = sand.u32 %s988, 7
        %s1223 = smul.addr %s1221, 4
        %s1224 = scalar_lea.vmem %s1, %s1223
        %v1225 = vld [vmem:[%s1224] sm:$0xf]
        %v1226 = vld [vmem:[%s1224 + $0x4] sm:$0xf]
        %v1227 = vld [vmem:[%s1224 + $0x8] sm:$0xf]
        %v1228 = vld [vmem:[%s1224 + $0xc] sm:$0xf]
        %v1229 = vmul.bf16 %v1217, %v1225
        %v1230 = vmul.bf16 %v1218, %v1226
        %v1231 = vmul.bf16 %v1219, %v1227
        %v1232 = vmul.bf16 %v1220, %v1228
        %v1233 = vunpack.c.l.bf16 %v1229
        %v1234 = vunpack.c.l.bf16 %v1230
        %v1235 = vunpack.c.l.bf16 %v1231
        %v1236 = vunpack.c.l.bf16 %v1232
        %vm1237 = vcmask 64512
        %v1239 = vsel %vm1237, %v1059, 0
        %vm1241 = vcmask 1043456
        %v1243 = vsel %vm1241, %v1067, 0
        %1245 = vmatprep.subr.bf16.mxu0 0
        %1246 = vmatpush1.bf16.msra.mxu0 %v1243
        %1247 = vmatprep.subr.bf16.mxu0 0
        %1248 = vmatpush1.bf16.msra.mxu0 0
        %1249 = vmatprep.subr.bf16.mxu0 0
        %1250 = vmatpush1.bf16.msra.mxu0 0
        %1251 = vmatprep.subr.bf16.mxu0 0
        %1252 = vmatpush1.bf16.msra.mxu0 0
        %1253 = vmatprep.subr.bf16.mxu0 0
        %1254 = vmatpush1.bf16.msra.mxu0 0
        %1255 = vmatprep.subr.bf16.mxu0 0
        %1256 = vmatpush1.bf16.msra.mxu0 0
        %1257 = vmatprep.subr.bf16.mxu0 0
        %1258 = vmatpush1.bf16.msra.mxu0 0
        %1259 = vmatprep.subr.bf16.mxu0 0
        %1260 = vmatpush1.bf16.msra.mxu0 0
        %1261 = vmatprep.subr.bf16.mxu0 0
        %1262 = vmatpush1.bf16.msra.mxu0 0
        %1263 = vmatprep.subr.bf16.mxu0 0
        %1264 = vmatpush1.bf16.msra.mxu0 0
        %1265 = vmatprep.subr.bf16.mxu0 0
        %1266 = vmatpush1.bf16.msra.mxu0 0
        %1267 = vmatprep.subr.bf16.mxu0 0
        %1268 = vmatpush1.bf16.msra.mxu0 0
        %1269 = vmatprep.subr.bf16.mxu0 0
        %1270 = vmatpush1.bf16.msra.mxu0 0
        %1271 = vmatprep.subr.bf16.mxu0 0
        %1272 = vmatpush1.bf16.msra.mxu0 0
        %1273 = vmatprep.subr.bf16.mxu0 0
        %1274 = vmatpush1.bf16.msra.mxu0 0
        %1275 = vmatprep.subr.bf16.mxu0 0
        %1276 = vmatpush1.bf16.msra.mxu0 0
        %1277 = vmatprep.mubr.bf16.mxu0 0
        %1278 = vmatmul.mubr.bf16.gmra.mrb[0].mxu0 %v1239
        %v1279 = vpop.f32.mrb[0].mxu0
        %v1280 = vadd.f32 %v1233, %v1279
        %v1281 = vpop.f32.mrb[0].mxu0
        %v1282 = vpop.f32.mrb[0].mxu0
        %v1283 = vpop.f32.mrb[0].mxu0
        %1284 = vdwg.mxu0
        %v1286 = vsel %vm1237, %v1062, 0
        %v1289 = vsel %vm1241, %v1068, 0
        %1291 = vmatprep.subr.bf16.mxu0 0
        %1292 = vmatpush1.bf16.msra.mxu0 %v1289
        %1293 = vmatprep.subr.bf16.mxu0 0
        %1294 = vmatpush1.bf16.msra.mxu0 0
        %1295 = vmatprep.subr.bf16.mxu0 0
        %1296 = vmatpush1.bf16.msra.mxu0 0
        %1297 = vmatprep.subr.bf16.mxu0 0
        %1298 = vmatpush1.bf16.msra.mxu0 0
        %1299 = vmatprep.subr.bf16.mxu0 0
        %1300 = vmatpush1.bf16.msra.mxu0 0
        %1301 = vmatprep.subr.bf16.mxu0 0
        %1302 = vmatpush1.bf16.msra.mxu0 0
        %1303 = vmatprep.subr.bf16.mxu0 0
        %1304 = vmatpush1.bf16.msra.mxu0 0
        %1305 = vmatprep.subr.bf16.mxu0 0
        %1306 = vmatpush1.bf16.msra.mxu0 0
        %1307 = vmatprep.subr.bf16.mxu0 0
        %1308 = vmatpush1.bf16.msra.mxu0 0
        %1309 = vmatprep.subr.bf16.mxu0 0
        %1310 = vmatpush1.bf16.msra.mxu0 0
        %1311 = vmatprep.subr.bf16.mxu0 0
        %1312 = vmatpush1.bf16.msra.mxu0 0
        %1313 = vmatprep.subr.bf16.mxu0 0
        %1314 = vmatpush1.bf16.msra.mxu0 0
        %1315 = vmatprep.subr.bf16.mxu0 0
        %1316 = vmatpush1.bf16.msra.mxu0 0
        %1317 = vmatprep.subr.bf16.mxu0 0
        %1318 = vmatpush1.bf16.msra.mxu0 0
        %1319 = vmatprep.subr.bf16.mxu0 0
        %1320 = vmatpush1.bf16.msra.mxu0 0
        %1321 = vmatprep.subr.bf16.mxu0 0
        %1322 = vmatpush1.bf16.msra.mxu0 0
        %1323 = vmatprep.mubr.bf16.mxu0 0
        %1324 = vmatmul.mubr.bf16.gmra.mrb[0].mxu0 %v1286
        %v1325 = vpop.f32.mrb[0].mxu0
        %v1326 = vadd.f32 %v1234, %v1325
        %v1327 = vpop.f32.mrb[0].mxu0
        %v1328 = vpop.f32.mrb[0].mxu0
        %v1329 = vpop.f32.mrb[0].mxu0
        %1330 = vdwg.mxu0
        %v1332 = vsel %vm1237, %v1064, 0
        %v1335 = vsel %vm1241, %v1069, 0
        %1337 = vmatprep.subr.bf16.mxu0 0
        %1338 = vmatpush1.bf16.msra.mxu0 %v1335
        %1339 = vmatprep.subr.bf16.mxu0 0
        %1340 = vmatpush1.bf16.msra.mxu0 0
        %1341 = vmatprep.subr.bf16.mxu0 0
        %1342 = vmatpush1.bf16.msra.mxu0 0
        %1343 = vmatprep.subr.bf16.mxu0 0
        %1344 = vmatpush1.bf16.msra.mxu0 0
        %1345 = vmatprep.subr.bf16.mxu0 0
        %1346 = vmatpush1.bf16.msra.mxu0 0
        %1347 = vmatprep.subr.bf16.mxu0 0
        %1348 = vmatpush1.bf16.msra.mxu0 0
        %1349 = vmatprep.subr.bf16.mxu0 0
        %1350 = vmatpush1.bf16.msra.mxu0 0
        %1351 = vmatprep.subr.bf16.mxu0 0
        %1352 = vmatpush1.bf16.msra.mxu0 0
        %1353 = vmatprep.subr.bf16.mxu0 0
        %1354 = vmatpush1.bf16.msra.mxu0 0
        %1355 = vmatprep.subr.bf16.mxu0 0
        %1356 = vmatpush1.bf16.msra.mxu0 0
        %1357 = vmatprep.subr.bf16.mxu0 0
        %1358 = vmatpush1.bf16.msra.mxu0 0
        %1359 = vmatprep.subr.bf16.mxu0 0
        %1360 = vmatpush1.bf16.msra.mxu0 0
        %1361 = vmatprep.subr.bf16.mxu0 0
        %1362 = vmatpush1.bf16.msra.mxu0 0
        %1363 = vmatprep.subr.bf16.mxu0 0
        %1364 = vmatpush1.bf16.msra.mxu0 0
        %1365 = vmatprep.subr.bf16.mxu0 0
        %1366 = vmatpush1.bf16.msra.mxu0 0
        %1367 = vmatprep.subr.bf16.mxu0 0
        %1368 = vmatpush1.bf16.msra.mxu0 0
        %1369 = vmatprep.mubr.bf16.mxu0 0
        %1370 = vmatmul.mubr.bf16.gmra.mrb[0].mxu0 %v1332
        %v1371 = vpop.f32.mrb[0].mxu0
        %v1372 = vadd.f32 %v1235, %v1371
        %v1373 = vpop.f32.mrb[0].mxu0
        %v1374 = vpop.f32.mrb[0].mxu0
        %v1375 = vpop.f32.mrb[0].mxu0
        %1376 = vdwg.mxu0
        %v1378 = vsel %vm1237, %v1066, 0
        %v1381 = vsel %vm1241, %v1070, 0
        %1383 = vmatprep.subr.bf16.mxu0 0
        %1384 = vmatpush1.bf16.msra.mxu0 %v1381
        %1385 = vmatprep.subr.bf16.mxu0 0
        %1386 = vmatpush1.bf16.msra.mxu0 0
        %1387 = vmatprep.subr.bf16.mxu0 0
        %1388 = vmatpush1.bf16.msra.mxu0 0
        %1389 = vmatprep.subr.bf16.mxu0 0
        %1390 = vmatpush1.bf16.msra.mxu0 0
        %1391 = vmatprep.subr.bf16.mxu0 0
        %1392 = vmatpush1.bf16.msra.mxu0 0
        %1393 = vmatprep.subr.bf16.mxu0 0
        %1394 = vmatpush1.bf16.msra.mxu0 0
        %1395 = vmatprep.subr.bf16.mxu0 0
        %1396 = vmatpush1.bf16.msra.mxu0 0
        %1397 = vmatprep.subr.bf16.mxu0 0
        %1398 = vmatpush1.bf16.msra.mxu0 0
        %1399 = vmatprep.subr.bf16.mxu0 0
        %1400 = vmatpush1.bf16.msra.mxu0 0
        %1401 = vmatprep.subr.bf16.mxu0 0
        %1402 = vmatpush1.bf16.msra.mxu0 0
        %1403 = vmatprep.subr.bf16.mxu0 0
        %1404 = vmatpush1.bf16.msra.mxu0 0
        %1405 = vmatprep.subr.bf16.mxu0 0
        %1406 = vmatpush1.bf16.msra.mxu0 0
        %1407 = vmatprep.subr.bf16.mxu0 0
        %1408 = vmatpush1.bf16.msra.mxu0 0
        %1409 = vmatprep.subr.bf16.mxu0 0
        %1410 = vmatpush1.bf16.msra.mxu0 0
        %1411 = vmatprep.subr.bf16.mxu0 0
        %1412 = vmatpush1.bf16.msra.mxu0 0
        %1413 = vmatprep.subr.bf16.mxu0 0
        %1414 = vmatpush1.bf16.msra.mxu0 0
        %1415 = vmatprep.mubr.bf16.mxu0 0
        %1416 = vmatmul.mubr.bf16.gmra.mrb[0].mxu0 %v1378
        %v1417 = vpop.f32.mrb[0].mxu0
        %v1418 = vadd.f32 %v1236, %v1417
        %v1419 = vpop.f32.mrb[0].mxu0
        %v1420 = vpop.f32.mrb[0].mxu0
        %v1421 = vpop.f32.mrb[0].mxu0
        %1422 = vdwg.mxu0
        %v1423 = vsel %vm1237, %v1280, -inf
        %1424 = vmax.xlane.f32.xlu0 %v1423
        %v1425 = vpop.xlane.xlu0 %1424
        %v1426 = vsel %vm1237, %v1326, -inf
        %1427 = vmax.xlane.f32.xlu0 %v1426
        %v1428 = vpop.xlane.xlu0 %1427
        %v1429 = vsel %vm1237, %v1372, -inf
        %1430 = vmax.xlane.f32.xlu0 %v1429
        %v1431 = vpop.xlane.xlu0 %1430
        %v1432 = vsel %vm1237, %v1418, -inf
        %1433 = vmax.xlane.f32.xlu0 %v1432
        %v1434 = vpop.xlane.xlu0 %1433
        %v1435 = vsub.f32 %v1280, %v1425
        %v1436 = vsub.f32 %v1326, %v1428
        %v1437 = vsub.f32 %v1372, %v1431
        %v1438 = vsub.f32 %v1418, %v1434
        %v1439 = vmul.f32 %v1435, 1.442695
        %v1440 = vpow.pop %v1439
        %v1441 = vmul.f32 %v1436, 1.442695
        %v1442 = vpow.pop %v1441
        %v1443 = vmul.f32 %v1437, 1.442695
        %v1444 = vpow.pop %v1443
        %v1445 = vmul.f32 %v1438, 1.442695
        %v1446 = vpow.pop %v1445
        %v1447 = vsel %vm1237, %v1440, 0.0
        %1448 = vadd.xlane.f32.xlu0 %v1447
        %v1449 = vpop.xlane.xlu0 %1448
        %v1450 = vsel %vm1237, %v1442, 0.0
        %1451 = vadd.xlane.f32.xlu0 %v1450
        %v1452 = vpop.xlane.xlu0 %1451
        %v1453 = vsel %vm1237, %v1444, 0.0
        %1454 = vadd.xlane.f32.xlu0 %v1453
        %v1455 = vpop.xlane.xlu0 %1454
        %v1456 = vsel %vm1237, %v1446, 0.0
        %1457 = vadd.xlane.f32.xlu0 %v1456
        %v1458 = vpop.xlane.xlu0 %1457
        %v1459 = vrcp.pop %v1449
        %v1460 = vrcp.pop %v1452
        %v1461 = vrcp.pop %v1455
        %v1462 = vrcp.pop %v1458
        %v1463 = vmul.f32 %v1440, %v1459
        %v1464 = vmul.f32 %v1442, %v1460
        %v1465 = vmul.f32 %v1444, %v1461
        %v1466 = vmul.f32 %v1446, %v1462
        %v1467 = vpack.c.bf16 %v1463, %v1463
        %v1468 = vpack.c.bf16 %v1464, %v1464
        %v1469 = vpack.c.bf16 %v1465, %v1465
        %v1470 = vpack.c.bf16 %v1466, %v1466
        %v1471 = vld [vmem:[#allocation3] sm:$0xf]
        %v1472 = vld [vmem:[#allocation3 + $0x4] sm:$0xf]
        %v1473 = vld [vmem:[#allocation3 + $0x8] sm:$0xf]
        %v1474 = vld [vmem:[#allocation3 + $0xc] sm:$0xf]
        %v1476 = vsel %vm1237, %v1467, 0
        %v1479 = vsel %vm1237, %v1471, 0
        %1481 = vmatprep.subr.bf16.mxu0 0
        %1482 = vmatpush1.bf16.xpose.msra.mxu0 %v1479
        %1483 = vmatprep.subr.bf16.mxu0 0
        %1484 = vmatpush1.bf16.xpose.msra.mxu0 0
        %1485 = vmatprep.subr.bf16.mxu0 0
        %1486 = vmatpush1.bf16.xpose.msra.mxu0 0
        %1487 = vmatprep.subr.bf16.mxu0 0
        %1488 = vmatpush1.bf16.xpose.msra.mxu0 0
        %1489 = vmatprep.subr.bf16.mxu0 0
        %1490 = vmatpush1.bf16.xpose.msra.mxu0 0
        %1491 = vmatprep.subr.bf16.mxu0 0
        %1492 = vmatpush1.bf16.xpose.msra.mxu0 0
        %1493 = vmatprep.subr.bf16.mxu0 0
        %1494 = vmatpush1.bf16.xpose.msra.mxu0 0
        %1495 = vmatprep.subr.bf16.mxu0 0
        %1496 = vmatpush1.bf16.xpose.msra.mxu0 0
        %1497 = vmatprep.subr.bf16.mxu0 0
        %1498 = vmatpush1.bf16.xpose.msra.mxu0 0
        %1499 = vmatprep.subr.bf16.mxu0 0
        %1500 = vmatpush1.bf16.xpose.msra.mxu0 0
        %1501 = vmatprep.subr.bf16.mxu0 0
        %1502 = vmatpush1.bf16.xpose.msra.mxu0 0
        %1503 = vmatprep.subr.bf16.mxu0 0
        %1504 = vmatpush1.bf16.xpose.msra.mxu0 0
        %1505 = vmatprep.subr.bf16.mxu0 0
        %1506 = vmatpush1.bf16.xpose.msra.mxu0 0
        %1507 = vmatprep.subr.bf16.mxu0 0
        %1508 = vmatpush1.bf16.xpose.msra.mxu0 0
        %1509 = vmatprep.subr.bf16.mxu0 0
        %1510 = vmatpush1.bf16.xpose.msra.mxu0 0
        %1511 = vmatprep.subr.bf16.mxu0 0
        %1512 = vmatpush1.bf16.xpose.msra.mxu0 0
        %1513 = vmatprep.mubr.bf16.mxu0 0
        %1514 = vmatmul.mubr.bf16.gmra.mrb[0].mxu0 %v1476
        %v1515 = vpop.f32.mrb[0].mxu0
        %v1516 = vadd.f32 0.0, %v1515
        %v1517 = vpop.f32.mrb[0].mxu0
        %v1518 = vpop.f32.mrb[0].mxu0
        %v1519 = vpop.f32.mrb[0].mxu0
        %1520 = vdwg.mxu0
        %v1522 = vsel %vm1237, %v1468, 0
        %v1525 = vsel %vm1237, %v1472, 0
        %1527 = vmatprep.subr.bf16.mxu0 0
        %1528 = vmatpush1.bf16.xpose.msra.mxu0 %v1525
        %1529 = vmatprep.subr.bf16.mxu0 0
        %1530 = vmatpush1.bf16.xpose.msra.mxu0 0
        %1531 = vmatprep.subr.bf16.mxu0 0
        %1532 = vmatpush1.bf16.xpose.msra.mxu0 0
        %1533 = vmatprep.subr.bf16.mxu0 0
        %1534 = vmatpush1.bf16.xpose.msra.mxu0 0
        %1535 = vmatprep.subr.bf16.mxu0 0
        %1536 = vmatpush1.bf16.xpose.msra.mxu0 0
        %1537 = vmatprep.subr.bf16.mxu0 0
        %1538 = vmatpush1.bf16.xpose.msra.mxu0 0
        %1539 = vmatprep.subr.bf16.mxu0 0
        %1540 = vmatpush1.bf16.xpose.msra.mxu0 0
        %1541 = vmatprep.subr.bf16.mxu0 0
        %1542 = vmatpush1.bf16.xpose.msra.mxu0 0
        %1543 = vmatprep.subr.bf16.mxu0 0
        %1544 = vmatpush1.bf16.xpose.msra.mxu0 0
        %1545 = vmatprep.subr.bf16.mxu0 0
        %1546 = vmatpush1.bf16.xpose.msra.mxu0 0
        %1547 = vmatprep.subr.bf16.mxu0 0
        %1548 = vmatpush1.bf16.xpose.msra.mxu0 0
        %1549 = vmatprep.subr.bf16.mxu0 0
        %1550 = vmatpush1.bf16.xpose.msra.mxu0 0
        %1551 = vmatprep.subr.bf16.mxu0 0
        %1552 = vmatpush1.bf16.xpose.msra.mxu0 0
        %1553 = vmatprep.subr.bf16.mxu0 0
        %1554 = vmatpush1.bf16.xpose.msra.mxu0 0
        %1555 = vmatprep.subr.bf16.mxu0 0
        %1556 = vmatpush1.bf16.xpose.msra.mxu0 0
        %1557 = vmatprep.subr.bf16.mxu0 0
        %1558 = vmatpush1.bf16.xpose.msra.mxu0 0
        %1559 = vmatprep.mubr.bf16.mxu0 0
        %1560 = vmatmul.mubr.bf16.gmra.mrb[0].mxu0 %v1522
        %v1561 = vpop.f32.mrb[0].mxu0
        %v1562 = vadd.f32 0.0, %v1561
        %v1563 = vpop.f32.mrb[0].mxu0
        %v1564 = vpop.f32.mrb[0].mxu0
        %v1565 = vpop.f32.mrb[0].mxu0
        %1566 = vdwg.mxu0
        %v1568 = vsel %vm1237, %v1469, 0
        %v1571 = vsel %vm1237, %v1473, 0
        %1573 = vmatprep.subr.bf16.mxu0 0
        %1574 = vmatpush1.bf16.xpose.msra.mxu0 %v1571
        %1575 = vmatprep.subr.bf16.mxu0 0
        %1576 = vmatpush1.bf16.xpose.msra.mxu0 0
        %1577 = vmatprep.subr.bf16.mxu0 0
        %1578 = vmatpush1.bf16.xpose.msra.mxu0 0
        %1579 = vmatprep.subr.bf16.mxu0 0
        %1580 = vmatpush1.bf16.xpose.msra.mxu0 0
        %1581 = vmatprep.subr.bf16.mxu0 0
        %1582 = vmatpush1.bf16.xpose.msra.mxu0 0
        %1583 = vmatprep.subr.bf16.mxu0 0
        %1584 = vmatpush1.bf16.xpose.msra.mxu0 0
        %1585 = vmatprep.subr.bf16.mxu0 0
        %1586 = vmatpush1.bf16.xpose.msra.mxu0 0
        %1587 = vmatprep.subr.bf16.mxu0 0
        %1588 = vmatpush1.bf16.xpose.msra.mxu0 0
        %1589 = vmatprep.subr.bf16.mxu0 0
        %1590 = vmatpush1.bf16.xpose.msra.mxu0 0
        %1591 = vmatprep.subr.bf16.mxu0 0
        %1592 = vmatpush1.bf16.xpose.msra.mxu0 0
        %1593 = vmatprep.subr.bf16.mxu0 0
        %1594 = vmatpush1.bf16.xpose.msra.mxu0 0
        %1595 = vmatprep.subr.bf16.mxu0 0
        %1596 = vmatpush1.bf16.xpose.msra.mxu0 0
        %1597 = vmatprep.subr.bf16.mxu0 0
        %1598 = vmatpush1.bf16.xpose.msra.mxu0 0
        %1599 = vmatprep.subr.bf16.mxu0 0
        %1600 = vmatpush1.bf16.xpose.msra.mxu0 0
        %1601 = vmatprep.subr.bf16.mxu0 0
        %1602 = vmatpush1.bf16.xpose.msra.mxu0 0
        %1603 = vmatprep.subr.bf16.mxu0 0
        %1604 = vmatpush1.bf16.xpose.msra.mxu0 0
        %1605 = vmatprep.mubr.bf16.mxu0 0
        %1606 = vmatmul.mubr.bf16.gmra.mrb[0].mxu0 %v1568
        %v1607 = vpop.f32.mrb[0].mxu0
        %v1608 = vadd.f32 0.0, %v1607
        %v1609 = vpop.f32.mrb[0].mxu0
        %v1610 = vpop.f32.mrb[0].mxu0
        %v1611 = vpop.f32.mrb[0].mxu0
        %1612 = vdwg.mxu0
        %v1614 = vsel %vm1237, %v1470, 0
        %v1617 = vsel %vm1237, %v1474, 0
        %1619 = vmatprep.subr.bf16.mxu0 0
        %1620 = vmatpush1.bf16.xpose.msra.mxu0 %v1617
        %1621 = vmatprep.subr.bf16.mxu0 0
        %1622 = vmatpush1.bf16.xpose.msra.mxu0 0
        %1623 = vmatprep.subr.bf16.mxu0 0
        %1624 = vmatpush1.bf16.xpose.msra.mxu0 0
        %1625 = vmatprep.subr.bf16.mxu0 0
        %1626 = vmatpush1.bf16.xpose.msra.mxu0 0
        %1627 = vmatprep.subr.bf16.mxu0 0
        %1628 = vmatpush1.bf16.xpose.msra.mxu0 0
        %1629 = vmatprep.subr.bf16.mxu0 0
        %1630 = vmatpush1.bf16.xpose.msra.mxu0 0
        %1631 = vmatprep.subr.bf16.mxu0 0
        %1632 = vmatpush1.bf16.xpose.msra.mxu0 0
        %1633 = vmatprep.subr.bf16.mxu0 0
        %1634 = vmatpush1.bf16.xpose.msra.mxu0 0
        %1635 = vmatprep.subr.bf16.mxu0 0
        %1636 = vmatpush1.bf16.xpose.msra.mxu0 0
        %1637 = vmatprep.subr.bf16.mxu0 0
        %1638 = vmatpush1.bf16.xpose.msra.mxu0 0
        %1639 = vmatprep.subr.bf16.mxu0 0
        %1640 = vmatpush1.bf16.xpose.msra.mxu0 0
        %1641 = vmatprep.subr.bf16.mxu0 0
        %1642 = vmatpush1.bf16.xpose.msra.mxu0 0
        %1643 = vmatprep.subr.bf16.mxu0 0
        %1644 = vmatpush1.bf16.xpose.msra.mxu0 0
        %1645 = vmatprep.subr.bf16.mxu0 0
        %1646 = vmatpush1.bf16.xpose.msra.mxu0 0
        %1647 = vmatprep.subr.bf16.mxu0 0
        %1648 = vmatpush1.bf16.xpose.msra.mxu0 0
        %1649 = vmatprep.subr.bf16.mxu0 0
        %1650 = vmatpush1.bf16.xpose.msra.mxu0 0
        %1651 = vmatprep.mubr.bf16.mxu0 0
        %1652 = vmatmul.mubr.bf16.gmra.mrb[0].mxu0 %v1614
        %v1653 = vpop.f32.mrb[0].mxu0
        %v1654 = vadd.f32 0.0, %v1653
        %v1655 = vpop.f32.mrb[0].mxu0
        %v1656 = vpop.f32.mrb[0].mxu0
        %v1657 = vpop.f32.mrb[0].mxu0
        %1658 = vdwg.mxu0
        %v1659 = vpack.c.bf16 %v1516, %v1516
        %v1660 = vpack.c.bf16 %v1562, %v1562
        %v1661 = vpack.c.bf16 %v1608, %v1608
        %v1662 = vpack.c.bf16 %v1654, %v1654
        %v1663 = vld [vmem:[%s8] sm:$0xf]
        %v1664 = vld [vmem:[%s8 + $0x4] sm:$0xf]
        %v1665 = vld [vmem:[%s8 + $0x8] sm:$0xf]
        %v1666 = vld [vmem:[%s8 + $0xc] sm:$0xf]
        %v1668 = vsel %vm1237, %v1659, 0
        %v1671 = vsel %vm1241, %v1663, 0
        %1673 = vmatprep.subr.bf16.mxu0 0
        %1674 = vmatpush1.bf16.msra.mxu0 %v1671
        %1675 = vmatprep.subr.bf16.mxu0 0
        %1676 = vmatpush1.bf16.msra.mxu0 0
        %1677 = vmatprep.subr.bf16.mxu0 0
        %1678 = vmatpush1.bf16.msra.mxu0 0
        %1679 = vmatprep.subr.bf16.mxu0 0
        %1680 = vmatpush1.bf16.msra.mxu0 0
        %1681 = vmatprep.subr.bf16.mxu0 0
        %1682 = vmatpush1.bf16.msra.mxu0 0
        %1683 = vmatprep.subr.bf16.mxu0 0
        %1684 = vmatpush1.bf16.msra.mxu0 0
        %1685 = vmatprep.subr.bf16.mxu0 0
        %1686 = vmatpush1.bf16.msra.mxu0 0
        %1687 = vmatprep.subr.bf16.mxu0 0
        %1688 = vmatpush1.bf16.msra.mxu0 0
        %1689 = vmatprep.subr.bf16.mxu0 0
        %1690 = vmatpush1.bf16.msra.mxu0 0
        %1691 = vmatprep.subr.bf16.mxu0 0
        %1692 = vmatpush1.bf16.msra.mxu0 0
        %1693 = vmatprep.subr.bf16.mxu0 0
        %1694 = vmatpush1.bf16.msra.mxu0 0
        %1695 = vmatprep.subr.bf16.mxu0 0
        %1696 = vmatpush1.bf16.msra.mxu0 0
        %1697 = vmatprep.subr.bf16.mxu0 0
        %1698 = vmatpush1.bf16.msra.mxu0 0
        %1699 = vmatprep.subr.bf16.mxu0 0
        %1700 = vmatpush1.bf16.msra.mxu0 0
        %1701 = vmatprep.subr.bf16.mxu0 0
        %1702 = vmatpush1.bf16.msra.mxu0 0
        %1703 = vmatprep.subr.bf16.mxu0 0
        %1704 = vmatpush1.bf16.msra.mxu0 0
        %1705 = vmatprep.mubr.bf16.mxu0 0
        %1706 = vmatmul.mubr.bf16.gmra.mrb[0].mxu0 %v1668
        %v1707 = vpop.f32.mrb[0].mxu0
        %v1708 = vadd.f32 0.0, %v1707
        %v1709 = vpop.f32.mrb[0].mxu0
        %v1710 = vpop.f32.mrb[0].mxu0
        %v1711 = vpop.f32.mrb[0].mxu0
        %1712 = vdwg.mxu0
        %v1714 = vsel %vm1237, %v1660, 0
        %v1717 = vsel %vm1241, %v1664, 0
        %1719 = vmatprep.subr.bf16.mxu0 0
        %1720 = vmatpush1.bf16.msra.mxu0 %v1717
        %1721 = vmatprep.subr.bf16.mxu0 0
        %1722 = vmatpush1.bf16.msra.mxu0 0
        %1723 = vmatprep.subr.bf16.mxu0 0
        %1724 = vmatpush1.bf16.msra.mxu0 0
        %1725 = vmatprep.subr.bf16.mxu0 0
        %1726 = vmatpush1.bf16.msra.mxu0 0
        %1727 = vmatprep.subr.bf16.mxu0 0
        %1728 = vmatpush1.bf16.msra.mxu0 0
        %1729 = vmatprep.subr.bf16.mxu0 0
        %1730 = vmatpush1.bf16.msra.mxu0 0
        %1731 = vmatprep.subr.bf16.mxu0 0
        %1732 = vmatpush1.bf16.msra.mxu0 0
        %1733 = vmatprep.subr.bf16.mxu0 0
        %1734 = vmatpush1.bf16.msra.mxu0 0
        %1735 = vmatprep.subr.bf16.mxu0 0
        %1736 = vmatpush1.bf16.msra.mxu0 0
        %1737 = vmatprep.subr.bf16.mxu0 0
        %1738 = vmatpush1.bf16.msra.mxu0 0
        %1739 = vmatprep.subr.bf16.mxu0 0
        %1740 = vmatpush1.bf16.msra.mxu0 0
        %1741 = vmatprep.subr.bf16.mxu0 0
        %1742 = vmatpush1.bf16.msra.mxu0 0
        %1743 = vmatprep.subr.bf16.mxu0 0
        %1744 = vmatpush1.bf16.msra.mxu0 0
        %1745 = vmatprep.subr.bf16.mxu0 0
        %1746 = vmatpush1.bf16.msra.mxu0 0
        %1747 = vmatprep.subr.bf16.mxu0 0
        %1748 = vmatpush1.bf16.msra.mxu0 0
        %1749 = vmatprep.subr.bf16.mxu0 0
        %1750 = vmatpush1.bf16.msra.mxu0 0
        %1751 = vmatprep.mubr.bf16.mxu0 0
        %1752 = vmatmul.mubr.bf16.gmra.mrb[0].mxu0 %v1714
        %v1753 = vpop.f32.mrb[0].mxu0
        %v1754 = vadd.f32 0.0, %v1753
        %v1755 = vpop.f32.mrb[0].mxu0
        %v1756 = vpop.f32.mrb[0].mxu0
        %v1757 = vpop.f32.mrb[0].mxu0
        %1758 = vdwg.mxu0
        %v1760 = vsel %vm1237, %v1661, 0
        %v1763 = vsel %vm1241, %v1665, 0
        %1765 = vmatprep.subr.bf16.mxu0 0
        %1766 = vmatpush1.bf16.msra.mxu0 %v1763
        %1767 = vmatprep.subr.bf16.mxu0 0
        %1768 = vmatpush1.bf16.msra.mxu0 0
        %1769 = vmatprep.subr.bf16.mxu0 0
        %1770 = vmatpush1.bf16.msra.mxu0 0
        %1771 = vmatprep.subr.bf16.mxu0 0
        %1772 = vmatpush1.bf16.msra.mxu0 0
        %1773 = vmatprep.subr.bf16.mxu0 0
        %1774 = vmatpush1.bf16.msra.mxu0 0
        %1775 = vmatprep.subr.bf16.mxu0 0
        %1776 = vmatpush1.bf16.msra.mxu0 0
        %1777 = vmatprep.subr.bf16.mxu0 0
        %1778 = vmatpush1.bf16.msra.mxu0 0
        %1779 = vmatprep.subr.bf16.mxu0 0
        %1780 = vmatpush1.bf16.msra.mxu0 0
        %1781 = vmatprep.subr.bf16.mxu0 0
        %1782 = vmatpush1.bf16.msra.mxu0 0
        %1783 = vmatprep.subr.bf16.mxu0 0
        %1784 = vmatpush1.bf16.msra.mxu0 0
        %1785 = vmatprep.subr.bf16.mxu0 0
        %1786 = vmatpush1.bf16.msra.mxu0 0
        %1787 = vmatprep.subr.bf16.mxu0 0
        %1788 = vmatpush1.bf16.msra.mxu0 0
        %1789 = vmatprep.subr.bf16.mxu0 0
        %1790 = vmatpush1.bf16.msra.mxu0 0
        %1791 = vmatprep.subr.bf16.mxu0 0
        %1792 = vmatpush1.bf16.msra.mxu0 0
        %1793 = vmatprep.subr.bf16.mxu0 0
        %1794 = vmatpush1.bf16.msra.mxu0 0
        %1795 = vmatprep.subr.bf16.mxu0 0
        %1796 = vmatpush1.bf16.msra.mxu0 0
        %1797 = vmatprep.mubr.bf16.mxu0 0
        %1798 = vmatmul.mubr.bf16.gmra.mrb[0].mxu0 %v1760
        %v1799 = vpop.f32.mrb[0].mxu0
        %v1800 = vadd.f32 0.0, %v1799
        %v1801 = vpop.f32.mrb[0].mxu0
        %v1802 = vpop.f32.mrb[0].mxu0
        %v1803 = vpop.f32.mrb[0].mxu0
        %1804 = vdwg.mxu0
        %v1806 = vsel %vm1237, %v1662, 0
        %v1809 = vsel %vm1241, %v1666, 0
        %1811 = vmatprep.subr.bf16.mxu0 0
        %1812 = vmatpush1.bf16.msra.mxu0 %v1809
        %1813 = vmatprep.subr.bf16.mxu0 0
        %1814 = vmatpush1.bf16.msra.mxu0 0
        %1815 = vmatprep.subr.bf16.mxu0 0
        %1816 = vmatpush1.bf16.msra.mxu0 0
        %1817 = vmatprep.subr.bf16.mxu0 0
        %1818 = vmatpush1.bf16.msra.mxu0 0
        %1819 = vmatprep.subr.bf16.mxu0 0
        %1820 = vmatpush1.bf16.msra.mxu0 0
        %1821 = vmatprep.subr.bf16.mxu0 0
        %1822 = vmatpush1.bf16.msra.mxu0 0
        %1823 = vmatprep.subr.bf16.mxu0 0
        %1824 = vmatpush1.bf16.msra.mxu0 0
        %1825 = vmatprep.subr.bf16.mxu0 0
        %1826 = vmatpush1.bf16.msra.mxu0 0
        %1827 = vmatprep.subr.bf16.mxu0 0
        %1828 = vmatpush1.bf16.msra.mxu0 0
        %1829 = vmatprep.subr.bf16.mxu0 0
        %1830 = vmatpush1.bf16.msra.mxu0 0
        %1831 = vmatprep.subr.bf16.mxu0 0
        %1832 = vmatpush1.bf16.msra.mxu0 0
        %1833 = vmatprep.subr.bf16.mxu0 0
        %1834 = vmatpush1.bf16.msra.mxu0 0
        %1835 = vmatprep.subr.bf16.mxu0 0
        %1836 = vmatpush1.bf16.msra.mxu0 0
        %1837 = vmatprep.subr.bf16.mxu0 0
        %1838 = vmatpush1.bf16.msra.mxu0 0
        %1839 = vmatprep.subr.bf16.mxu0 0
        %1840 = vmatpush1.bf16.msra.mxu0 0
        %1841 = vmatprep.subr.bf16.mxu0 0
        %1842 = vmatpush1.bf16.msra.mxu0 0
        %1843 = vmatprep.mubr.bf16.mxu0 0
        %1844 = vmatmul.mubr.bf16.gmra.mrb[0].mxu0 %v1806
        %v1845 = vpop.f32.mrb[0].mxu0
        %v1846 = vadd.f32 0.0, %v1845
        %v1847 = vpop.f32.mrb[0].mxu0
        %v1848 = vpop.f32.mrb[0].mxu0
        %v1849 = vpop.f32.mrb[0].mxu0
        %1850 = vdwg.mxu0
        %v1851 = vsel %vm1015, %v1708, 0.0
        %v1852 = vsel %vm1015, %v1754, 0.0
        %v1853 = vadd.f32 %v1851, %v1852
        %v1854 = vsel %vm1015, %v1800, 0.0
        %v1855 = vadd.f32 %v1853, %v1854
        %v1856 = vsel %vm1015, %v1846, 0.0
        %v1857 = vadd.f32 %v1855, %v1856
        %v1858 = vld [vmem:[%s9] sm:$0x1]
        %v1860 = vlaneseq
        %v1861 = vshrl.u32 %v1860, 7
        %v1862 = vsub.s32 0, %v1861
        %v1863 = vrot.slane %v1858, %v1862
        %v1865 = vadd.f32 %v1857, %v1863
        %v1866 = vadd.f32 %v990, %v1865
        %v1867 = vld [vmem:[%s13] sm:$0x1]
        %v1868 = vld [vmem:[%s14] sm:$0x1]
        %v1869 = vsel %vm1015, %v1866, 0.0
        %1870 = vadd.xlane.f32.xlu0 %v1869
        %v1871 = vpop.xlane.xlu0 %1870
        %v1872 = vrcp.pop 32.0
        %v1873 = vmul.f32 %v1871, %v1872
        %v1874 = vsub.f32 %v1866, %v1873
        %v1875 = vmul.f32 %v1874, %v1874
        %v1876 = vsel %vm1015, %v1875, 0.0
        %1877 = vadd.xlane.f32.xlu0 %v1876
        %v1878 = vpop.xlane.xlu0 %1877
        %v1879 = vmul.f32 %v1878, %v1872
        %v1880 = vadd.f32 %v1879, 1e-05
        %v1881 = vrsqrt.pop %v1880
        %v1882 = vmul.f32 %v1874, %v1881
        %v1884 = vlaneseq
        %v1885 = vshrl.u32 %v1884, 7
        %v1886 = vsub.s32 0, %v1885
        %v1887 = vrot.slane %v1867, %v1886
        %v1889 = vmul.f32 %v1882, %v1887
        %v1891 = vlaneseq
        %v1892 = vshrl.u32 %v1891, 7
        %v1893 = vsub.s32 0, %v1892
        %v1894 = vrot.slane %v1868, %v1893
        %v1896 = vadd.f32 %v1889, %v1894
        %v1897 = vpack.c.bf16 %v1896, %v1896
        %v1898 = vld [vmem:[%s15] sm:$0xf]
        %v1899 = vld [vmem:[%s15 + $0x4] sm:$0xf]
        %v1900 = vld [vmem:[%s15 + $0x8] sm:$0xf]
        %v1901 = vld [vmem:[%s15 + $0xc] sm:$0xf]
        %v1902 = vld [vmem:[%s16] sm:$0x1]
        %v1904 = vlaneseq
        %v1905 = vshrl.u32 %v1904, 7
        %v1906 = vsub.s32 0, %v1905
        %v1907 = vrot.slane %v1902, %v1906
        %v1913 = vunpack.c.l.b16 %v1898
        %v1914 = vunpack.c.l.b16 %v1899
        %v1915 = vunpack.c.l.b16 %v1900
        %v1916 = vunpack.c.l.b16 %v1901
        %v1917 = vpack.c.b16 %v1914, %v1913
        %v1918 = vpack.c.b16 %v1916, %v1915
        %v1922 = vsel %vm1015, %v1897, 0
        %1924 = vmatprep.subr.bf16.mxu0 0
        %1925 = vmatpush1.bf16.msra.mxu0 %v1917
        %1926 = vmatprep.subr.bf16.mxu0 0
        %1927 = vmatpush1.bf16.msra.mxu0 %v1918
        %1928 = vmatprep.subr.bf16.mxu0 0
        %1929 = vmatpush1.bf16.msra.mxu0 0
        %1930 = vmatprep.subr.bf16.mxu0 0
        %1931 = vmatpush1.bf16.msra.mxu0 0
        %1932 = vmatprep.subr.bf16.mxu0 0
        %1933 = vmatpush1.bf16.msra.mxu0 0
        %1934 = vmatprep.subr.bf16.mxu0 0
        %1935 = vmatpush1.bf16.msra.mxu0 0
        %1936 = vmatprep.subr.bf16.mxu0 0
        %1937 = vmatpush1.bf16.msra.mxu0 0
        %1938 = vmatprep.subr.bf16.mxu0 0
        %1939 = vmatpush1.bf16.msra.mxu0 0
        %1940 = vmatprep.subr.bf16.mxu0 0
        %1941 = vmatpush1.bf16.msra.mxu0 0
        %1942 = vmatprep.subr.bf16.mxu0 0
        %1943 = vmatpush1.bf16.msra.mxu0 0
        %1944 = vmatprep.subr.bf16.mxu0 0
        %1945 = vmatpush1.bf16.msra.mxu0 0
        %1946 = vmatprep.subr.bf16.mxu0 0
        %1947 = vmatpush1.bf16.msra.mxu0 0
        %1948 = vmatprep.subr.bf16.mxu0 0
        %1949 = vmatpush1.bf16.msra.mxu0 0
        %1950 = vmatprep.subr.bf16.mxu0 0
        %1951 = vmatpush1.bf16.msra.mxu0 0
        %1952 = vmatprep.subr.bf16.mxu0 0
        %1953 = vmatpush1.bf16.msra.mxu0 0
        %1954 = vmatprep.subr.bf16.mxu0 0
        %1955 = vmatpush1.bf16.msra.mxu0 0
        %1956 = vmatprep.mubr.bf16.mxu0 0
        %1957 = vmatmul.mubr.bf16.gmra.mrb[0].mxu0 %v1922
        %v1958 = vpop.f32.mrb[0].mxu0
        %v1959 = vadd.f32 %v1907, %v1958
        %v1960 = vpop.f32.mrb[0].mxu0
        %v1961 = vpop.f32.mrb[0].mxu0
        %v1962 = vpop.f32.mrb[0].mxu0
        %1963 = vdwg.mxu0
        %v1964 = vmul.f32 %v1959, 0.5
        %v1965 = vrcp.pop 1.4142135
        %v1966 = vmul.f32 %v1959, %v1965
        %v1967 = verf.f32.pop %v1966
        %v1968 = vadd.f32 %v1967, 1.0
        %v1969 = vmul.f32 %v1964, %v1968
        %v1970 = vpack.c.bf16 %v1969, %v1969
        %v1971 = vld [vmem:[%s17] sm:$0xf]
        %v1972 = vld [vmem:[%s17 + $0x4] sm:$0xf]
        %v1973 = vld [vmem:[%s17 + $0x8] sm:$0xf]
        %v1974 = vld [vmem:[%s17 + $0xc] sm:$0xf]
        %v1975 = vld [vmem:[%s17 + $0x10] sm:$0xf]
        %v1976 = vld [vmem:[%s17 + $0x14] sm:$0xf]
        %v1977 = vld [vmem:[%s17 + $0x18] sm:$0xf]
        %v1978 = vld [vmem:[%s17 + $0x1c] sm:$0xf]
        %v1979 = vld [vmem:[%s18] sm:$0x1]
        %v1981 = vlaneseq
        %v1982 = vshrl.u32 %v1981, 7
        %v1983 = vsub.s32 0, %v1982
        %v1984 = vrot.slane %v1979, %v1983
        %v1994 = vunpack.c.l.b16 %v1971
        %v1995 = vunpack.c.l.b16 %v1972
        %v1996 = vunpack.c.l.b16 %v1973
        %v1997 = vunpack.c.l.b16 %v1974
        %v1998 = vunpack.c.l.b16 %v1975
        %v1999 = vunpack.c.l.b16 %v1976
        %v2000 = vunpack.c.l.b16 %v1977
        %v2001 = vunpack.c.l.b16 %v1978
        %v2002 = vpack.c.b16 %v1995, %v1994
        %v2003 = vpack.c.b16 %v1997, %v1996
        %v2004 = vpack.c.b16 %v1999, %v1998
        %v2005 = vpack.c.b16 %v2001, %v2000
        %vm2010 = vcmask 523264
        %v2012 = vsel %vm2010, %v1970, 0
        %2014 = vmatprep.subr.bf16.mxu0 0
        %2015 = vmatpush1.bf16.msra.mxu0 %v2002
        %2016 = vmatprep.subr.bf16.mxu0 0
        %2017 = vmatpush1.bf16.msra.mxu0 %v2003
        %2018 = vmatprep.subr.bf16.mxu0 0
        %2019 = vmatpush1.bf16.msra.mxu0 %v2004
        %2020 = vmatprep.subr.bf16.mxu0 0
        %2021 = vmatpush1.bf16.msra.mxu0 %v2005
        %2022 = vmatprep.subr.bf16.mxu0 0
        %2023 = vmatpush1.bf16.msra.mxu0 0
        %2024 = vmatprep.subr.bf16.mxu0 0
        %2025 = vmatpush1.bf16.msra.mxu0 0
        %2026 = vmatprep.subr.bf16.mxu0 0
        %2027 = vmatpush1.bf16.msra.mxu0 0
        %2028 = vmatprep.subr.bf16.mxu0 0
        %2029 = vmatpush1.bf16.msra.mxu0 0
        %2030 = vmatprep.subr.bf16.mxu0 0
        %2031 = vmatpush1.bf16.msra.mxu0 0
        %2032 = vmatprep.subr.bf16.mxu0 0
        %2033 = vmatpush1.bf16.msra.mxu0 0
        %2034 = vmatprep.subr.bf16.mxu0 0
        %2035 = vmatpush1.bf16.msra.mxu0 0
        %2036 = vmatprep.subr.bf16.mxu0 0
        %2037 = vmatpush1.bf16.msra.mxu0 0
        %2038 = vmatprep.subr.bf16.mxu0 0
        %2039 = vmatpush1.bf16.msra.mxu0 0
        %2040 = vmatprep.subr.bf16.mxu0 0
        %2041 = vmatpush1.bf16.msra.mxu0 0
        %2042 = vmatprep.subr.bf16.mxu0 0
        %2043 = vmatpush1.bf16.msra.mxu0 0
        %2044 = vmatprep.subr.bf16.mxu0 0
        %2045 = vmatpush1.bf16.msra.mxu0 0
        %2046 = vmatprep.mubr.bf16.mxu0 0
        %2047 = vmatmul.mubr.bf16.gmra.mrb[0].mxu0 %v2012
        %v2048 = vpop.f32.mrb[0].mxu0
        %v2049 = vadd.f32 %v1984, %v2048
        %v2050 = vpop.f32.mrb[0].mxu0
        %v2051 = vpop.f32.mrb[0].mxu0
        %v2052 = vpop.f32.mrb[0].mxu0
        %2053 = vdwg.mxu0
        %v2054 = vld [vmem:[%s19] sm:$0xf]
        %v2055 = vld [vmem:[%s19 + $0x4] sm:$0xf]
        %v2056 = vld [vmem:[%s19 + $0x8] sm:$0xf]
        %v2057 = vld [vmem:[%s19 + $0xc] sm:$0xf]
        %v2058 = vld [vmem:[%s20] sm:$0x1]
        %v2060 = vlaneseq
        %v2061 = vshrl.u32 %v2060, 7
        %v2062 = vsub.s32 0, %v2061
        %v2063 = vrot.slane %v2058, %v2062
        %v2069 = vunpack.c.l.b16 %v2054
        %v2070 = vunpack.c.l.b16 %v2055
        %v2071 = vunpack.c.l.b16 %v2056
        %v2072 = vunpack.c.l.b16 %v2057
        %v2073 = vpack.c.b16 %v2070, %v2069
        %v2074 = vpack.c.b16 %v2072, %v2071
        %2077 = vmatprep.subr.bf16.mxu0 0
        %2078 = vmatpush1.bf16.msra.mxu0 %v2073
        %2079 = vmatprep.subr.bf16.mxu0 0
        %2080 = vmatpush1.bf16.msra.mxu0 %v2074
        %2081 = vmatprep.subr.bf16.mxu0 0
        %2082 = vmatpush1.bf16.msra.mxu0 0
        %2083 = vmatprep.subr.bf16.mxu0 0
        %2084 = vmatpush1.bf16.msra.mxu0 0
        %2085 = vmatprep.subr.bf16.mxu0 0
        %2086 = vmatpush1.bf16.msra.mxu0 0
        %2087 = vmatprep.subr.bf16.mxu0 0
        %2088 = vmatpush1.bf16.msra.mxu0 0
        %2089 = vmatprep.subr.bf16.mxu0 0
        %2090 = vmatpush1.bf16.msra.mxu0 0
        %2091 = vmatprep.subr.bf16.mxu0 0
        %2092 = vmatpush1.bf16.msra.mxu0 0
        %2093 = vmatprep.subr.bf16.mxu0 0
        %2094 = vmatpush1.bf16.msra.mxu0 0
        %2095 = vmatprep.subr.bf16.mxu0 0
        %2096 = vmatpush1.bf16.msra.mxu0 0
        %2097 = vmatprep.subr.bf16.mxu0 0
        %2098 = vmatpush1.bf16.msra.mxu0 0
        %2099 = vmatprep.subr.bf16.mxu0 0
        %2100 = vmatpush1.bf16.msra.mxu0 0
        %2101 = vmatprep.subr.bf16.mxu0 0
        %2102 = vmatpush1.bf16.msra.mxu0 0
        %2103 = vmatprep.subr.bf16.mxu0 0
        %2104 = vmatpush1.bf16.msra.mxu0 0
        %2105 = vmatprep.subr.bf16.mxu0 0
        %2106 = vmatpush1.bf16.msra.mxu0 0
        %2107 = vmatprep.subr.bf16.mxu0 0
        %2108 = vmatpush1.bf16.msra.mxu0 0
        %2109 = vmatprep.mubr.bf16.mxu0 0
        %2110 = vmatmul.mubr.bf16.gmra.mrb[0].mxu0 %v1922
        %v2111 = vpop.f32.mrb[0].mxu0
        %v2112 = vadd.f32 %v2063, %v2111
        %v2113 = vpop.f32.mrb[0].mxu0
        %v2114 = vpop.f32.mrb[0].mxu0
        %v2115 = vpop.f32.mrb[0].mxu0
        %2116 = vdwg.mxu0
        %vm2117 = vcmp.gt.f32.partialorder %v2112, 0.0
        %v2118 = vmin.f32 %v2112, 0.0
        %v2119 = vmul.f32 %v2118, 1.442695
        %v2120 = vpow.pop %v2119
        %v2121 = vsub.f32 %v2120, 1.0
        %v2122 = vsel %vm2117, %v2112, %v2121
        %v2123 = vpack.c.bf16 %v2122, %v2122
        %v2124 = vld [vmem:[%s21] sm:$0xf]
        %v2125 = vld [vmem:[%s21 + $0x4] sm:$0xf]
        %v2126 = vld [vmem:[%s22] sm:$0x1]
        %v2128 = vlaneseq
        %v2129 = vshrl.u32 %v2128, 7
        %v2130 = vsub.s32 0, %v2129
        %v2131 = vrot.slane %v2126, %v2130
        %v2135 = vunpack.c.l.b16 %v2124
        %v2136 = vunpack.c.l.b16 %v2125
        %v2137 = vpack.c.b16 %v2136, %v2135
        %vm2139 = vcmask 130048
        %v2141 = vsel %vm2139, %v2123, 0
        %2143 = vmatprep.subr.bf16.mxu0 0
        %2144 = vmatpush1.bf16.msra.mxu0 %v2137
        %2145 = vmatprep.subr.bf16.mxu0 0
        %2146 = vmatpush1.bf16.msra.mxu0 0
        %2147 = vmatprep.subr.bf16.mxu0 0
        %2148 = vmatpush1.bf16.msra.mxu0 0
        %2149 = vmatprep.subr.bf16.mxu0 0
        %2150 = vmatpush1.bf16.msra.mxu0 0
        %2151 = vmatprep.subr.bf16.mxu0 0
        %2152 = vmatpush1.bf16.msra.mxu0 0
        %2153 = vmatprep.subr.bf16.mxu0 0
        %2154 = vmatpush1.bf16.msra.mxu0 0
        %2155 = vmatprep.subr.bf16.mxu0 0
        %2156 = vmatpush1.bf16.msra.mxu0 0
        %2157 = vmatprep.subr.bf16.mxu0 0
        %2158 = vmatpush1.bf16.msra.mxu0 0
        %2159 = vmatprep.subr.bf16.mxu0 0
        %2160 = vmatpush1.bf16.msra.mxu0 0
        %2161 = vmatprep.subr.bf16.mxu0 0
        %2162 = vmatpush1.bf16.msra.mxu0 0
        %2163 = vmatprep.subr.bf16.mxu0 0
        %2164 = vmatpush1.bf16.msra.mxu0 0
        %2165 = vmatprep.subr.bf16.mxu0 0
        %2166 = vmatpush1.bf16.msra.mxu0 0
        %2167 = vmatprep.subr.bf16.mxu0 0
        %2168 = vmatpush1.bf16.msra.mxu0 0
        %2169 = vmatprep.subr.bf16.mxu0 0
        %2170 = vmatpush1.bf16.msra.mxu0 0
        %2171 = vmatprep.subr.bf16.mxu0 0
        %2172 = vmatpush1.bf16.msra.mxu0 0
        %2173 = vmatprep.subr.bf16.mxu0 0
        %2174 = vmatpush1.bf16.msra.mxu0 0
        %2175 = vmatprep.mubr.bf16.mxu0 0
        %2176 = vmatmul.mubr.bf16.gmra.mrb[0].mxu0 %v2141
        %v2177 = vpop.f32.mrb[0].mxu0
        %v2178 = vadd.f32 %v2131, %v2177
        %v2179 = vpop.f32.mrb[0].mxu0
        %v2180 = vpop.f32.mrb[0].mxu0
        %v2181 = vpop.f32.mrb[0].mxu0
        %2182 = vdwg.mxu0
        %v2183 = vadd.f32 %v1896, %v2049
        %v2184 = vadd.f32 %v2183, %v2178
        %v2185 = vld [vmem:[%s23] sm:$0x1]
        %v2186 = vld [vmem:[%s24] sm:$0x1]
        %v2187 = vsel %vm1015, %v2184, 0.0
        %2188 = vadd.xlane.f32.xlu0 %v2187
        %v2189 = vpop.xlane.xlu0 %2188
        %v2190 = vmul.f32 %v2189, %v1872
        %v2191 = vsub.f32 %v2184, %v2190
        %v2192 = vmul.f32 %v2191, %v2191
        %v2193 = vsel %vm1015, %v2192, 0.0
        %2194 = vadd.xlane.f32.xlu0 %v2193
        %v2195 = vpop.xlane.xlu0 %2194
        %v2196 = vmul.f32 %v2195, %v1872
        %v2197 = vadd.f32 %v2196, 1e-05
        %v2198 = vrsqrt.pop %v2197
        %v2199 = vmul.f32 %v2191, %v2198
        %v2201 = vlaneseq
        %v2202 = vshrl.u32 %v2201, 7
        %v2203 = vsub.s32 0, %v2202
        %v2204 = vrot.slane %v2185, %v2203
        %v2206 = vmul.f32 %v2199, %v2204
        %v2208 = vlaneseq
        %v2209 = vshrl.u32 %v2208, 7
        %v2210 = vsub.s32 0, %v2209
        %v2211 = vrot.slane %v2186, %v2210
        %v2213 = vadd.f32 %v2206, %v2211
        %2214 = vst.msk [vmem:[%s769] sm:$0xff] %vm1015, %v2213
        %s2215 = sand.u32 %s591, 1
        %s2216 = scalar_lea.sflag [#allocation5], %s2215
        %s2217 = sand.u32 %s591, 1
        %s2218 = smul.addr %s2217, 8
        %s2219 = scalar_lea.vmem [#allocation4], %s2218
        // Predicated region
        $region125: #{tpu_custom_call.1} parent=119 // pred_check
          %p2220 = pneg %p601
        $region126: #{tpu_custom_call.1} parent=119 // pred_check_branch
          %2222 = sbr.rel (%p2220) target = $region128
        $region127: #{tpu_custom_call.1} parent=119 // pred_region
          %s2224 = ssub.s32 128, 128
          %2225 = vsyncadd %s2216, %s2224
          %s2226 = sadd.s32 %s44, %s43
          %s2227 = smul.addr %s2226, 128
          %s2228 = scalar_lea.hbm %s25, %s2227
          %s2230 = sshll.u32 %s2219, 4
          %s2231 = int_to_ptr.vmem [resolvable:$true] %s2230
          %2233 = dma.vmem_to_hbm [thread:$0]  %s2231, 128, %s2228, %s2216
        $region128: #{tpu_custom_call.1} parent=119 // pred_fallthru
          _
      $region120: #{tpu_custom_call.1} parent=5 // pred_fallthru
        _
      %p2234 = scmp.le.s32.totalorder 2, %s34
      // Predicated region
      $region129: #{tpu_custom_call.1} parent=5 // pred_check
        %p2235 = pneg %p2234
      $region130: #{tpu_custom_call.1} parent=5 // pred_check_branch
        %2237 = sbr.rel (%p2235) target = $region132
      $region131: #{tpu_custom_call.1} parent=5 // pred_region
        %s2238 = ssub.s32 %s34, 2
        // Predicated region
        $region133: #{tpu_custom_call.1} parent=131 // pred_check
          %p2239 = pneg %p607
        $region134: #{tpu_custom_call.1} parent=131 // pred_check_branch
          %2241 = sbr.rel (%p2239) target = $region136
        $region135: #{tpu_custom_call.1} parent=131 // pred_region
          %s2242 = sand.u32 %s592, 1
          %s2243 = scalar_lea.sflag [#allocation5], %s2242
          %s2244 = sand.u32 %s592, 1
          %s2245 = smul.addr %s2244, 8
          %s2246 = scalar_lea.vmem [#allocation4], %s2245
          %2247 = dma.done %s2243, 128
        $region136: #{tpu_custom_call.1} parent=131 // pred_fallthru
          _
      $region132: #{tpu_custom_call.1} parent=5 // pred_fallthru
        _
    $region6: #{tpu_custom_call.1} parent=1 // loop_footer
      %s38 = sadd.s32 1, %s34
    $region7: #{tpu_custom_call.1} parent=1 // loop_footer_branch
      %33 = sbr.rel target = $region3
    $region8: #{tpu_custom_call.1} parent=1 // loop_exit
      _
    %2248 = vsyncpa [#allocation5], 1
    %s2249 = scalar_lea.sflag [#allocation5], 1
    %2250 = vsyncpa %s2249, 1

// kernel: tpu_custom_call.1
$region0: #{tpu_custom_call.1}
  #allocation0 [shape = 'u32[]', space=smem, size = 0x4, offset = 0x4, fixed_abs, tag = 'smem constant byte address 0x4 - core index']
  #allocation1 [shape = 'u32[144,128]{1,0:T(1,128)}', space=vmem, size = 0x12000, scoped, tag = 'internal scratch']
  #allocation2 [shape = 'bf16[4,8,8]{2,1,0:T(8,128)(2,1)}', space=vmem, size = 0x2000, scoped, tag = 'scratch operand']
  #allocation3 [shape = 'bf16[4,8,8]{2,1,0:T(8,128)(2,1)}', space=vmem, size = 0x2000, scoped, tag = 'scratch operand']
  %s0 = inlined_call_operand.vmem [shape: f32[2,8,32], index: 0, kind: input, shape index: {}]
  %s1 = inlined_call_operand.vmem [shape: bf16[4,8,8], index: 1, kind: input, shape index: {}]
  %s2 = inlined_call_operand.vmem [shape: bf16[32,32], index: 2, kind: input, shape index: {}]
  %s3 = inlined_call_operand.vmem [shape: f32[1,32], index: 3, kind: input, shape index: {}]
  %s4 = inlined_call_operand.vmem [shape: bf16[32,32], index: 4, kind: input, shape index: {}]
  %s5 = inlined_call_operand.vmem [shape: f32[32,1], index: 5, kind: input, shape index: {}]
  %s6 = inlined_call_operand.vmem [shape: bf16[32,32], index: 6, kind: input, shape index: {}]
  %s7 = inlined_call_operand.vmem [shape: f32[32,1], index: 7, kind: input, shape index: {}]
  %s8 = inlined_call_operand.vmem [shape: bf16[4,8,32], index: 8, kind: input, shape index: {}]
  %s9 = inlined_call_operand.vmem [shape: f32[1,32], index: 9, kind: input, shape index: {}]
  %s10 = inlined_call_operand.vmem [shape: bf16[32,8], index: 10, kind: input, shape index: {}]
  %s11 = inlined_call_operand.vmem [shape: f32[1,8], index: 11, kind: input, shape index: {}]
  %s12 = inlined_call_operand.vmem [shape: f32[1,4], index: 12, kind: input, shape index: {}]
  %s13 = inlined_call_operand.vmem [shape: f32[1,32], index: 13, kind: input, shape index: {}]
  %s14 = inlined_call_operand.vmem [shape: f32[1,32], index: 14, kind: input, shape index: {}]
  %s15 = inlined_call_operand.vmem [shape: bf16[32,64], index: 15, kind: input, shape index: {}]
  %s16 = inlined_call_operand.vmem [shape: f32[1,64], index: 16, kind: input, shape index: {}]
  %s17 = inlined_call_operand.vmem [shape: bf16[64,32], index: 17, kind: input, shape index: {}]
  %s18 = inlined_call_operand.vmem [shape: f32[1,32], index: 18, kind: input, shape index: {}]
  %s19 = inlined_call_operand.vmem [shape: bf16[32,16], index: 19, kind: input, shape index: {}]
  %s20 = inlined_call_operand.vmem [shape: f32[1,16], index: 20, kind: input, shape index: {}]
  %s21 = inlined_call_operand.vmem [shape: bf16[16,32], index: 21, kind: input, shape index: {}]
  %s22 = inlined_call_operand.vmem [shape: f32[1,32], index: 22, kind: input, shape index: {}]
  %s23 = inlined_call_operand.vmem [shape: f32[1,32], index: 23, kind: input, shape index: {}]
  %s24 = inlined_call_operand.vmem [shape: f32[1,32], index: 24, kind: input, shape index: {}]
  %s25 = inlined_call_operand.hbm [shape: f32[2,8,32], index: 25, kind: output, shape index: {}]
  %s26 = sld [smem:[#allocation0]]
  $region137: #{tpu_custom_call.1} parent=0
    _
  %s28 = ssub.s32 1, %s26
  %s29 = scalar_select 0, %s28, %s26
  $region1: #{tpu_custom_call.1} parent=0
    #allocation4 [shape = 'u8[8192]{0}', space=vmem, size = 0x2000, scoped, tag = 'output window, operand 0']
    #allocation5 [shape = 's32[2]{0}', space=sflag, size = 0x8, scoped, tag = 'scoped memory for tpu_custom_call.1']
    %30 = vsyncpa [#allocation5], 0
    %s31 = scalar_lea.sflag [#allocation5], 1
    %32 = vsyncpa %s31, 0
    loop: start=0, step=1, limit=4
    $region2: #{tpu_custom_call.1} parent=1 // loop_pre_header
      _
    $region3: #{tpu_custom_call.1} parent=1 // loop_header
      %s34 = sphi 0, %s38
      %p35 = scmp.ge.s32.totalorder %s34, 4
      %s41 = sphi 0, %s53
      %s42 = sphi 0, %s49
      %s43 = sphi 0, %s41
      %s44 = sphi 0, %s42
      %s45 = sphi 0, %s43
      %s46 = sphi 0, %s44
      %s56 = sphi 0, %s58
      %s59 = sphi 0, %s56
      %s60 = sphi 0, %s59
      %s76 = sphi 0, %s60
      %s80 = sphi 0, %s80
      %s82 = sphi 0, %s80
      %s83 = sphi 0, %s82
      %s97 = sphi 0, %s83
      %s101 = sphi 0, %s101
      %s103 = sphi 0, %s101
      %s104 = sphi 0, %s103
      %s118 = sphi 0, %s104
      %s122 = sphi 0, %s122
      %s124 = sphi 0, %s122
      %s125 = sphi 0, %s124
      %s139 = sphi 0, %s125
      %s143 = sphi 0, %s143
      %s145 = sphi 0, %s143
      %s146 = sphi 0, %s145
      %s160 = sphi 0, %s146
      %s164 = sphi 0, %s164
      %s166 = sphi 0, %s164
      %s167 = sphi 0, %s166
      %s181 = sphi 0, %s167
      %s185 = sphi 0, %s185
      %s187 = sphi 0, %s185
      %s188 = sphi 0, %s187
      %s202 = sphi 0, %s188
      %s206 = sphi 0, %s206
      %s208 = sphi 0, %s206
      %s209 = sphi 0, %s208
      %s223 = sphi 0, %s209
      %s227 = sphi 0, %s227
      %s229 = sphi 0, %s227
      %s230 = sphi 0, %s229
      %s244 = sphi 0, %s230
      %s248 = sphi 0, %s248
      %s250 = sphi 0, %s248
      %s251 = sphi 0, %s250
      %s265 = sphi 0, %s251
      %s269 = sphi 0, %s269
      %s271 = sphi 0, %s269
      %s272 = sphi 0, %s271
      %s286 = sphi 0, %s272
      %s290 = sphi 0, %s290
      %s292 = sphi 0, %s290
      %s293 = sphi 0, %s292
      %s307 = sphi 0, %s293
      %s311 = sphi 0, %s311
      %s313 = sphi 0, %s311
      %s314 = sphi 0, %s313
      %s328 = sphi 0, %s314
      %s332 = sphi 0, %s332
      %s334 = sphi 0, %s332
      %s335 = sphi 0, %s334
      %s349 = sphi 0, %s335
      %s353 = sphi 0, %s353
      %s355 = sphi 0, %s353
      %s356 = sphi 0, %s355
      %s370 = sphi 0, %s356
      %s374 = sphi 0, %s374
      %s376 = sphi 0, %s374
      %s377 = sphi 0, %s376
      %s391 = sphi 0, %s377
      %s395 = sphi 0, %s395
      %s397 = sphi 0, %s395
      %s398 = sphi 0, %s397
      %s412 = sphi 0, %s398
      %s416 = sphi 0, %s416
      %s418 = sphi 0, %s416
      %s419 = sphi 0, %s418
      %s433 = sphi 0, %s419
      %s437 = sphi 0, %s437
      %s439 = sphi 0, %s437
      %s440 = sphi 0, %s439
      %s454 = sphi 0, %s440
      %s458 = sphi 0, %s458
      %s460 = sphi 0, %s458
      %s461 = sphi 0, %s460
      %s475 = sphi 0, %s461
      %s479 = sphi 0, %s479
      %s481 = sphi 0, %s479
      %s482 = sphi 0, %s481
      %s496 = sphi 0, %s482
      %s500 = sphi 0, %s500
      %s502 = sphi 0, %s500
      %s503 = sphi 0, %s502
      %s517 = sphi 0, %s503
      %s521 = sphi 0, %s521
      %s523 = sphi 0, %s521
      %s524 = sphi 0, %s523
      %s538 = sphi 0, %s524
      %s542 = sphi 0, %s542
      %s544 = sphi 0, %s542
      %s545 = sphi 0, %s544
      %s559 = sphi 0, %s545
      %s563 = sphi 0, %s563
      %s565 = sphi 0, %s563
      %s566 = sphi 0, %s565
      %s580 = sphi 0, %s566
      %s588 = sphi 0, %s590
      %s591 = sphi 0, %s588
      %s592 = sphi 0, %s591
      %s608 = sphi 0, %s592
    $region4: #{tpu_custom_call.1} parent=1 // loop_header_branch
      %37 = sbr.rel (%p35) target = $region8
    $region5: #{tpu_custom_call.1} parent=1 // loop_body
      %s39 = ssub.s32 %s34, 1
      %s40 = ssub.s32 %s34, 2
      %s47 = sadd.s32 1, %s42
      %p48 = scmp.ge.s32.totalorder %s47, 1
      %s49 = scalar_select %p48, 0, %s47
      %s50 = sadd.s32 1, %s41
      %s51 = scalar_select %p48, %s50, %s41
      %p52 = scmp.ge.s32.totalorder %s51, 2
      %s53 = scalar_select %p52, 0, %s51
      %s54 = ssub.s32 %s41, %s53
      %p55 = scmp.eq.s32.totalorder %s54, 0
      %s57 = sadd.s32 %s56, 1
      %s58 = scalar_select %p55, %s56, %s57
      %p61 = pneg %p55
      %p62 = scmp.eq.s32.totalorder %s34, 1
      %p63 = por %p61, %p62
      %p64 = scmp.ne.s32.totalorder %s56, %s59
      %p65 = scmp.eq.s32.totalorder %s34, 0
      %p66 = por %p64, %p65
      %p67 = scmp.ne.s32.totalorder %s56, %s59
      %p68 = scmp.eq.s32.totalorder %s39, 1
      %p69 = por %p67, %p68
      %p70 = scmp.ne.s32.totalorder %s59, %s60
      %p71 = scmp.eq.s32.totalorder %s39, 0
      %p72 = por %p70, %p71
      %p73 = scmp.ne.s32.totalorder %s59, %s60
      %p74 = scmp.eq.s32.totalorder %s40, 1
      %p75 = por %p73, %p74
      %p77 = scmp.ne.s32.totalorder %s60, %s76
      %p78 = scmp.eq.s32.totalorder %s40, 0
      %p79 = por %p77, %p78
      %s81 = sadd.s32 %s80, 1
      %p84 = scmp.eq.s32.totalorder %s34, 1
      %p85 = scmp.ne.s32.totalorder %s80, %s82
      %p86 = scmp.eq.s32.totalorder %s34, 0
      %p87 = por %p85, %p86
      %p88 = scmp.ne.s32.totalorder %s80, %s82
      %p89 = scmp.eq.s32.totalorder %s39, 1
      %p90 = por %p88, %p89
      %p91 = scmp.ne.s32.totalorder %s82, %s83
      %p92 = scmp.eq.s32.totalorder %s39, 0
      %p93 = por %p91, %p92
      %p94 = scmp.ne.s32.totalorder %s82, %s83
      %p95 = scmp.eq.s32.totalorder %s40, 1
      %p96 = por %p94, %p95
      %p98 = scmp.ne.s32.totalorder %s83, %s97
      %p99 = scmp.eq.s32.totalorder %s40, 0
      %p100 = por %p98, %p99
      %s102 = sadd.s32 %s101, 1
      %p105 = scmp.eq.s32.totalorder %s34, 1
      %p106 = scmp.ne.s32.totalorder %s101, %s103
      %p107 = scmp.eq.s32.totalorder %s34, 0
      %p108 = por %p106, %p107
      %p109 = scmp.ne.s32.totalorder %s101, %s103
      %p110 = scmp.eq.s32.totalorder %s39, 1
      %p111 = por %p109, %p110
      %p112 = scmp.ne.s32.totalorder %s103, %s104
      %p113 = scmp.eq.s32.totalorder %s39, 0
      %p114 = por %p112, %p113
      %p115 = scmp.ne.s32.totalorder %s103, %s104
      %p116 = scmp.eq.s32.totalorder %s40, 1
      %p117 = por %p115, %p116
      %p119 = scmp.ne.s32.totalorder %s104, %s118
      %p120 = scmp.eq.s32.totalorder %s40, 0
      %p121 = por %p119, %p120
      %s123 = sadd.s32 %s122, 1
      %p126 = scmp.eq.s32.totalorder %s34, 1
      %p127 = scmp.ne.s32.totalorder %s122, %s124
      %p128 = scmp.eq.s32.totalorder %s34, 0
      %p129 = por %p127, %p128
      %p130 = scmp.ne.s32.totalorder %s122, %s124
      %p131 = scmp.eq.s32.totalorder %s39, 1
      %p132 = por %p130, %p131
      %p133 = scmp.ne.s32.totalorder %s124, %s125
      %p134 = scmp.eq.s32.totalorder %s39, 0
      %p135 = por %p133, %p134
      %p136 = scmp.ne.s32.totalorder %s124, %s125
      %p137 = scmp.eq.s32.totalorder %s40, 1
      %p138 = por %p136, %p137
      %p140 = scmp.ne.s32.totalorder %s125, %s139
      %p141 = scmp.eq.s32.totalorder %s40, 0
      %p142 = por %p140, %p141
      %s144 = sadd.s32 %s143, 1
      %p147 = scmp.eq.s32.totalorder %s34, 1
      %p148 = scmp.ne.s32.totalorder %s143, %s145
      %p149 = scmp.eq.s32.totalorder %s34, 0
      %p150 = por %p148, %p149
      %p151 = scmp.ne.s32.totalorder %s143, %s145
      %p152 = scmp.eq.s32.totalorder %s39, 1
      %p153 = por %p151, %p152
      %p154 = scmp.ne.s32.totalorder %s145, %s146
      %p155 = scmp.eq.s32.totalorder %s39, 0
      %p156 = por %p154, %p155
      %p157 = scmp.ne.s32.totalorder %s145, %s146
      %p158 = scmp.eq.s32.totalorder %s40, 1
      %p159 = por %p157, %p158
      %p161 = scmp.ne.s32.totalorder %s146, %s160
      %p162 = scmp.eq.s32.totalorder %s40, 0
      %p163 = por %p161, %p162
      %s165 = sadd.s32 %s164, 1
      %p168 = scmp.eq.s32.totalorder %s34, 1
      %p169 = scmp.ne.s32.totalorder %s164, %s166
      %p170 = scmp.eq.s32.totalorder %s34, 0
      %p171 = por %p169, %p170
      %p172 = scmp.ne.s32.totalorder %s164, %s166
      %p173 = scmp.eq.s32.totalorder %s39, 1
      %p174 = por %p172, %p173
      %p175 = scmp.ne.s32.totalorder %s166, %s167
      %p176 = scmp.eq.s32.totalorder %s39, 0
      %p177 = por %p175, %p176
      %p178 = scmp.ne.s32.totalorder %s166, %s167
      %p179 = scmp.eq.s32.totalorder %s40, 1
      %p180 = por %p178, %p179
      %p182 = scmp.ne.s32.totalorder %s167, %s181
      %p183 = scmp.eq.s32.totalorder %s40, 0
      %p184 = por %p182, %p183
      %s186 = sadd.s32 %s185, 1
      %p189 = scmp.eq.s32.totalorder %s34, 1
      %p190 = scmp.ne.s32.totalorder %s185, %s187
      %p191 = scmp.eq.s32.totalorder %s34, 0
      %p192 = por %p190, %p191
      %p193 = scmp.ne.s32.totalorder %s185, %s187
      %p194 = scmp.eq.s32.totalorder %s39, 1
      %p195 = por %p193, %p194
      %p196 = scmp.ne.s32.totalorder %s187, %s188
      %p197 = scmp.eq.s32.totalorder %s39, 0
      %p198 = por %p196, %p197
      %p199 = scmp.ne.s32.totalorder %s187, %s188
      %p200 = scmp.eq.s32.totalorder %s40, 1
      %p201 = por %p199, %p200
      %p203 = scmp.ne.s32.totalorder %s188, %s202
      %p204 = scmp.eq.s32.totalorder %s40, 0
      %p205 = por %p203, %p204
      %s207 = sadd.s32 %s206, 1
      %p210 = scmp.eq.s32.totalorder %s34, 1
      %p211 = scmp.ne.s32.totalorder %s206, %s208
      %p212 = scmp.eq.s32.totalorder %s34, 0
      %p213 = por %p211, %p212
      %p214 = scmp.ne.s32.totalorder %s206, %s208
      %p215 = scmp.eq.s32.totalorder %s39, 1
      %p216 = por %p214, %p215
      %p217 = scmp.ne.s32.totalorder %s208, %s209
      %p218 = scmp.eq.s32.totalorder %s39, 0
      %p219 = por %p217, %p218
      %p220 = scmp.ne.s32.totalorder %s208, %s209
      %p221 = scmp.eq.s32.totalorder %s40, 1
      %p222 = por %p220, %p221
      %p224 = scmp.ne.s32.totalorder %s209, %s223
      %p225 = scmp.eq.s32.totalorder %s40, 0
      %p226 = por %p224, %p225
      %s228 = sadd.s32 %s227, 1
      %p231 = scmp.eq.s32.totalorder %s34, 1
      %p232 = scmp.ne.s32.totalorder %s227, %s229
      %p233 = scmp.eq.s32.totalorder %s34, 0
      %p234 = por %p232, %p233
      %p235 = scmp.ne.s32.totalorder %s227, %s229
      %p236 = scmp.eq.s32.totalorder %s39, 1
      %p237 = por %p235, %p236
      %p238 = scmp.ne.s32.totalorder %s229, %s230
      %p239 = scmp.eq.s32.totalorder %s39, 0
      %p240 = por %p238, %p239
      %p241 = scmp.ne.s32.totalorder %s229, %s230
      %p242 = scmp.eq.s32.totalorder %s40, 1
      %p243 = por %p241, %p242
      %p245 = scmp.ne.s32.totalorder %s230, %s244
      %p246 = scmp.eq.s32.totalorder %s40, 0
      %p247 = por %p245, %p246
      %s249 = sadd.s32 %s248, 1
      %p252 = scmp.eq.s32.totalorder %s34, 1
      %p253 = scmp.ne.s32.totalorder %s248, %s250
      %p254 = scmp.eq.s32.totalorder %s34, 0
      %p255 = por %p253, %p254
      %p256 = scmp.ne.s32.totalorder %s248, %s250
      %p257 = scmp.eq.s32.totalorder %s39, 1
      %p258 = por %p256, %p257
      %p259 = scmp.ne.s32.totalorder %s250, %s251
      %p260 = scmp.eq.s32.totalorder %s39, 0
      %p261 = por %p259, %p260
      %p262 = scmp.ne.s32.totalorder %s250, %s251
      %p263 = scmp.eq.s32.totalorder %s40, 1
      %p264 = por %p262, %p263
      %p266 = scmp.ne.s32.totalorder %s251, %s265
      %p267 = scmp.eq.s32.totalorder %s40, 0
      %p268 = por %p266, %p267
      %s270 = sadd.s32 %s269, 1
      %p273 = scmp.eq.s32.totalorder %s34, 1
      %p274 = scmp.ne.s32.totalorder %s269, %s271
      %p275 = scmp.eq.s32.totalorder %s34, 0
      %p276 = por %p274, %p275
      %p277 = scmp.ne.s32.totalorder %s269, %s271
      %p278 = scmp.eq.s32.totalorder %s39, 1
      %p279 = por %p277, %p278
      %p280 = scmp.ne.s32.totalorder %s271, %s272
      %p281 = scmp.eq.s32.totalorder %s39, 0
      %p282 = por %p280, %p281
      %p283 = scmp.ne.s32.totalorder %s271, %s272
      %p284 = scmp.eq.s32.totalorder %s40, 1
      %p285 = por %p283, %p284
      %p287 = scmp.ne.s32.totalorder %s272, %s286
      %p288 = scmp.eq.s32.totalorder %s40, 0
      %p289 = por %p287, %p288
      %s291 = sadd.s32 %s290, 1
      %p294 = scmp.eq.s32.totalorder %s34, 1
      %p295 = scmp.ne.s32.totalorder %s290, %s292
      %p296 = scmp.eq.s32.totalorder %s34, 0
      %p297 = por %p295, %p296
      %p298 = scmp.ne.s32.totalorder %s290, %s292
      %p299 = scmp.eq.s32.totalorder %s39, 1
      %p300 = por %p298, %p299
      %p301 = scmp.ne.s32.totalorder %s292, %s293
      %p302 = scmp.eq.s32.totalorder %s39, 0
      %p303 = por %p301, %p302
      %p304 = scmp.ne.s32.totalorder %s292, %s293
      %p305 = scmp.eq.s32.totalorder %s40, 1
      %p306 = por %p304, %p305
      %p308 = scmp.ne.s32.totalorder %s293, %s307
      %p309 = scmp.eq.s32.totalorder %s40, 0
      %p310 = por %p308, %p309
      %s312 = sadd.s32 %s311, 1
      %p315 = scmp.eq.s32.totalorder %s34, 1
      %p316 = scmp.ne.s32.totalorder %s311, %s313
      %p317 = scmp.eq.s32.totalorder %s34, 0
      %p318 = por %p316, %p317
      %p319 = scmp.ne.s32.totalorder %s311, %s313
      %p320 = scmp.eq.s32.totalorder %s39, 1
      %p321 = por %p319, %p320
      %p322 = scmp.ne.s32.totalorder %s313, %s314
      %p323 = scmp.eq.s32.totalorder %s39, 0
      %p324 = por %p322, %p323
      %p325 = scmp.ne.s32.totalorder %s313, %s314
      %p326 = scmp.eq.s32.totalorder %s40, 1
      %p327 = por %p325, %p326
      %p329 = scmp.ne.s32.totalorder %s314, %s328
      %p330 = scmp.eq.s32.totalorder %s40, 0
      %p331 = por %p329, %p330
      %s333 = sadd.s32 %s332, 1
      %p336 = scmp.eq.s32.totalorder %s34, 1
      %p337 = scmp.ne.s32.totalorder %s332, %s334
      %p338 = scmp.eq.s32.totalorder %s34, 0
      %p339 = por %p337, %p338
      %p340 = scmp.ne.s32.totalorder %s332, %s334
      %p341 = scmp.eq.s32.totalorder %s39, 1
      %p342 = por %p340, %p341
      %p343 = scmp.ne.s32.totalorder %s334, %s335
      %p344 = scmp.eq.s32.totalorder %s39, 0
      %p345 = por %p343, %p344
      %p346 = scmp.ne.s32.totalorder %s334, %s335
      %p347 = scmp.eq.s32.totalorder %s40, 1
      %p348 = por %p346, %p347
      %p350 = scmp.ne.s32.totalorder %s335, %s349
      %p351 = scmp.eq.s32.totalorder %s40, 0
      %p352 = por %p350, %p351
      %s354 = sadd.s32 %s353, 1
      %p357 = scmp.eq.s32.totalorder %s34, 1
      %p358 = scmp.ne.s32.totalorder %s353, %s355
      %p359 = scmp.eq.s32.totalorder %s34, 0
      %p360 = por %p358, %p359
      %p361 = scmp.ne.s32.totalorder %s353, %s355
      %p362 = scmp.eq.s32.totalorder %s39, 1
      %p363 = por %p361, %p362
      %p364 = scmp.ne.s32.totalorder %s355, %s356
      %p365 = scmp.eq.s32.totalorder %s39, 0
      %p366 = por %p364, %p365
      %p367 = scmp.ne.s32.totalorder %s355, %s356
      %p368 = scmp.eq.s32.totalorder %s40, 1
      %p369 = por %p367, %p368
      %p371 = scmp.ne.s32.totalorder %s356, %s370
      %p372 = scmp.eq.s32.totalorder %s40, 0
      %p373 = por %p371, %p372
      %s375 = sadd.s32 %s374, 1
      %p378 = scmp.eq.s32.totalorder %s34, 1
      %p379 = scmp.ne.s32.totalorder %s374, %s376
      %p380 = scmp.eq.s32.totalorder %s34, 0
      %p381 = por %p379, %p380
      %p382 = scmp.ne.s32.totalorder %s374, %s376
      %p383 = scmp.eq.s32.totalorder %s39, 1
      %p384 = por %p382, %p383
      %p385 = scmp.ne.s32.totalorder %s376, %s377
      %p386 = scmp.eq.s32.totalorder %s39, 0
      %p387 = por %p385, %p386
      %p388 = scmp.ne.s32.totalorder %s376, %s377
      %p389 = scmp.eq.s32.totalorder %s40, 1
      %p390 = por %p388, %p389
      %p392 = scmp.ne.s32.totalorder %s377, %s391
      %p393 = scmp.eq.s32.totalorder %s40, 0
      %p394 = por %p392, %p393
      %s396 = sadd.s32 %s395, 1
      %p399 = scmp.eq.s32.totalorder %s34, 1
      %p400 = scmp.ne.s32.totalorder %s395, %s397
      %p401 = scmp.eq.s32.totalorder %s34, 0
      %p402 = por %p400, %p401
      %p403 = scmp.ne.s32.totalorder %s395, %s397
      %p404 = scmp.eq.s32.totalorder %s39, 1
      %p405 = por %p403, %p404
      %p406 = scmp.ne.s32.totalorder %s397, %s398
      %p407 = scmp.eq.s32.totalorder %s39, 0
      %p408 = por %p406, %p407
      %p409 = scmp.ne.s32.totalorder %s397, %s398
      %p410 = scmp.eq.s32.totalorder %s40, 1
      %p411 = por %p409, %p410
      %p413 = scmp.ne.s32.totalorder %s398, %s412
      %p414 = scmp.eq.s32.totalorder %s40, 0
      %p415 = por %p413, %p414
      %s417 = sadd.s32 %s416, 1
      %p420 = scmp.eq.s32.totalorder %s34, 1
      %p421 = scmp.ne.s32.totalorder %s416, %s418
      %p422 = scmp.eq.s32.totalorder %s34, 0
      %p423 = por %p421, %p422
      %p424 = scmp.ne.s32.totalorder %s416, %s418
      %p425 = scmp.eq.s32.totalorder %s39, 1
      %p426 = por %p424, %p425
      %p427 = scmp.ne.s32.totalorder %s418, %s419
      %p428 = scmp.eq.s32.totalorder %s39, 0
      %p429 = por %p427, %p428
      %p430 = scmp.ne.s32.totalorder %s418, %s419
      %p431 = scmp.eq.s32.totalorder %s40, 1
      %p432 = por %p430, %p431
      %p434 = scmp.ne.s32.totalorder %s419, %s433
      %p435 = scmp.eq.s32.totalorder %s40, 0
      %p436 = por %p434, %p435
      %s438 = sadd.s32 %s437, 1
      %p441 = scmp.eq.s32.totalorder %s34, 1
      %p442 = scmp.ne.s32.totalorder %s437, %s439
      %p443 = scmp.eq.s32.totalorder %s34, 0
      %p444 = por %p442, %p443
      %p445 = scmp.ne.s32.totalorder %s437, %s439
      %p446 = scmp.eq.s32.totalorder %s39, 1
      %p447 = por %p445, %p446
      %p448 = scmp.ne.s32.totalorder %s439, %s440
      %p449 = scmp.eq.s32.totalorder %s39, 0
      %p450 = por %p448, %p449
      %p451 = scmp.ne.s32.totalorder %s439, %s440
      %p452 = scmp.eq.s32.totalorder %s40, 1
      %p453 = por %p451, %p452
      %p455 = scmp.ne.s32.totalorder %s440, %s454
      %p456 = scmp.eq.s32.totalorder %s40, 0
      %p457 = por %p455, %p456
      %s459 = sadd.s32 %s458, 1
      %p462 = scmp.eq.s32.totalorder %s34, 1
      %p463 = scmp.ne.s32.totalorder %s458, %s460
      %p464 = scmp.eq.s32.totalorder %s34, 0
      %p465 = por %p463, %p464
      %p466 = scmp.ne.s32.totalorder %s458, %s460
      %p467 = scmp.eq.s32.totalorder %s39, 1
      %p468 = por %p466, %p467
      %p469 = scmp.ne.s32.totalorder %s460, %s461
      %p470 = scmp.eq.s32.totalorder %s39, 0
      %p471 = por %p469, %p470
      %p472 = scmp.ne.s32.totalorder %s460, %s461
      %p473 = scmp.eq.s32.totalorder %s40, 1
      %p474 = por %p472, %p473
      %p476 = scmp.ne.s32.totalorder %s461, %s475
      %p477 = scmp.eq.s32.totalorder %s40, 0
      %p478 = por %p476, %p477
      %s480 = sadd.s32 %s479, 1
      %p483 = scmp.eq.s32.totalorder %s34, 1
      %p484 = scmp.ne.s32.totalorder %s479, %s481
      %p485 = scmp.eq.s32.totalorder %s34, 0
      %p486 = por %p484, %p485
      %p487 = scmp.ne.s32.totalorder %s479, %s481
      %p488 = scmp.eq.s32.totalorder %s39, 1
      %p489 = por %p487, %p488
      %p490 = scmp.ne.s32.totalorder %s481, %s482
      %p491 = scmp.eq.s32.totalorder %s39, 0
      %p492 = por %p490, %p491
      %p493 = scmp.ne.s32.totalorder %s481, %s482
      %p494 = scmp.eq.s32.totalorder %s40, 1
      %p495 = por %p493, %p494
      %p497 = scmp.ne.s32.totalorder %s482, %s496
      %p498 = scmp.eq.s32.totalorder %s40, 0
      %p499 = por %p497, %p498
      %s501 = sadd.s32 %s500, 1
      %p504 = scmp.eq.s32.totalorder %s34, 1
      %p505 = scmp.ne.s32.totalorder %s500, %s502
      %p506 = scmp.eq.s32.totalorder %s34, 0
      %p507 = por %p505, %p506
      %p508 = scmp.ne.s32.totalorder %s500, %s502
      %p509 = scmp.eq.s32.totalorder %s39, 1
      %p510 = por %p508, %p509
      %p511 = scmp.ne.s32.totalorder %s502, %s503
      %p512 = scmp.eq.s32.totalorder %s39, 0
      %p513 = por %p511, %p512
      %p514 = scmp.ne.s32.totalorder %s502, %s503
      %p515 = scmp.eq.s32.totalorder %s40, 1
      %p516 = por %p514, %p515
      %p518 = scmp.ne.s32.totalorder %s503, %s517
      %p519 = scmp.eq.s32.totalorder %s40, 0
      %p520 = por %p518, %p519
      %s522 = sadd.s32 %s521, 1
      %p525 = scmp.eq.s32.totalorder %s34, 1
      %p526 = scmp.ne.s32.totalorder %s521, %s523
      %p527 = scmp.eq.s32.totalorder %s34, 0
      %p528 = por %p526, %p527
      %p529 = scmp.ne.s32.totalorder %s521, %s523
      %p530 = scmp.eq.s32.totalorder %s39, 1
      %p531 = por %p529, %p530
      %p532 = scmp.ne.s32.totalorder %s523, %s524
      %p533 = scmp.eq.s32.totalorder %s39, 0
      %p534 = por %p532, %p533
      %p535 = scmp.ne.s32.totalorder %s523, %s524
      %p536 = scmp.eq.s32.totalorder %s40, 1
      %p537 = por %p535, %p536
      %p539 = scmp.ne.s32.totalorder %s524, %s538
      %p540 = scmp.eq.s32.totalorder %s40, 0
      %p541 = por %p539, %p540
      %s543 = sadd.s32 %s542, 1
      %p546 = scmp.eq.s32.totalorder %s34, 1
      %p547 = scmp.ne.s32.totalorder %s542, %s544
      %p548 = scmp.eq.s32.totalorder %s34, 0
      %p549 = por %p547, %p548
      %p550 = scmp.ne.s32.totalorder %s542, %s544
      %p551 = scmp.eq.s32.totalorder %s39, 1
      %p552 = por %p550, %p551
      %p553 = scmp.ne.s32.totalorder %s544, %s545
      %p554 = scmp.eq.s32.totalorder %s39, 0
      %p555 = por %p553, %p554
      %p556 = scmp.ne.s32.totalorder %s544, %s545
      %p557 = scmp.eq.s32.totalorder %s40, 1
      %p558 = por %p556, %p557
      %p560 = scmp.ne.s32.totalorder %s545, %s559
      %p561 = scmp.eq.s32.totalorder %s40, 0
      %p562 = por %p560, %p561
      %s564 = sadd.s32 %s563, 1
      %p567 = scmp.eq.s32.totalorder %s34, 1
      %p568 = scmp.ne.s32.totalorder %s563, %s565
      %p569 = scmp.eq.s32.totalorder %s34, 0
      %p570 = por %p568, %p569
      %p571 = scmp.ne.s32.totalorder %s563, %s565
      %p572 = scmp.eq.s32.totalorder %s39, 1
      %p573 = por %p571, %p572
      %p574 = scmp.ne.s32.totalorder %s565, %s566
      %p575 = scmp.eq.s32.totalorder %s39, 0
      %p576 = por %p574, %p575
      %p577 = scmp.ne.s32.totalorder %s565, %s566
      %p578 = scmp.eq.s32.totalorder %s40, 1
      %p579 = por %p577, %p578
      %p581 = scmp.ne.s32.totalorder %s566, %s580
      %p582 = scmp.eq.s32.totalorder %s40, 0
      %p583 = por %p581, %p582
      %s584 = ssub.s32 %s41, %s53
      %s585 = ssub.s32 %s42, %s49
      %s586 = sor.u32 %s584, %s585
      %p587 = scmp.eq.s32.totalorder %s586, 0
      %s589 = sadd.s32 %s588, 1
      %s590 = scalar_select %p587, %s588, %s589
      %p593 = pneg %p587
      %p594 = scmp.eq.s32.totalorder %s34, 1
      %p595 = por %p593, %p594
      %p596 = scmp.ne.s32.totalorder %s588, %s591
      %p597 = scmp.eq.s32.totalorder %s34, 0
      %p598 = por %p596, %p597
      %p599 = scmp.ne.s32.totalorder %s588, %s591
      %p600 = scmp.eq.s32.totalorder %s39, 1
      %p601 = por %p599, %p600
      %p602 = scmp.ne.s32.totalorder %s591, %s592
      %p603 = scmp.eq.s32.totalorder %s39, 0
      %p604 = por %p602, %p603
      %p605 = scmp.ne.s32.totalorder %s591, %s592
      %p606 = scmp.eq.s32.totalorder %s40, 1
      %p607 = por %p605, %p606
      %p609 = scmp.ne.s32.totalorder %s592, %s608
      %p610 = scmp.eq.s32.totalorder %s40, 0
      %p611 = por %p609, %p610
      %p612 = scmp.le.s32.totalorder 1, %s34
      %p613 = scmp.lt.s32.totalorder %s34, 3
      %p614 = pnand %p612, %p613
      %p615 = pneg %p614
      // Predicated region
      $region9: #{tpu_custom_call.1} parent=5 // pred_check
        _
      $region10: #{tpu_custom_call.1} parent=5 // pred_check_branch
        %617 = sbr.rel (%p614) target = $region12
      $region11: #{tpu_custom_call.1} parent=5 // pred_region
        %s618 = ssub.s32 %s34, 1
        // Predicated region
        $region13: #{tpu_custom_call.1} parent=11 // pred_check
          %p619 = pneg %p93
        $region14: #{tpu_custom_call.1} parent=11 // pred_check_branch
          %621 = sbr.rel (%p619) target = $region16
        $region15: #{tpu_custom_call.1} parent=11 // pred_region
          _
        $region16: #{tpu_custom_call.1} parent=11 // pred_fallthru
          _
        // Predicated region
        $region17: #{tpu_custom_call.1} parent=11 // pred_check
          %p622 = pneg %p114
        $region18: #{tpu_custom_call.1} parent=11 // pred_check_branch
          %624 = sbr.rel (%p622) target = $region20
        $region19: #{tpu_custom_call.1} parent=11 // pred_region
          _
        $region20: #{tpu_custom_call.1} parent=11 // pred_fallthru
          _
        // Predicated region
        $region21: #{tpu_custom_call.1} parent=11 // pred_check
          %p625 = pneg %p135
        $region22: #{tpu_custom_call.1} parent=11 // pred_check_branch
          %627 = sbr.rel (%p625) target = $region24
        $region23: #{tpu_custom_call.1} parent=11 // pred_region
          _
        $region24: #{tpu_custom_call.1} parent=11 // pred_fallthru
          _
        // Predicated region
        $region25: #{tpu_custom_call.1} parent=11 // pred_check
          %p628 = pneg %p156
        $region26: #{tpu_custom_call.1} parent=11 // pred_check_branch
          %630 = sbr.rel (%p628) target = $region28
        $region27: #{tpu_custom_call.1} parent=11 // pred_region
          _
        $region28: #{tpu_custom_call.1} parent=11 // pred_fallthru
          _
        // Predicated region
        $region29: #{tpu_custom_call.1} parent=11 // pred_check
          %p631 = pneg %p177
        $region30: #{tpu_custom_call.1} parent=11 // pred_check_branch
          %633 = sbr.rel (%p631) target = $region32
        $region31: #{tpu_custom_call.1} parent=11 // pred_region
          _
        $region32: #{tpu_custom_call.1} parent=11 // pred_fallthru
          _
        // Predicated region
        $region33: #{tpu_custom_call.1} parent=11 // pred_check
          %p634 = pneg %p198
        $region34: #{tpu_custom_call.1} parent=11 // pred_check_branch
          %636 = sbr.rel (%p634) target = $region36
        $region35: #{tpu_custom_call.1} parent=11 // pred_region
          _
        $region36: #{tpu_custom_call.1} parent=11 // pred_fallthru
          _
        // Predicated region
        $region37: #{tpu_custom_call.1} parent=11 // pred_check
          %p637 = pneg %p219
        $region38: #{tpu_custom_call.1} parent=11 // pred_check_branch
          %639 = sbr.rel (%p637) target = $region40
        $region39: #{tpu_custom_call.1} parent=11 // pred_region
          _
        $region40: #{tpu_custom_call.1} parent=11 // pred_fallthru
          _
        // Predicated region
        $region41: #{tpu_custom_call.1} parent=11 // pred_check
          %p640 = pneg %p240
        $region42: #{tpu_custom_call.1} parent=11 // pred_check_branch
          %642 = sbr.rel (%p640) target = $region44
        $region43: #{tpu_custom_call.1} parent=11 // pred_region
          _
        $region44: #{tpu_custom_call.1} parent=11 // pred_fallthru
          _
        // Predicated region
        $region45: #{tpu_custom_call.1} parent=11 // pred_check
          %p643 = pneg %p261
        $region46: #{tpu_custom_call.1} parent=11 // pred_check_branch
          %645 = sbr.rel (%p643) target = $region48
        $region47: #{tpu_custom_call.1} parent=11 // pred_region
          _
        $region48: #{tpu_custom_call.1} parent=11 // pred_fallthru
          _
        // Predicated region
        $region49: #{tpu_custom_call.1} parent=11 // pred_check
          %p646 = pneg %p282
        $region50: #{tpu_custom_call.1} parent=11 // pred_check_branch
          %648 = sbr.rel (%p646) target = $region52
        $region51: #{tpu_custom_call.1} parent=11 // pred_region
          _
        $region52: #{tpu_custom_call.1} parent=11 // pred_fallthru
          _
        // Predicated region
        $region53: #{tpu_custom_call.1} parent=11 // pred_check
          %p649 = pneg %p303
        $region54: #{tpu_custom_call.1} parent=11 // pred_check_branch
          %651 = sbr.rel (%p649) target = $region56
        $region55: #{tpu_custom_call.1} parent=11 // pred_region
          _
        $region56: #{tpu_custom_call.1} parent=11 // pred_fallthru
          _
        // Predicated region
        $region57: #{tpu_custom_call.1} parent=11 // pred_check
          %p652 = pneg %p324
        $region58: #{tpu_custom_call.1} parent=11 // pred_check_branch
          %654 = sbr.rel (%p652) target = $region60
        $region59: #{tpu_custom_call.1} parent=11 // pred_region
          _
        $region60: #{tpu_custom_call.1} parent=11 // pred_fallthru
          _
        // Predicated region
        $region61: #{tpu_custom_call.1} parent=11 // pred_check
          %p655 = pneg %p345
        $region62: #{tpu_custom_call.1} parent=11 // pred_check_branch
          %657 = sbr.rel (%p655) target = $region64
        $region63: #{tpu_custom_call.1} parent=11 // pred_region
          _
        $region64: #{tpu_custom_call.1} parent=11 // pred_fallthru
          _
        // Predicated region
        $region65: #{tpu_custom_call.1} parent=11 // pred_check
          %p658 = pneg %p366
        $region66: #{tpu_custom_call.1} parent=11 // pred_check_branch
          %660 = sbr.rel (%p658) target = $region68
        $region67: #{tpu_custom_call.1} parent=11 // pred_region
          _
        $region68: #{tpu_custom_call.1} parent=11 // pred_fallthru
          _
        // Predicated region
        $region69: #{tpu_custom_call.1} parent=11 // pred_check
          %p661 = pneg %p387
        $region70: #{tpu_custom_call.1} parent=11 // pred_check_branch
          %663 = sbr.rel (%p661) target = $region72
        $region71: #{tpu_custom_call.1} parent=11 // pred_region
          _
        $region72: #{tpu_custom_call.1} parent=11 // pred_fallthru
          _
        // Predicated region
        $region73: #{tpu_custom_call.1} parent=11 // pred_check
          %p664 = pneg %p408
        $region74: #{tpu_custom_call.1} parent=11 // pred_check_branch
          %666 = sbr.rel (%p664) target = $region76
        $region75: #{tpu_custom_call.1} parent=11 // pred_region
          _
        $region76: #{tpu_custom_call.1} parent=11 // pred_fallthru
          _
        // Predicated region
        $region77: #{tpu_custom_call.1} parent=11 // pred_check
          %p667 = pneg %p429
        $region78: #{tpu_custom_call.1} parent=11 // pred_check_branch
          %669 = sbr.rel (%p667) target = $region80
        $region79: #{tpu_custom_call.1} parent=11 // pred_region
          _
        $region80: #{tpu_custom_call.1} parent=11 // pred_fallthru
          _
        // Predicated region
        $region81: #{tpu_custom_call.1} parent=11 // pred_check
          %p670 = pneg %p450
        $region82: #{tpu_custom_call.1} parent=11 // pred_check_branch
          %672 = sbr.rel (%p670) target = $region84
        $region83: #{tpu_custom_call.1} parent=11 // pred_region
          _
        $region84: #{tpu_custom_call.1} parent=11 // pred_fallthru
          _
        // Predicated region
        $region85: #{tpu_custom_call.1} parent=11 // pred_check
          %p673 = pneg %p471
        $region86: #{tpu_custom_call.1} parent=11 // pred_check_branch
          %675 = sbr.rel (%p673) target = $region88
        $region87: #{tpu_custom_call.1} parent=11 // pred_region
          _
        $region88: #{tpu_custom_call.1} parent=11 // pred_fallthru
          _
        // Predicated region
        $region89: #{tpu_custom_call.1} parent=11 // pred_check
          %p676 = pneg %p492
        $region90: #{tpu_custom_call.1} parent=11 // pred_check_branch
          %678 = sbr.rel (%p676) target = $region92
        $region91: #{tpu_custom_call.1} parent=11 // pred_region
          _
        $region92: #{tpu_custom_call.1} parent=11 // pred_fallthru
          _
        // Predicated region
        $region93: #{tpu_custom_call.1} parent=11 // pred_check
          %p679 = pneg %p513
        $region94: #{tpu_custom_call.1} parent=11 // pred_check_branch
          %681 = sbr.rel (%p679) target = $region96
        $region95: #{tpu_custom_call.1} parent=11 // pred_region
          _
        $region96: #{tpu_custom_call.1} parent=11 // pred_fallthru
          _
        // Predicated region
        $region97: #{tpu_custom_call.1} parent=11 // pred_check
          %p682 = pneg %p534
        $region98: #{tpu_custom_call.1} parent=11 // pred_check_branch
          %684 = sbr.rel (%p682) target = $region100
        $region99: #{tpu_custom_call.1} parent=11 // pred_region
          _
        $region100: #{tpu_custom_call.1} parent=11 // pred_fallthru
          _
        // Predicated region
        $region101: #{tpu_custom_call.1} parent=11 // pred_check
          %p685 = pneg %p555
        $region102: #{tpu_custom_call.1} parent=11 // pred_check_branch
          %687 = sbr.rel (%p685) target = $region104
        $region103: #{tpu_custom_call.1} parent=11 // pred_region
          _
        $region104: #{tpu_custom_call.1} parent=11 // pred_fallthru
          _
        // Predicated region
        $region105: #{tpu_custom_call.1} parent=11 // pred_check
          %p688 = pneg %p576
        $region106: #{tpu_custom_call.1} parent=11 // pred_check_branch
          %690 = sbr.rel (%p688) target = $region108
        $region107: #{tpu_custom_call.1} parent=11 // pred_region
          _
        $region108: #{tpu_custom_call.1} parent=11 // pred_fallthru
          _
      $region12: #{tpu_custom_call.1} parent=5 // pred_fallthru
        _
      %p691 = scmp.lt.s32.totalorder %s34, 2
      // Predicated region
      $region109: #{tpu_custom_call.1} parent=5 // pred_check
        %p692 = pneg %p691
      $region110: #{tpu_custom_call.1} parent=5 // pred_check_branch
        %694 = sbr.rel (%p692) target = $region112
      $region111: #{tpu_custom_call.1} parent=5 // pred_region
        // Predicated region
        $region113: #{tpu_custom_call.1} parent=111 // pred_check
          %p695 = pneg %p66
        $region114: #{tpu_custom_call.1} parent=111 // pred_check_branch
          %697 = sbr.rel (%p695) target = $region116
        $region115: #{tpu_custom_call.1} parent=111 // pred_region
          %p698 = scmp.lt.s32.totalorder %s41, 1
          %s699 = scalar_select %p698, %s41, 1
          %s700 = smul.addr %s699, 8
          %s701 = scalar_lea.vmem %s0, %s700
        $region116: #{tpu_custom_call.1} parent=111 // pred_fallthru
          _
      $region112: #{tpu_custom_call.1} parent=5 // pred_fallthru
        _
      %p702 = scmp.le.s32.totalorder 1, %s34
      %p703 = scmp.lt.s32.totalorder %s34, 3
      %p704 = pnand %p702, %p703
      %p705 = pneg %p704
      // Predicated region
      $region117: #{tpu_custom_call.1} parent=5 // pred_check
        _
      $region118: #{tpu_custom_call.1} parent=5 // pred_check_branch
        %707 = sbr.rel (%p704) target = $region120
      $region119: #{tpu_custom_call.1} parent=5 // pred_region
        %s708 = ssub.s32 %s34, 1
        %p709 = scmp.lt.s32.totalorder %s43, 1
        %s710 = scalar_select %p709, %s43, 1
        %s711 = smul.addr %s710, 8
        %s712 = scalar_lea.vmem %s0, %s711
        %p713 = pneg %p72
        %p714 = pneg %p69
        %p715 = pneg %p93
        %p716 = pneg %p90
        %p717 = pneg %p114
        %p718 = pneg %p111
        %p719 = pneg %p135
        %p720 = pneg %p132
        %p721 = pneg %p156
        %p722 = pneg %p153
        %p723 = pneg %p177
        %p724 = pneg %p174
        %p725 = pneg %p198
        %p726 = pneg %p195
        %p727 = pneg %p219
        %p728 = pneg %p216
        %p729 = pneg %p240
        %p730 = pneg %p237
        %p731 = pneg %p261
        %p732 = pneg %p258
        %p733 = pneg %p282
        %p734 = pneg %p279
        %p735 = pneg %p303
        %p736 = pneg %p300
        %p737 = pneg %p324
        %p738 = pneg %p321
        %p739 = pneg %p345
        %p740 = pneg %p342
        %p741 = pneg %p366
        %p742 = pneg %p363
        %p743 = pneg %p387
        %p744 = pneg %p384
        %p745 = pneg %p408
        %p746 = pneg %p405
        %p747 = pneg %p429
        %p748 = pneg %p426
        %p749 = pneg %p450
        %p750 = pneg %p447
        %p751 = pneg %p471
        %p752 = pneg %p468
        %p753 = pneg %p492
        %p754 = pneg %p489
        %p755 = pneg %p513
        %p756 = pneg %p510
        %p757 = pneg %p534
        %p758 = pneg %p531
        %p759 = pneg %p555
        %p760 = pneg %p552
        %p761 = pneg %p576
        %p762 = pneg %p573
        %p763 = pneg %p604
        %p764 = pneg %p601
        %s765 = sand.u32 %s591, 1
        %s766 = scalar_lea.sflag [#allocation5], %s765
        %s767 = sand.u32 %s591, 1
        %s768 = smul.addr %s767, 8
        %s769 = scalar_lea.vmem [#allocation4], %s768
        %p770 = scmp.lt.s32.totalorder %s43, 1
        %s771 = scalar_select %p770, %s43, 1
        %s772 = smul.addr %s771, 8
        %s773 = scalar_lea.vmem %s0, %s772
        %p775 = scmp.eq.s32.totalorder %s44, 0
        // Predicated region
        $region121: #{tpu_custom_call.1} parent=119 // pred_check
          %p776 = pneg %p775
        $region122: #{tpu_custom_call.1} parent=119 // pred_check_branch
          %778 = sbr.rel (%p776) target = $region124
        $region123: #{tpu_custom_call.1} parent=119 // pred_region
          %v779 = vld [vmem:[%s773] sm:$0xff]
          %v780 = vpack.c.bf16 %v779, %v779
          %v781 = vld [vmem:[%s4] sm:$0xf]
          %v782 = vld [vmem:[%s4 + $0x4] sm:$0xf]
          %v783 = vld [vmem:[%s4 + $0x8] sm:$0xf]
          %v784 = vld [vmem:[%s4 + $0xc] sm:$0xf]
          %v785 = vld [vmem:[%s5] sm:$0xff]
          %v786 = vld [vmem:[%s5 + $0x8] sm:$0xff]
          %v787 = vld [vmem:[%s5 + $0x10] sm:$0xff]
          %v788 = vld [vmem:[%s5 + $0x18] sm:$0xff]
          %790 = vset.pattern.permute.xlu0 0
          %791 = vperm.xlu0 %790, %v785
          %v792 = vpop.permute.xlu0 %791
          %795 = vset.pattern.permute.xlu0 0
          %796 = vperm.xlu0 %795, %v786
          %v797 = vpop.permute.xlu0 %796
          %800 = vset.pattern.permute.xlu0 0
          %801 = vperm.xlu0 %800, %v787
          %v802 = vpop.permute.xlu0 %801
          %805 = vset.pattern.permute.xlu0 0
          %806 = vperm.xlu0 %805, %v788
          %v807 = vpop.permute.xlu0 %806
          %v813 = vunpack.c.l.b16 %v781
          %v814 = vunpack.c.l.b16 %v782
          %v815 = vunpack.c.l.b16 %v783
          %v816 = vunpack.c.l.b16 %v784
          %v817 = vpack.c.b16 %v814, %v813
          %v818 = vpack.c.b16 %v816, %v815
          %vm819 = vcmask 261120
          %v821 = vsel %vm819, %v817, 0
          %v824 = vsel %vm819, %v818, 0
          %v827 = vsel %vm819, %v780, 0
          %829 = vmatprep.subr.bf16.mxu0 0
          %830 = vmatpush1.bf16.xpose.msra.mxu0 %v827
          %831 = vmatprep.subr.bf16.mxu0 0
          %832 = vmatpush1.bf16.xpose.msra.mxu0 0
          %833 = vmatprep.subr.bf16.mxu0 0
          %834 = vmatpush1.bf16.xpose.msra.mxu0 0
          %835 = vmatprep.subr.bf16.mxu0 0
          %836 = vmatpush1.bf16.xpose.msra.mxu0 0
          %837 = vmatprep.subr.bf16.mxu0 0
          %838 = vmatpush1.bf16.xpose.msra.mxu0 0
          %839 = vmatprep.subr.bf16.mxu0 0
          %840 = vmatpush1.bf16.xpose.msra.mxu0 0
          %841 = vmatprep.subr.bf16.mxu0 0
          %842 = vmatpush1.bf16.xpose.msra.mxu0 0
          %843 = vmatprep.subr.bf16.mxu0 0
          %844 = vmatpush1.bf16.xpose.msra.mxu0 0
          %845 = vmatprep.subr.bf16.mxu0 0
          %846 = vmatpush1.bf16.xpose.msra.mxu0 0
          %847 = vmatprep.subr.bf16.mxu0 0
          %848 = vmatpush1.bf16.xpose.msra.mxu0 0
          %849 = vmatprep.subr.bf16.mxu0 0
          %850 = vmatpush1.bf16.xpose.msra.mxu0 0
          %851 = vmatprep.subr.bf16.mxu0 0
          %852 = vmatpush1.bf16.xpose.msra.mxu0 0
          %853 = vmatprep.subr.bf16.mxu0 0
          %854 = vmatpush1.bf16.xpose.msra.mxu0 0
          %855 = vmatprep.subr.bf16.mxu0 0
          %856 = vmatpush1.bf16.xpose.msra.mxu0 0
          %857 = vmatprep.subr.bf16.mxu0 0
          %858 = vmatpush1.bf16.xpose.msra.mxu0 0
          %859 = vmatprep.subr.bf16.mxu0 0
          %860 = vmatpush1.bf16.xpose.msra.mxu0 0
          %861 = vmatprep.mubr.bf16.mxu0 0
          %862 = vmatmul.mubr.bf16.gmra.mrb[0].mxu0 %v821
          %v863 = vpop.f32.mrb[0].mxu0
          %v864 = vadd.f32 %v792, %v863
          %v865 = vpop.f32.mrb[0].mxu0
          %v866 = vpop.f32.mrb[0].mxu0
          %v867 = vadd.f32 %v797, %v866
          %v868 = vpop.f32.mrb[0].mxu0
          %869 = vmatprep.mubr.bf16.mxu0 0
          %870 = vmatmul.mubr.bf16.gmra.mrb[0].mxu0 %v824
          %v871 = vpop.f32.mrb[0].mxu0
          %v872 = vadd.f32 %v802, %v871
          %v873 = vpop.f32.mrb[0].mxu0
          %v874 = vpop.f32.mrb[0].mxu0
          %v875 = vadd.f32 %v807, %v874
          %v876 = vpop.f32.mrb[0].mxu0
          %877 = vdwg.mxu0
          %v878 = vld [vmem:[%s6] sm:$0xf]
          %v879 = vld [vmem:[%s6 + $0x4] sm:$0xf]
          %v880 = vld [vmem:[%s6 + $0x8] sm:$0xf]
          %v881 = vld [vmem:[%s6 + $0xc] sm:$0xf]
          %v882 = vld [vmem:[%s7] sm:$0xff]
          %v883 = vld [vmem:[%s7 + $0x8] sm:$0xff]
          %v884 = vld [vmem:[%s7 + $0x10] sm:$0xff]
          %v885 = vld [vmem:[%s7 + $0x18] sm:$0xff]
          %887 = vset.pattern.permute.xlu0 0
          %888 = vperm.xlu0 %887, %v882
          %v889 = vpop.permute.xlu0 %888
          %892 = vset.pattern.permute.xlu0 0
          %893 = vperm.xlu0 %892, %v883
          %v894 = vpop.permute.xlu0 %893
          %897 = vset.pattern.permute.xlu0 0
          %898 = vperm.xlu0 %897, %v884
          %v899 = vpop.permute.xlu0 %898
          %902 = vset.pattern.permute.xlu0 0
          %903 = vperm.xlu0 %902, %v885
          %v904 = vpop.permute.xlu0 %903
          %v910 = vunpack.c.l.b16 %v878
          %v911 = vunpack.c.l.b16 %v879
          %v912 = vunpack.c.l.b16 %v880
          %v913 = vunpack.c.l.b16 %v881
          %v914 = vpack.c.b16 %v911, %v910
          %v915 = vpack.c.b16 %v913, %v912
          %v917 = vsel %vm819, %v914, 0
          %v920 = vsel %vm819, %v915, 0
          %922 = vmatprep.subr.bf16.mxu0 0
          %923 = vmatpush1.bf16.xpose.msra.mxu0 %v827
          %924 = vmatprep.subr.bf16.mxu0 0
          %925 = vmatpush1.bf16.xpose.msra.mxu0 0
          %926 = vmatprep.subr.bf16.mxu0 0
          %927 = vmatpush1.bf16.xpose.msra.mxu0 0
          %928 = vmatprep.subr.bf16.mxu0 0
          %929 = vmatpush1.bf16.xpose.msra.mxu0 0
          %930 = vmatprep.subr.bf16.mxu0 0
          %931 = vmatpush1.bf16.xpose.msra.mxu0 0
          %932 = vmatprep.subr.bf16.mxu0 0
          %933 = vmatpush1.bf16.xpose.msra.mxu0 0
          %934 = vmatprep.subr.bf16.mxu0 0
          %935 = vmatpush1.bf16.xpose.msra.mxu0 0
          %936 = vmatprep.subr.bf16.mxu0 0
          %937 = vmatpush1.bf16.xpose.msra.mxu0 0
          %938 = vmatprep.subr.bf16.mxu0 0
          %939 = vmatpush1.bf16.xpose.msra.mxu0 0
          %940 = vmatprep.subr.bf16.mxu0 0
          %941 = vmatpush1.bf16.xpose.msra.mxu0 0
          %942 = vmatprep.subr.bf16.mxu0 0
          %943 = vmatpush1.bf16.xpose.msra.mxu0 0
          %944 = vmatprep.subr.bf16.mxu0 0
          %945 = vmatpush1.bf16.xpose.msra.mxu0 0
          %946 = vmatprep.subr.bf16.mxu0 0
          %947 = vmatpush1.bf16.xpose.msra.mxu0 0
          %948 = vmatprep.subr.bf16.mxu0 0
          %949 = vmatpush1.bf16.xpose.msra.mxu0 0
          %950 = vmatprep.subr.bf16.mxu0 0
          %951 = vmatpush1.bf16.xpose.msra.mxu0 0
          %952 = vmatprep.subr.bf16.mxu0 0
          %953 = vmatpush1.bf16.xpose.msra.mxu0 0
          %954 = vmatprep.mubr.bf16.mxu0 0
          %955 = vmatmul.mubr.bf16.gmra.mrb[0].mxu0 %v917
          %v956 = vpop.f32.mrb[0].mxu0
          %v957 = vadd.f32 %v889, %v956
          %v958 = vpop.f32.mrb[0].mxu0
          %v959 = vpop.f32.mrb[0].mxu0
          %v960 = vadd.f32 %v894, %v959
          %v961 = vpop.f32.mrb[0].mxu0
          %962 = vmatprep.mubr.bf16.mxu0 0
          %963 = vmatmul.mubr.bf16.gmra.mrb[0].mxu0 %v920
          %v964 = vpop.f32.mrb[0].mxu0
          %v965 = vadd.f32 %v899, %v964
          %v966 = vpop.f32.mrb[0].mxu0
          %v967 = vpop.f32.mrb[0].mxu0
          %v968 = vadd.f32 %v904, %v967
          %v969 = vpop.f32.mrb[0].mxu0
          %970 = vdwg.mxu0
          %v971 = vpack.c.bf16 %v864, %v864
          %v972 = vpack.c.bf16 %v867, %v867
          %v973 = vpack.c.bf16 %v872, %v872
          %v974 = vpack.c.bf16 %v875, %v875
          %vm975 = vcmask 60416
          %976 = vst.msk [vmem:[#allocation2] sm:$0xf] %vm975, %v971
          %977 = vst.msk [vmem:[#allocation2 + $0x4] sm:$0xf] %vm975, %v972
          %978 = vst.msk [vmem:[#allocation2 + $0x8] sm:$0xf] %vm975, %v973
          %979 = vst.msk [vmem:[#allocation2 + $0xc] sm:$0xf] %vm975, %v974
          %v980 = vpack.c.bf16 %v957, %v957
          %v981 = vpack.c.bf16 %v960, %v960
          %v982 = vpack.c.bf16 %v965, %v965
          %v983 = vpack.c.bf16 %v968, %v968
          %984 = vst.msk [vmem:[#allocation3] sm:$0xf] %vm975, %v980
          %985 = vst.msk [vmem:[#allocation3 + $0x4] sm:$0xf] %vm975, %v981
          %986 = vst.msk [vmem:[#allocation3 + $0x8] sm:$0xf] %vm975, %v982
          %987 = vst.msk [vmem:[#allocation3 + $0xc] sm:$0xf] %vm975, %v983
        $region124: #{tpu_custom_call.1} parent=119 // pred_fallthru
          _
        %s988 = smul.u32 %s44, 8
        %s989 = scalar_lea.vmem %s773, %s988
        %v990 = vld [vmem:[%s989] sm:$0xff]
        %v991 = vpack.c.bf16 %v990, %v990
        %v992 = vld [vmem:[%s2] sm:$0xf]
        %v993 = vld [vmem:[%s2 + $0x4] sm:$0xf]
        %v994 = vld [vmem:[%s2 + $0x8] sm:$0xf]
        %v995 = vld [vmem:[%s2 + $0xc] sm:$0xf]
        %v996 = vld [vmem:[%s3] sm:$0x1]
        %v998 = vlaneseq
        %v999 = vshrl.u32 %v998, 7
        %v1000 = vsub.s32 0, %v999
        %v1001 = vrot.slane %v996, %v1000
        %v1007 = vunpack.c.l.b16 %v992
        %v1008 = vunpack.c.l.b16 %v993
        %v1009 = vunpack.c.l.b16 %v994
        %v1010 = vunpack.c.l.b16 %v995
        %v1011 = vpack.c.b16 %v1008, %v1007
        %v1012 = vpack.c.b16 %v1010, %v1009
        %vm1015 = vcmask 261120
        %v1017 = vsel %vm1015, %v991, 0
        %1019 = vmatprep.subr.bf16.mxu0 0
        %1020 = vmatpush1.bf16.msra.mxu0 %v1011
        %1021 = vmatprep.subr.bf16.mxu0 0
        %1022 = vmatpush1.bf16.msra.mxu0 %v1012
        %1023 = vmatprep.subr.bf16.mxu0 0
        %1024 = vmatpush1.bf16.msra.mxu0 0
        %1025 = vmatprep.subr.bf16.mxu0 0
        %1026 = vmatpush1.bf16.msra.mxu0 0
        %1027 = vmatprep.subr.bf16.mxu0 0
        %1028 = vmatpush1.bf16.msra.mxu0 0
        %1029 = vmatprep.subr.bf16.mxu0 0
        %1030 = vmatpush1.bf16.msra.mxu0 0
        %1031 = vmatprep.subr.bf16.mxu0 0
        %1032 = vmatpush1.bf16.msra.mxu0 0
        %1033 = vmatprep.subr.bf16.mxu0 0
        %1034 = vmatpush1.bf16.msra.mxu0 0
        %1035 = vmatprep.subr.bf16.mxu0 0
        %1036 = vmatpush1.bf16.msra.mxu0 0
        %1037 = vmatprep.subr.bf16.mxu0 0
        %1038 = vmatpush1.bf16.msra.mxu0 0
        %1039 = vmatprep.subr.bf16.mxu0 0
        %1040 = vmatpush1.bf16.msra.mxu0 0
        %1041 = vmatprep.subr.bf16.mxu0 0
        %1042 = vmatpush1.bf16.msra.mxu0 0
        %1043 = vmatprep.subr.bf16.mxu0 0
        %1044 = vmatpush1.bf16.msra.mxu0 0
        %1045 = vmatprep.subr.bf16.mxu0 0
        %1046 = vmatpush1.bf16.msra.mxu0 0
        %1047 = vmatprep.subr.bf16.mxu0 0
        %1048 = vmatpush1.bf16.msra.mxu0 0
        %1049 = vmatprep.subr.bf16.mxu0 0
        %1050 = vmatpush1.bf16.msra.mxu0 0
        %1051 = vmatprep.mubr.bf16.mxu0 0
        %1052 = vmatmul.mubr.bf16.gmra.mrb[0].mxu0 %v1017
        %v1053 = vpop.f32.mrb[0].mxu0
        %v1054 = vadd.f32 %v1001, %v1053
        %v1055 = vpop.f32.mrb[0].mxu0
        %v1056 = vpop.f32.mrb[0].mxu0
        %v1057 = vpop.f32.mrb[0].mxu0
        %1058 = vdwg.mxu0
        %v1059 = vpack.c.bf16 %v1054, %v1054
        %1061 = vrot.lane.b32.xlu0 %v1059, 120
        %v1062 = vpop.permute.xlu0 %1061
        %1063 = vrot.lane.b32.xlu0 %v1059, 112
        %v1064 = vpop.permute.xlu0 %1063
        %1065 = vrot.lane.b32.xlu0 %v1059, 104
        %v1066 = vpop.permute.xlu0 %1065
        %v1067 = vld [vmem:[#allocation2] sm:$0xf]
        %v1068 = vld [vmem:[#allocation2 + $0x4] sm:$0xf]
        %v1069 = vld [vmem:[#allocation2 + $0x8] sm:$0xf]
        %v1070 = vld [vmem:[#allocation2 + $0xc] sm:$0xf]
        %v1071 = vld [vmem:[%s10] sm:$0xf]
        %v1072 = vld [vmem:[%s10 + $0x4] sm:$0xf]
        %v1073 = vld [vmem:[%s10 + $0x8] sm:$0xf]
        %v1074 = vld [vmem:[%s10 + $0xc] sm:$0xf]
        %v1075 = vld [vmem:[%s11] sm:$0x1]
        %v1077 = vlaneseq
        %v1078 = vshrl.u32 %v1077, 7
        %v1079 = vsub.s32 0, %v1078
        %v1080 = vrot.slane %v1075, %v1079
        %v1086 = vunpack.c.l.b16 %v1071
        %v1087 = vunpack.c.l.b16 %v1072
        %v1088 = vunpack.c.l.b16 %v1073
        %v1089 = vunpack.c.l.b16 %v1074
        %v1090 = vpack.c.b16 %v1087, %v1086
        %v1091 = vpack.c.b16 %v1089, %v1088
        %1094 = vmatprep.subr.bf16.mxu0 0
        %1095 = vmatpush1.bf16.msra.mxu0 %v1090
        %1096 = vmatprep.subr.bf16.mxu0 0
        %1097 = vmatpush1.bf16.msra.mxu0 %v1091
        %1098 = vmatprep.subr.bf16.mxu0 0
        %1099 = vmatpush1.bf16.msra.mxu0 0
        %1100 = vmatprep.subr.bf16.mxu0 0
        %1101 = vmatpush1.bf16.msra.mxu0 0
        %1102 = vmatprep.subr.bf16.mxu0 0
        %1103 = vmatpush1.bf16.msra.mxu0 0
        %1104 = vmatprep.subr.bf16.mxu0 0
        %1105 = vmatpush1.bf16.msra.mxu0 0
        %1106 = vmatprep.subr.bf16.mxu0 0
        %1107 = vmatpush1.bf16.msra.mxu0 0
        %1108 = vmatprep.subr.bf16.mxu0 0
        %1109 = vmatpush1.bf16.msra.mxu0 0
        %1110 = vmatprep.subr.bf16.mxu0 0
        %1111 = vmatpush1.bf16.msra.mxu0 0
        %1112 = vmatprep.subr.bf16.mxu0 0
        %1113 = vmatpush1.bf16.msra.mxu0 0
        %1114 = vmatprep.subr.bf16.mxu0 0
        %1115 = vmatpush1.bf16.msra.mxu0 0
        %1116 = vmatprep.subr.bf16.mxu0 0
        %1117 = vmatpush1.bf16.msra.mxu0 0
        %1118 = vmatprep.subr.bf16.mxu0 0
        %1119 = vmatpush1.bf16.msra.mxu0 0
        %1120 = vmatprep.subr.bf16.mxu0 0
        %1121 = vmatpush1.bf16.msra.mxu0 0
        %1122 = vmatprep.subr.bf16.mxu0 0
        %1123 = vmatpush1.bf16.msra.mxu0 0
        %1124 = vmatprep.subr.bf16.mxu0 0
        %1125 = vmatpush1.bf16.msra.mxu0 0
        %1126 = vmatprep.mubr.bf16.mxu0 0
        %1127 = vmatmul.mubr.bf16.gmra.mrb[0].mxu0 %v1017
        %v1128 = vpop.f32.mrb[0].mxu0
        %v1129 = vadd.f32 %v1080, %v1128
        %v1130 = vpop.f32.mrb[0].mxu0
        %v1131 = vpop.f32.mrb[0].mxu0
        %v1132 = vpop.f32.mrb[0].mxu0
        %1133 = vdwg.mxu0
        %v1134 = vxor.u32 %v1129, 2147483648
        %v1135 = vmul.f32 %v1134, 1.442695
        %v1136 = vpow.pop %v1135
        %v1137 = vadd.f32 %v1136, 1.0
        %v1138 = vrcp.pop %v1137
        %v1139 = vmul.f32 1.0, %v1138
        %v1140 = vld [vmem:[%s12] sm:$0x1]
        %v1142 = vlaneseq
        %v1143 = vshrl.u32 %v1142, 7
        %v1144 = vsub.s32 0, %v1143
        %v1145 = vrot.slane %v1140, %v1144
        %1146 = vrot.lane.b32.xlu0 %v1145, 4
        %v1147 = vpop.permute.xlu0 %1146
        %v1149 = vmul.f32 %v1139, %v1147
        %v1150 = vsub.f32 %v1149, 1.0
        %1152 = vrot.lane.b32.xlu0 %v1150, 124
        %v1153 = vpop.permute.xlu0 %1152
        %v1155 = vmul.f32 %v1139, %v1153
        %v1156 = vadd.f32 %v1155, 2.0
        %1157 = vxpose.xlu0.b32.start [1/16] %v1156, 128
        %1158 = vxpose.xlu0.b32.cont [2/16] 0.0, 128
        %1159 = vxpose.xlu0.b32.cont [3/16] 0.0, 128
        %1160 = vxpose.xlu0.b32.cont [4/16] 0.0, 128
        %1161 = vxpose.xlu0.b32.cont [5/16] 0.0, 128
        %1162 = vxpose.xlu0.b32.cont [6/16] 0.0, 128
        %1163 = vxpose.xlu0.b32.cont [7/16] 0.0, 128
        %1164 = vxpose.xlu0.b32.cont [8/16] 0.0, 128
        %1165 = vxpose.xlu0.b32.cont [9/16] 0.0, 128
        %1166 = vxpose.xlu0.b32.cont [10/16] 0.0, 128
        %1167 = vxpose.xlu0.b32.cont [11/16] 0.0, 128
        %1168 = vxpose.xlu0.b32.cont [12/16] 0.0, 128
        %1169 = vxpose.xlu0.b32.cont [13/16] 0.0, 128
        %1170 = vxpose.xlu0.b32.cont [14/16] 0.0, 128
        %1171 = vxpose.xlu0.b32.cont [15/16] 0.0, 128
        %1172 = vxpose.xlu0.b32.end [16/16] 0.0, 128
        %v1173 = vpop.trf.xlu0
        %v1174 = vpop.trf.xlu0
        %v1175 = vpop.trf.xlu0
        %v1176 = vpop.trf.xlu0
        %v1177 = vpop.trf.xlu0
        %v1178 = vpop.trf.xlu0
        %v1179 = vpop.trf.xlu0
        %v1180 = vpop.trf.xlu0
        %v1181 = vpop.trf.xlu0
        %v1182 = vpop.trf.xlu0
        %v1183 = vpop.trf.xlu0
        %v1184 = vpop.trf.xlu0
        %v1185 = vpop.trf.xlu0
        %v1186 = vpop.trf.xlu0
        %v1187 = vpop.trf.xlu0
        %v1188 = vpop.trf.xlu0
        %v1189 = vlaneseq
        %v1190 = vshrl.u32 %v1189, 7
        %v1191 = vsub.s32 0, %v1190
        %v1192 = vrot.slane %v1173, %v1191
        %1194 = vbcast.lane.b32.xlu0 %v1192, 256
        %v1195 = vpop.permute.xlu0 %1194
        %v1196 = vlaneseq
        %v1197 = vshrl.u32 %v1196, 7
        %v1198 = vsub.s32 1, %v1197
        %v1199 = vrot.slane %v1173, %v1198
        %1201 = vbcast.lane.b32.xlu0 %v1199, 256
        %v1202 = vpop.permute.xlu0 %1201
        %v1203 = vlaneseq
        %v1204 = vshrl.u32 %v1203, 7
        %v1205 = vsub.s32 2, %v1204
        %v1206 = vrot.slane %v1173, %v1205
        %1208 = vbcast.lane.b32.xlu0 %v1206, 256
        %v1209 = vpop.permute.xlu0 %1208
        %v1210 = vlaneseq
        %v1211 = vshrl.u32 %v1210, 7
        %v1212 = vsub.s32 3, %v1211
        %v1213 = vrot.slane %v1173, %v1212
        %1215 = vbcast.lane.b32.xlu0 %v1213, 256
        %v1216 = vpop.permute.xlu0 %1215
        %v1217 = vpack.c.bf16 %v1195, %v1195
        %v1218 = vpack.c.bf16 %v1202, %v1202
        %v1219 = vpack.c.bf16 %v1209, %v1209
        %v1220 = vpack.c.bf16 %v1216, %v1216
        %s1221 = sshra.s32 %s988, 3
        %s1222 = sand.u32 %s988, 7
        %s1223 = smul.addr %s1221, 4
        %s1224 = scalar_lea.vmem %s1, %s1223
        %v1225 = vld [vmem:[%s1224] sm:$0xf]
        %v1226 = vld [vmem:[%s1224 + $0x4] sm:$0xf]
        %v1227 = vld [vmem:[%s1224 + $0x8] sm:$0xf]
        %v1228 = vld [vmem:[%s1224 + $0xc] sm:$0xf]
        %v1229 = vmul.bf16 %v1217, %v1225
        %v1230 = vmul.bf16 %v1218, %v1226
        %v1231 = vmul.bf16 %v1219, %v1227
        %v1232 = vmul.bf16 %v1220, %v1228
        %v1233 = vunpack.c.l.bf16 %v1229
        %v1234 = vunpack.c.l.bf16 %v1230
        %v1235 = vunpack.c.l.bf16 %v1231
        %v1236 = vunpack.c.l.bf16 %v1232
        %vm1237 = vcmask 64512
        %v1239 = vsel %vm1237, %v1059, 0
        %vm1241 = vcmask 1043456
        %v1243 = vsel %vm1241, %v1067, 0
        %1245 = vmatprep.subr.bf16.mxu0 0
        %1246 = vmatpush1.bf16.msra.mxu0 %v1243
        %1247 = vmatprep.subr.bf16.mxu0 0
        %1248 = vmatpush1.bf16.msra.mxu0 0
        %1249 = vmatprep.subr.bf16.mxu0 0
        %1250 = vmatpush1.bf16.msra.mxu0 0
        %1251 = vmatprep.subr.bf16.mxu0 0
        %1252 = vmatpush1.bf16.msra.mxu0 0
        %1253 = vmatprep.subr.bf16.mxu0 0
        %1254 = vmatpush1.bf16.msra.mxu0 0
        %1255 = vmatprep.subr.bf16.mxu0 0
        %1256 = vmatpush1.bf16.msra.mxu0 0
        %1257 = vmatprep.subr.bf16.mxu0 0
        %1258 = vmatpush1.bf16.msra.mxu0 0
        %1259 = vmatprep.subr.bf16.mxu0 0
        %1260 = vmatpush1.bf16.msra.mxu0 0
        %1261 = vmatprep.subr.bf16.mxu0 0
        %1262 = vmatpush1.bf16.msra.mxu0 0
        %1263 = vmatprep.subr.bf16.mxu0 0
        %1264 = vmatpush1.bf16.msra.mxu0 0
        %1265 = vmatprep.subr.bf16.mxu0 0
        %1266 = vmatpush1.bf16.msra.mxu0 0
        %1267 = vmatprep.subr.bf16.mxu0 0
        %1268 = vmatpush1.bf16.msra.mxu0 0
        %1269 = vmatprep.subr.bf16.mxu0 0
        %1270 = vmatpush1.bf16.msra.mxu0 0
        %1271 = vmatprep.subr.bf16.mxu0 0
        %1272 = vmatpush1.bf16.msra.mxu0 0
        %1273 = vmatprep.subr.bf16.mxu0 0
        %1274 = vmatpush1.bf16.msra.mxu0 0
        %1275 = vmatprep.subr.bf16.mxu0 0
        %1276 = vmatpush1.bf16.msra.mxu0 0
        %1277 = vmatprep.mubr.bf16.mxu0 0
        %1278 = vmatmul.mubr.bf16.gmra.mrb[0].mxu0 %v1239
        %v1279 = vpop.f32.mrb[0].mxu0
        %v1280 = vadd.f32 %v1233, %v1279
        %v1281 = vpop.f32.mrb[0].mxu0
        %v1282 = vpop.f32.mrb[0].mxu0
        %v1283 = vpop.f32.mrb[0].mxu0
        %1284 = vdwg.mxu0
        %v1286 = vsel %vm1237, %v1062, 0
        %v1289 = vsel %vm1241, %v1068, 0
        %1291 = vmatprep.subr.bf16.mxu0 0
        %1292 = vmatpush1.bf16.msra.mxu0 %v1289
        %1293 = vmatprep.subr.bf16.mxu0 0
        %1294 = vmatpush1.bf16.msra.mxu0 0
        %1295 = vmatprep.subr.bf16.mxu0 0
        %1296 = vmatpush1.bf16.msra.mxu0 0
        %1297 = vmatprep.subr.bf16.mxu0 0
        %1298 = vmatpush1.bf16.msra.mxu0 0
        %1299 = vmatprep.subr.bf16.mxu0 0
        %1300 = vmatpush1.bf16.msra.mxu0 0
        %1301 = vmatprep.subr.bf16.mxu0 0
        %1302 = vmatpush1.bf16.msra.mxu0 0
        %1303 = vmatprep.subr.bf16.mxu0 0
        %1304 = vmatpush1.bf16.msra.mxu0 0
        %1305 = vmatprep.subr.bf16.mxu0 0
        %1306 = vmatpush1.bf16.msra.mxu0 0
        %1307 = vmatprep.subr.bf16.mxu0 0
        %1308 = vmatpush1.bf16.msra.mxu0 0
        %1309 = vmatprep.subr.bf16.mxu0 0
        %1310 = vmatpush1.bf16.msra.mxu0 0
        %1311 = vmatprep.subr.bf16.mxu0 0
        %1312 = vmatpush1.bf16.msra.mxu0 0
        %1313 = vmatprep.subr.bf16.mxu0 0
        %1314 = vmatpush1.bf16.msra.mxu0 0
        %1315 = vmatprep.subr.bf16.mxu0 0
        %1316 = vmatpush1.bf16.msra.mxu0 0
        %1317 = vmatprep.subr.bf16.mxu0 0
        %1318 = vmatpush1.bf16.msra.mxu0 0
        %1319 = vmatprep.subr.bf16.mxu0 0
        %1320 = vmatpush1.bf16.msra.mxu0 0
        %1321 = vmatprep.subr.bf16.mxu0 0
        %1322 = vmatpush1.bf16.msra.mxu0 0
        %1323 = vmatprep.mubr.bf16.mxu0 0
        %1324 = vmatmul.mubr.bf16.gmra.mrb[0].mxu0 %v1286
        %v1325 = vpop.f32.mrb[0].mxu0
        %v1326 = vadd.f32 %v1234, %v1325
        %v1327 = vpop.f32.mrb[0].mxu0
        %v1328 = vpop.f32.mrb[0].mxu0
        %v1329 = vpop.f32.mrb[0].mxu0
        %1330 = vdwg.mxu0
        %v1332 = vsel %vm1237, %v1064, 0
        %v1335 = vsel %vm1241, %v1069, 0
        %1337 = vmatprep.subr.bf16.mxu0 0
        %1338 = vmatpush1.bf16.msra.mxu0 %v1335
        %1339 = vmatprep.subr.bf16.mxu0 0
        %1340 = vmatpush1.bf16.msra.mxu0 0
        %1341 = vmatprep.subr.bf16.mxu0 0
        %1342 = vmatpush1.bf16.msra.mxu0 0
        %1343 = vmatprep.subr.bf16.mxu0 0
        %1344 = vmatpush1.bf16.msra.mxu0 0
        %1345 = vmatprep.subr.bf16.mxu0 0
        %1346 = vmatpush1.bf16.msra.mxu0 0
        %1347 = vmatprep.subr.bf16.mxu0 0
        %1348 = vmatpush1.bf16.msra.mxu0 0
        %1349 = vmatprep.subr.bf16.mxu0 0
        %1350 = vmatpush1.bf16.msra.mxu0 0
        %1351 = vmatprep.subr.bf16.mxu0 0
        %1352 = vmatpush1.bf16.msra.mxu0 0
        %1353 = vmatprep.subr.bf16.mxu0 0
        %1354 = vmatpush1.bf16.msra.mxu0 0
        %1355 = vmatprep.subr.bf16.mxu0 0
        %1356 = vmatpush1.bf16.msra.mxu0 0
        %1357 = vmatprep.subr.bf16.mxu0 0
        %1358 = vmatpush1.bf16.msra.mxu0 0
        %1359 = vmatprep.subr.bf16.mxu0 0
        %1360 = vmatpush1.bf16.msra.mxu0 0
        %1361 = vmatprep.subr.bf16.mxu0 0
        %1362 = vmatpush1.bf16.msra.mxu0 0
        %1363 = vmatprep.subr.bf16.mxu0 0
        %1364 = vmatpush1.bf16.msra.mxu0 0
        %1365 = vmatprep.subr.bf16.mxu0 0
        %1366 = vmatpush1.bf16.msra.mxu0 0
        %1367 = vmatprep.subr.bf16.mxu0 0
        %1368 = vmatpush1.bf16.msra.mxu0 0
        %1369 = vmatprep.mubr.bf16.mxu0 0
        %1370 = vmatmul.mubr.bf16.gmra.mrb[0].mxu0 %v1332
        %v1371 = vpop.f32.mrb[0].mxu0
        %v1372 = vadd.f32 %v1235, %v1371
        %v1373 = vpop.f32.mrb[0].mxu0
        %v1374 = vpop.f32.mrb[0].mxu0
        %v1375 = vpop.f32.mrb[0].mxu0
        %1376 = vdwg.mxu0
        %v1378 = vsel %vm1237, %v1066, 0
        %v1381 = vsel %vm1241, %v1070, 0
        %1383 = vmatprep.subr.bf16.mxu0 0
        %1384 = vmatpush1.bf16.msra.mxu0 %v1381
        %1385 = vmatprep.subr.bf16.mxu0 0
        %1386 = vmatpush1.bf16.msra.mxu0 0
        %1387 = vmatprep.subr.bf16.mxu0 0
        %1388 = vmatpush1.bf16.msra.mxu0 0
        %1389 = vmatprep.subr.bf16.mxu0 0
        %1390 = vmatpush1.bf16.msra.mxu0 0
        %1391 = vmatprep.subr.bf16.mxu0 0
        %1392 = vmatpush1.bf16.msra.mxu0 0
        %1393 = vmatprep.subr.bf16.mxu0 0
        %1394 = vmatpush1.bf16.msra.mxu0 0
        %1395 = vmatprep.subr.bf16.mxu0 0
        %1396 = vmatpush1.bf16.msra.mxu0 0
        %1397 = vmatprep.subr.bf16.mxu0 0
        %1398 = vmatpush1.bf16.msra.mxu0 0
        %1399 = vmatprep.subr.bf16.mxu0 0
        %1400 = vmatpush1.bf16.msra.mxu0 0
        %1401 = vmatprep.subr.bf16.mxu0 0
        %1402 = vmatpush1.bf16.msra.mxu0 0
        %1403 = vmatprep.subr.bf16.mxu0 0
        %1404 = vmatpush1.bf16.msra.mxu0 0
        %1405 = vmatprep.subr.bf16.mxu0 0
        %1406 = vmatpush1.bf16.msra.mxu0 0
        %1407 = vmatprep.subr.bf16.mxu0 0
        %1408 = vmatpush1.bf16.msra.mxu0 0
        %1409 = vmatprep.subr.bf16.mxu0 0
        %1410 = vmatpush1.bf16.msra.mxu0 0
        %1411 = vmatprep.subr.bf16.mxu0 0
        %1412 = vmatpush1.bf16.msra.mxu0 0
        %1413 = vmatprep.subr.bf16.mxu0 0
        %1414 = vmatpush1.bf16.msra.mxu0 0
        %1415 = vmatprep.mubr.bf16.mxu0 0
        %1416 = vmatmul.mubr.bf16.gmra.mrb[0].mxu0 %v1378
        %v1417 = vpop.f32.mrb[0].mxu0
        %v1418 = vadd.f32 %v1236, %v1417
        %v1419 = vpop.f32.mrb[0].mxu0
        %v1420 = vpop.f32.mrb[0].mxu0
        %v1421 = vpop.f32.mrb[0].mxu0
        %1422 = vdwg.mxu0
        %v1423 = vsel %vm1237, %v1280, -inf
        %1424 = vmax.xlane.f32.xlu0 %v1423
        %v1425 = vpop.xlane.xlu0 %1424
        %v1426 = vsel %vm1237, %v1326, -inf
        %1427 = vmax.xlane.f32.xlu0 %v1426
        %v1428 = vpop.xlane.xlu0 %1427
        %v1429 = vsel %vm1237, %v1372, -inf
        %1430 = vmax.xlane.f32.xlu0 %v1429
        %v1431 = vpop.xlane.xlu0 %1430
        %v1432 = vsel %vm1237, %v1418, -inf
        %1433 = vmax.xlane.f32.xlu0 %v1432
        %v1434 = vpop.xlane.xlu0 %1433
        %v1435 = vsub.f32 %v1280, %v1425
        %v1436 = vsub.f32 %v1326, %v1428
        %v1437 = vsub.f32 %v1372, %v1431
        %v1438 = vsub.f32 %v1418, %v1434
        %v1439 = vmul.f32 %v1435, 1.442695
        %v1440 = vpow.pop %v1439
        %v1441 = vmul.f32 %v1436, 1.442695
        %v1442 = vpow.pop %v1441
        %v1443 = vmul.f32 %v1437, 1.442695
        %v1444 = vpow.pop %v1443
        %v1445 = vmul.f32 %v1438, 1.442695
        %v1446 = vpow.pop %v1445
        %v1447 = vsel %vm1237, %v1440, 0.0
        %1448 = vadd.xlane.f32.xlu0 %v1447
        %v1449 = vpop.xlane.xlu0 %1448
        %v1450 = vsel %vm1237, %v1442, 0.0
        %1451 = vadd.xlane.f32.xlu0 %v1450
        %v1452 = vpop.xlane.xlu0 %1451
        %v1453 = vsel %vm1237, %v1444, 0.0
        %1454 = vadd.xlane.f32.xlu0 %v1453
        %v1455 = vpop.xlane.xlu0 %1454
        %v1456 = vsel %vm1237, %v1446, 0.0
        %1457 = vadd.xlane.f32.xlu0 %v1456
        %v1458 = vpop.xlane.xlu0 %1457
        %v1459 = vrcp.pop %v1449
        %v1460 = vrcp.pop %v1452
        %v1461 = vrcp.pop %v1455
        %v1462 = vrcp.pop %v1458
        %v1463 = vmul.f32 %v1440, %v1459
        %v1464 = vmul.f32 %v1442, %v1460
        %v1465 = vmul.f32 %v1444, %v1461
        %v1466 = vmul.f32 %v1446, %v1462
        %v1467 = vpack.c.bf16 %v1463, %v1463
        %v1468 = vpack.c.bf16 %v1464, %v1464
        %v1469 = vpack.c.bf16 %v1465, %v1465
        %v1470 = vpack.c.bf16 %v1466, %v1466
        %v1471 = vld [vmem:[#allocation3] sm:$0xf]
        %v1472 = vld [vmem:[#allocation3 + $0x4] sm:$0xf]
        %v1473 = vld [vmem:[#allocation3 + $0x8] sm:$0xf]
        %v1474 = vld [vmem:[#allocation3 + $0xc] sm:$0xf]
        %v1476 = vsel %vm1237, %v1467, 0
        %v1479 = vsel %vm1237, %v1471, 0
        %1481 = vmatprep.subr.bf16.mxu0 0
        %1482 = vmatpush1.bf16.xpose.msra.mxu0 %v1479
        %1483 = vmatprep.subr.bf16.mxu0 0
        %1484 = vmatpush1.bf16.xpose.msra.mxu0 0
        %1485 = vmatprep.subr.bf16.mxu0 0
        %1486 = vmatpush1.bf16.xpose.msra.mxu0 0
        %1487 = vmatprep.subr.bf16.mxu0 0
        %1488 = vmatpush1.bf16.xpose.msra.mxu0 0
        %1489 = vmatprep.subr.bf16.mxu0 0
        %1490 = vmatpush1.bf16.xpose.msra.mxu0 0
        %1491 = vmatprep.subr.bf16.mxu0 0
        %1492 = vmatpush1.bf16.xpose.msra.mxu0 0
        %1493 = vmatprep.subr.bf16.mxu0 0
        %1494 = vmatpush1.bf16.xpose.msra.mxu0 0
        %1495 = vmatprep.subr.bf16.mxu0 0
        %1496 = vmatpush1.bf16.xpose.msra.mxu0 0
        %1497 = vmatprep.subr.bf16.mxu0 0
        %1498 = vmatpush1.bf16.xpose.msra.mxu0 0
        %1499 = vmatprep.subr.bf16.mxu0 0
        %1500 = vmatpush1.bf16.xpose.msra.mxu0 0
        %1501 = vmatprep.subr.bf16.mxu0 0
        %1502 = vmatpush1.bf16.xpose.msra.mxu0 0
        %1503 = vmatprep.subr.bf16.mxu0 0
        %1504 = vmatpush1.bf16.xpose.msra.mxu0 0
        %1505 = vmatprep.subr.bf16.mxu0 0
        %1506 = vmatpush1.bf16.xpose.msra.mxu0 0
        %1507 = vmatprep.subr.bf16.mxu0 0
        %1508 = vmatpush1.bf16.xpose.msra.mxu0 0
        %1509 = vmatprep.subr.bf16.mxu0 0
        %1510 = vmatpush1.bf16.xpose.msra.mxu0 0
        %1511 = vmatprep.subr.bf16.mxu0 0
        %1512 = vmatpush1.bf16.xpose.msra.mxu0 0
        %1513 = vmatprep.mubr.bf16.mxu0 0
        %1514 = vmatmul.mubr.bf16.gmra.mrb[0].mxu0 %v1476
        %v1515 = vpop.f32.mrb[0].mxu0
        %v1516 = vadd.f32 0.0, %v1515
        %v1517 = vpop.f32.mrb[0].mxu0
        %v1518 = vpop.f32.mrb[0].mxu0
        %v1519 = vpop.f32.mrb[0].mxu0
        %1520 = vdwg.mxu0
        %v1522 = vsel %vm1237, %v1468, 0
        %v1525 = vsel %vm1237, %v1472, 0
        %1527 = vmatprep.subr.bf16.mxu0 0
        %1528 = vmatpush1.bf16.xpose.msra.mxu0 %v1525
        %1529 = vmatprep.subr.bf16.mxu0 0
        %1530 = vmatpush1.bf16.xpose.msra.mxu0 0
        %1531 = vmatprep.subr.bf16.mxu0 0
        %1532 = vmatpush1.bf16.xpose.msra.mxu0 0
        %1533 = vmatprep.subr.bf16.mxu0 0
        %1534 = vmatpush1.bf16.xpose.msra.mxu0 0
        %1535 = vmatprep.subr.bf16.mxu0 0
        %1536 = vmatpush1.bf16.xpose.msra.mxu0 0
        %1537 = vmatprep.subr.bf16.mxu0 0
        %1538 = vmatpush1.bf16.xpose.msra.mxu0 0
        %1539 = vmatprep.subr.bf16.mxu0 0
        %1540 = vmatpush1.bf16.xpose.msra.mxu0 0
        %1541 = vmatprep.subr.bf16.mxu0 0
        %1542 = vmatpush1.bf16.xpose.msra.mxu0 0
        %1543 = vmatprep.subr.bf16.mxu0 0
        %1544 = vmatpush1.bf16.xpose.msra.mxu0 0
        %1545 = vmatprep.subr.bf16.mxu0 0
        %1546 = vmatpush1.bf16.xpose.msra.mxu0 0
        %1547 = vmatprep.subr.bf16.mxu0 0
        %1548 = vmatpush1.bf16.xpose.msra.mxu0 0
        %1549 = vmatprep.subr.bf16.mxu0 0
        %1550 = vmatpush1.bf16.xpose.msra.mxu0 0
        %1551 = vmatprep.subr.bf16.mxu0 0
        %1552 = vmatpush1.bf16.xpose.msra.mxu0 0
        %1553 = vmatprep.subr.bf16.mxu0 0
        %1554 = vmatpush1.bf16.xpose.msra.mxu0 0
        %1555 = vmatprep.subr.bf16.mxu0 0
        %1556 = vmatpush1.bf16.xpose.msra.mxu0 0
        %1557 = vmatprep.subr.bf16.mxu0 0
        %1558 = vmatpush1.bf16.xpose.msra.mxu0 0
        %1559 = vmatprep.mubr.bf16.mxu0 0
        %1560 = vmatmul.mubr.bf16.gmra.mrb[0].mxu0 %v1522
        %v1561 = vpop.f32.mrb[0].mxu0
        %v1562 = vadd.f32 0.0, %v1561
        %v1563 = vpop.f32.mrb[0].mxu0
        %v1564 = vpop.f32.mrb[0].mxu0
        %v1565 = vpop.f32.mrb[0].mxu0
        %1566 = vdwg.mxu0
        %v1568 = vsel %vm1237, %v1469, 0
        %v1571 = vsel %vm1237, %v1473, 0
        %1573 = vmatprep.subr.bf16.mxu0 0
        %1574 = vmatpush1.bf16.xpose.msra.mxu0 %v1571
        %1575 = vmatprep.subr.bf16.mxu0 0
        %1576 = vmatpush1.bf16.xpose.msra.mxu0 0
        %1577 = vmatprep.subr.bf16.mxu0 0
        %1578 = vmatpush1.bf16.xpose.msra.mxu0 0
        %1579 = vmatprep.subr.bf16.mxu0 0
        %1580 = vmatpush1.bf16.xpose.msra.mxu0 0
        %1581 = vmatprep.subr.bf16.mxu0 0
        %1582 = vmatpush1.bf16.xpose.msra.mxu0 0
        %1583 = vmatprep.subr.bf16.mxu0 0
        %1584 = vmatpush1.bf16.xpose.msra.mxu0 0
        %1585 = vmatprep.subr.bf16.mxu0 0
        %1586 = vmatpush1.bf16.xpose.msra.mxu0 0
        %1587 = vmatprep.subr.bf16.mxu0 0
        %1588 = vmatpush1.bf16.xpose.msra.mxu0 0
        %1589 = vmatprep.subr.bf16.mxu0 0
        %1590 = vmatpush1.bf16.xpose.msra.mxu0 0
        %1591 = vmatprep.subr.bf16.mxu0 0
        %1592 = vmatpush1.bf16.xpose.msra.mxu0 0
        %1593 = vmatprep.subr.bf16.mxu0 0
        %1594 = vmatpush1.bf16.xpose.msra.mxu0 0
        %1595 = vmatprep.subr.bf16.mxu0 0
        %1596 = vmatpush1.bf16.xpose.msra.mxu0 0
        %1597 = vmatprep.subr.bf16.mxu0 0
        %1598 = vmatpush1.bf16.xpose.msra.mxu0 0
        %1599 = vmatprep.subr.bf16.mxu0 0
        %1600 = vmatpush1.bf16.xpose.msra.mxu0 0
        %1601 = vmatprep.subr.bf16.mxu0 0
        %1602 = vmatpush1.bf16.xpose.msra.mxu0 0
        %1603 = vmatprep.subr.bf16.mxu0 0
        %1604 = vmatpush1.bf16.xpose.msra.mxu0 0
        %1605 = vmatprep.mubr.bf16.mxu0 0
        %1606 = vmatmul.mubr.bf16.gmra.mrb[0].mxu0 %v1568
        %v1607 = vpop.f32.mrb[0].mxu0
        %v1608 = vadd.f32 0.0, %v1607
        %v1609 = vpop.f32.mrb[0].mxu0
        %v1610 = vpop.f32.mrb[0].mxu0
        %v1611 = vpop.f32.mrb[0].mxu0
        %1612 = vdwg.mxu0
        %v1614 = vsel %vm1237, %v1470, 0
        %v1617 = vsel %vm1237, %v1474, 0
        %1619 = vmatprep.subr.bf16.mxu0 0
        %1620 = vmatpush1.bf16.xpose.msra.mxu0 %v1617
        %1621 = vmatprep.subr.bf16.mxu0 0
        %1622 = vmatpush1.bf16.xpose.msra.mxu0 0
        %1623 = vmatprep.subr.bf16.mxu0 0
        %1624 = vmatpush1.bf16.xpose.msra.mxu0 0
        %1625 = vmatprep.subr.bf16.mxu0 0
        %1626 = vmatpush1.bf16.xpose.msra.mxu0 0
        %1627 = vmatprep.subr.bf16.mxu0 0
        %1628 = vmatpush1.bf16.xpose.msra.mxu0 0
        %1629 = vmatprep.subr.bf16.mxu0 0
        %1630 = vmatpush1.bf16.xpose.msra.mxu0 0
        %1631 = vmatprep.subr.bf16.mxu0 0
        %1632 = vmatpush1.bf16.xpose.msra.mxu0 0
        %1633 = vmatprep.subr.bf16.mxu0 0
        %1634 = vmatpush1.bf16.xpose.msra.mxu0 0
        %1635 = vmatprep.subr.bf16.mxu0 0
        %1636 = vmatpush1.bf16.xpose.msra.mxu0 0
        %1637 = vmatprep.subr.bf16.mxu0 0
        %1638 = vmatpush1.bf16.xpose.msra.mxu0 0
        %1639 = vmatprep.subr.bf16.mxu0 0
        %1640 = vmatpush1.bf16.xpose.msra.mxu0 0
        %1641 = vmatprep.subr.bf16.mxu0 0
        %1642 = vmatpush1.bf16.xpose.msra.mxu0 0
        %1643 = vmatprep.subr.bf16.mxu0 0
        %1644 = vmatpush1.bf16.xpose.msra.mxu0 0
        %1645 = vmatprep.subr.bf16.mxu0 0
        %1646 = vmatpush1.bf16.xpose.msra.mxu0 0
        %1647 = vmatprep.subr.bf16.mxu0 0
        %1648 = vmatpush1.bf16.xpose.msra.mxu0 0
        %1649 = vmatprep.subr.bf16.mxu0 0
        %1650 = vmatpush1.bf16.xpose.msra.mxu0 0
        %1651 = vmatprep.mubr.bf16.mxu0 0
        %1652 = vmatmul.mubr.bf16.gmra.mrb[0].mxu0 %v1614
        %v1653 = vpop.f32.mrb[0].mxu0
        %v1654 = vadd.f32 0.0, %v1653
        %v1655 = vpop.f32.mrb[0].mxu0
        %v1656 = vpop.f32.mrb[0].mxu0
        %v1657 = vpop.f32.mrb[0].mxu0
        %1658 = vdwg.mxu0
        %v1659 = vpack.c.bf16 %v1516, %v1516
        %v1660 = vpack.c.bf16 %v1562, %v1562
        %v1661 = vpack.c.bf16 %v1608, %v1608
        %v1662 = vpack.c.bf16 %v1654, %v1654
        %v1663 = vld [vmem:[%s8] sm:$0xf]
        %v1664 = vld [vmem:[%s8 + $0x4] sm:$0xf]
        %v1665 = vld [vmem:[%s8 + $0x8] sm:$0xf]
        %v1666 = vld [vmem:[%s8 + $0xc] sm:$0xf]
        %v1668 = vsel %vm1237, %v1659, 0
        %v1671 = vsel %vm1241, %v1663, 0
        %1673 = vmatprep.subr.bf16.mxu0 0
        %1674 = vmatpush1.bf16.msra.mxu0 %v1671
        %1675 = vmatprep.subr.bf16.mxu0 0
        %1676 = vmatpush1.bf16.msra.mxu0 0
        %1677 = vmatprep.subr.bf16.mxu0 0
        %1678 = vmatpush1.bf16.msra.mxu0 0
        %1679 = vmatprep.subr.bf16.mxu0 0
        %1680 = vmatpush1.bf16.msra.mxu0 0
        %1681 = vmatprep.subr.bf16.mxu0 0
        %1682 = vmatpush1.bf16.msra.mxu0 0
        %1683 = vmatprep.subr.bf16.mxu0 0
        %1684 = vmatpush1.bf16.msra.mxu0 0
        %1685 = vmatprep.subr.bf16.mxu0 0
        %1686 = vmatpush1.bf16.msra.mxu0 0
        %1687 = vmatprep.subr.bf16.mxu0 0
        %1688 = vmatpush1.bf16.msra.mxu0 0
        %1689 = vmatprep.subr.bf16.mxu0 0
        %1690 = vmatpush1.bf16.msra.mxu0 0
        %1691 = vmatprep.subr.bf16.mxu0 0
        %1692 = vmatpush1.bf16.msra.mxu0 0
        %1693 = vmatprep.subr.bf16.mxu0 0
        %1694 = vmatpush1.bf16.msra.mxu0 0
        %1695 = vmatprep.subr.bf16.mxu0 0
        %1696 = vmatpush1.bf16.msra.mxu0 0
        %1697 = vmatprep.subr.bf16.mxu0 0
        %1698 = vmatpush1.bf16.msra.mxu0 0
        %1699 = vmatprep.subr.bf16.mxu0 0
        %1700 = vmatpush1.bf16.msra.mxu0 0
        %1701 = vmatprep.subr.bf16.mxu0 0
        %1702 = vmatpush1.bf16.msra.mxu0 0
        %1703 = vmatprep.subr.bf16.mxu0 0
        %1704 = vmatpush1.bf16.msra.mxu0 0
        %1705 = vmatprep.mubr.bf16.mxu0 0
        %1706 = vmatmul.mubr.bf16.gmra.mrb[0].mxu0 %v1668
        %v1707 = vpop.f32.mrb[0].mxu0
        %v1708 = vadd.f32 0.0, %v1707
        %v1709 = vpop.f32.mrb[0].mxu0
        %v1710 = vpop.f32.mrb[0].mxu0
        %v1711 = vpop.f32.mrb[0].mxu0
        %1712 = vdwg.mxu0
        %v1714 = vsel %vm1237, %v1660, 0
        %v1717 = vsel %vm1241, %v1664, 0
        %1719 = vmatprep.subr.bf16.mxu0 0
        %1720 = vmatpush1.bf16.msra.mxu0 %v1717
        %1721 = vmatprep.subr.bf16.mxu0 0
        %1722 = vmatpush1.bf16.msra.mxu0 0
        %1723 = vmatprep.subr.bf16.mxu0 0
        %1724 = vmatpush1.bf16.msra.mxu0 0
        %1725 = vmatprep.subr.bf16.mxu0 0
        %1726 = vmatpush1.bf16.msra.mxu0 0
        %1727 = vmatprep.subr.bf16.mxu0 0
        %1728 = vmatpush1.bf16.msra.mxu0 0
        %1729 = vmatprep.subr.bf16.mxu0 0
        %1730 = vmatpush1.bf16.msra.mxu0 0
        %1731 = vmatprep.subr.bf16.mxu0 0
        %1732 = vmatpush1.bf16.msra.mxu0 0
        %1733 = vmatprep.subr.bf16.mxu0 0
        %1734 = vmatpush1.bf16.msra.mxu0 0
        %1735 = vmatprep.subr.bf16.mxu0 0
        %1736 = vmatpush1.bf16.msra.mxu0 0
        %1737 = vmatprep.subr.bf16.mxu0 0
        %1738 = vmatpush1.bf16.msra.mxu0 0
        %1739 = vmatprep.subr.bf16.mxu0 0
        %1740 = vmatpush1.bf16.msra.mxu0 0
        %1741 = vmatprep.subr.bf16.mxu0 0
        %1742 = vmatpush1.bf16.msra.mxu0 0
        %1743 = vmatprep.subr.bf16.mxu0 0
        %1744 = vmatpush1.bf16.msra.mxu0 0
        %1745 = vmatprep.subr.bf16.mxu0 0
        %1746 = vmatpush1.bf16.msra.mxu0 0
        %1747 = vmatprep.subr.bf16.mxu0 0
        %1748 = vmatpush1.bf16.msra.mxu0 0
        %1749 = vmatprep.subr.bf16.mxu0 0
        %1750 = vmatpush1.bf16.msra.mxu0 0
        %1751 = vmatprep.mubr.bf16.mxu0 0
        %1752 = vmatmul.mubr.bf16.gmra.mrb[0].mxu0 %v1714
        %v1753 = vpop.f32.mrb[0].mxu0
        %v1754 = vadd.f32 0.0, %v1753
        %v1755 = vpop.f32.mrb[0].mxu0
        %v1756 = vpop.f32.mrb[0].mxu0
        %v1757 = vpop.f32.mrb[0].mxu0
        %1758 = vdwg.mxu0
        %v1760 = vsel %vm1237, %v1661, 0
        %v1763 = vsel %vm1241, %v1665, 0
        %1765 = vmatprep.subr.bf16.mxu0 0
        %1766 = vmatpush1.bf16.msra.mxu0 %v1763
        %1767 = vmatprep.subr.bf16.mxu0 0
        %1768 = vmatpush1.bf16.msra.mxu0 0
        %1769 = vmatprep.subr.bf16.mxu0 0
        %1770 = vmatpush1.bf16.msra.mxu0 0
        %1771 = vmatprep.subr.bf16.mxu0 0
        %1772 = vmatpush1.bf16.msra.mxu0 0
        %1773 = vmatprep.subr.bf16.mxu0 0
        %1774 = vmatpush1.bf16.msra.mxu0 0
        %1775 = vmatprep.subr.bf16.mxu0 0
        %1776 = vmatpush1.bf16.msra.mxu0 0
        %1777 = vmatprep.subr.bf16.mxu0 0
        %1778 = vmatpush1.bf16.msra.mxu0 0
        %1779 = vmatprep.subr.bf16.mxu0 0
        %1780 = vmatpush1.bf16.msra.mxu0 0
        %1781 = vmatprep.subr.bf16.mxu0 0
        %1782 = vmatpush1.bf16.msra.mxu0 0
        %1783 = vmatprep.subr.bf16.mxu0 0
        %1784 = vmatpush1.bf16.msra.mxu0 0
        %1785 = vmatprep.subr.bf16.mxu0 0
        %1786 = vmatpush1.bf16.msra.mxu0 0
        %1787 = vmatprep.subr.bf16.mxu0 0
        %1788 = vmatpush1.bf16.msra.mxu0 0
        %1789 = vmatprep.subr.bf16.mxu0 0
        %1790 = vmatpush1.bf16.msra.mxu0 0
        %1791 = vmatprep.subr.bf16.mxu0 0
        %1792 = vmatpush1.bf16.msra.mxu0 0
        %1793 = vmatprep.subr.bf16.mxu0 0
        %1794 = vmatpush1.bf16.msra.mxu0 0
        %1795 = vmatprep.subr.bf16.mxu0 0
        %1796 = vmatpush1.bf16.msra.mxu0 0
        %1797 = vmatprep.mubr.bf16.mxu0 0
        %1798 = vmatmul.mubr.bf16.gmra.mrb[0].mxu0 %v1760
        %v1799 = vpop.f32.mrb[0].mxu0
        %v1800 = vadd.f32 0.0, %v1799
        %v1801 = vpop.f32.mrb[0].mxu0
        %v1802 = vpop.f32.mrb[0].mxu0
        %v1803 = vpop.f32.mrb[0].mxu0
        %1804 = vdwg.mxu0
        %v1806 = vsel %vm1237, %v1662, 0
        %v1809 = vsel %vm1241, %v1666, 0
        %1811 = vmatprep.subr.bf16.mxu0 0
        %1812 = vmatpush1.bf16.msra.mxu0 %v1809
        %1813 = vmatprep.subr.bf16.mxu0 0
        %1814 = vmatpush1.bf16.msra.mxu0 0
        %1815 = vmatprep.subr.bf16.mxu0 0
        %1816 = vmatpush1.bf16.msra.mxu0 0
        %1817 = vmatprep.subr.bf16.mxu0 0
        %1818 = vmatpush1.bf16.msra.mxu0 0
        %1819 = vmatprep.subr.bf16.mxu0 0
        %1820 = vmatpush1.bf16.msra.mxu0 0
        %1821 = vmatprep.subr.bf16.mxu0 0
        %1822 = vmatpush1.bf16.msra.mxu0 0
        %1823 = vmatprep.subr.bf16.mxu0 0
        %1824 = vmatpush1.bf16.msra.mxu0 0
        %1825 = vmatprep.subr.bf16.mxu0 0
        %1826 = vmatpush1.bf16.msra.mxu0 0
        %1827 = vmatprep.subr.bf16.mxu0 0
        %1828 = vmatpush1.bf16.msra.mxu0 0
        %1829 = vmatprep.subr.bf16.mxu0 0
        %1830 = vmatpush1.bf16.msra.mxu0 0
        %1831 = vmatprep.subr.bf16.mxu0 0
        %1832 = vmatpush1.bf16.msra.mxu0 0
        %1833 = vmatprep.subr.bf16.mxu0 0
        %1834 = vmatpush1.bf16.msra.mxu0 0
        %1835 = vmatprep.subr.bf16.mxu0 0
        %1836 = vmatpush1.bf16.msra.mxu0 0
        %1837 = vmatprep.subr.bf16.mxu0 0
        %1838 = vmatpush1.bf16.msra.mxu0 0
        %1839 = vmatprep.subr.bf16.mxu0 0
        %1840 = vmatpush1.bf16.msra.mxu0 0
        %1841 = vmatprep.subr.bf16.mxu0 0
        %1842 = vmatpush1.bf16.msra.mxu0 0
        %1843 = vmatprep.mubr.bf16.mxu0 0
        %1844 = vmatmul.mubr.bf16.gmra.mrb[0].mxu0 %v1806
        %v1845 = vpop.f32.mrb[0].mxu0
        %v1846 = vadd.f32 0.0, %v1845
        %v1847 = vpop.f32.mrb[0].mxu0
        %v1848 = vpop.f32.mrb[0].mxu0
        %v1849 = vpop.f32.mrb[0].mxu0
        %1850 = vdwg.mxu0
        %v1851 = vsel %vm1015, %v1708, 0.0
        %v1852 = vsel %vm1015, %v1754, 0.0
        %v1853 = vadd.f32 %v1851, %v1852
        %v1854 = vsel %vm1015, %v1800, 0.0
        %v1855 = vadd.f32 %v1853, %v1854
        %v1856 = vsel %vm1015, %v1846, 0.0
        %v1857 = vadd.f32 %v1855, %v1856
        %v1858 = vld [vmem:[%s9] sm:$0x1]
        %v1860 = vlaneseq
        %v1861 = vshrl.u32 %v1860, 7
        %v1862 = vsub.s32 0, %v1861
        %v1863 = vrot.slane %v1858, %v1862
        %v1865 = vadd.f32 %v1857, %v1863
        %v1866 = vadd.f32 %v990, %v1865
        %v1867 = vld [vmem:[%s13] sm:$0x1]
        %v1868 = vld [vmem:[%s14] sm:$0x1]
        %v1869 = vsel %vm1015, %v1866, 0.0
        %1870 = vadd.xlane.f32.xlu0 %v1869
        %v1871 = vpop.xlane.xlu0 %1870
        %v1872 = vrcp.pop 32.0
        %v1873 = vmul.f32 %v1871, %v1872
        %v1874 = vsub.f32 %v1866, %v1873
        %v1875 = vmul.f32 %v1874, %v1874
        %v1876 = vsel %vm1015, %v1875, 0.0
        %1877 = vadd.xlane.f32.xlu0 %v1876
        %v1878 = vpop.xlane.xlu0 %1877
        %v1879 = vmul.f32 %v1878, %v1872
        %v1880 = vadd.f32 %v1879, 1e-05
        %v1881 = vrsqrt.pop %v1880
        %v1882 = vmul.f32 %v1874, %v1881
        %v1884 = vlaneseq
        %v1885 = vshrl.u32 %v1884, 7
        %v1886 = vsub.s32 0, %v1885
        %v1887 = vrot.slane %v1867, %v1886
        %v1889 = vmul.f32 %v1882, %v1887
        %v1891 = vlaneseq
        %v1892 = vshrl.u32 %v1891, 7
        %v1893 = vsub.s32 0, %v1892
        %v1894 = vrot.slane %v1868, %v1893
        %v1896 = vadd.f32 %v1889, %v1894
        %v1897 = vpack.c.bf16 %v1896, %v1896
        %v1898 = vld [vmem:[%s15] sm:$0xf]
        %v1899 = vld [vmem:[%s15 + $0x4] sm:$0xf]
        %v1900 = vld [vmem:[%s15 + $0x8] sm:$0xf]
        %v1901 = vld [vmem:[%s15 + $0xc] sm:$0xf]
        %v1902 = vld [vmem:[%s16] sm:$0x1]
        %v1904 = vlaneseq
        %v1905 = vshrl.u32 %v1904, 7
        %v1906 = vsub.s32 0, %v1905
        %v1907 = vrot.slane %v1902, %v1906
        %v1913 = vunpack.c.l.b16 %v1898
        %v1914 = vunpack.c.l.b16 %v1899
        %v1915 = vunpack.c.l.b16 %v1900
        %v1916 = vunpack.c.l.b16 %v1901
        %v1917 = vpack.c.b16 %v1914, %v1913
        %v1918 = vpack.c.b16 %v1916, %v1915
        %v1922 = vsel %vm1015, %v1897, 0
        %1924 = vmatprep.subr.bf16.mxu0 0
        %1925 = vmatpush1.bf16.msra.mxu0 %v1917
        %1926 = vmatprep.subr.bf16.mxu0 0
        %1927 = vmatpush1.bf16.msra.mxu0 %v1918
        %1928 = vmatprep.subr.bf16.mxu0 0
        %1929 = vmatpush1.bf16.msra.mxu0 0
        %1930 = vmatprep.subr.bf16.mxu0 0
        %1931 = vmatpush1.bf16.msra.mxu0 0
        %1932 = vmatprep.subr.bf16.mxu0 0
        %1933 = vmatpush1.bf16.msra.mxu0 0
        %1934 = vmatprep.subr.bf16.mxu0 0
        %1935 = vmatpush1.bf16.msra.mxu0 0
        %1936 = vmatprep.subr.bf16.mxu0 0
        %1937 = vmatpush1.bf16.msra.mxu0 0
        %1938 = vmatprep.subr.bf16.mxu0 0
        %1939 = vmatpush1.bf16.msra.mxu0 0
        %1940 = vmatprep.subr.bf16.mxu0 0
        %1941 = vmatpush1.bf16.msra.mxu0 0
        %1942 = vmatprep.subr.bf16.mxu0 0
        %1943 = vmatpush1.bf16.msra.mxu0 0
        %1944 = vmatprep.subr.bf16.mxu0 0
        %1945 = vmatpush1.bf16.msra.mxu0 0
        %1946 = vmatprep.subr.bf16.mxu0 0
        %1947 = vmatpush1.bf16.msra.mxu0 0
        %1948 = vmatprep.subr.bf16.mxu0 0
        %1949 = vmatpush1.bf16.msra.mxu0 0
        %1950 = vmatprep.subr.bf16.mxu0 0
        %1951 = vmatpush1.bf16.msra.mxu0 0
        %1952 = vmatprep.subr.bf16.mxu0 0
        %1953 = vmatpush1.bf16.msra.mxu0 0
        %1954 = vmatprep.subr.bf16.mxu0 0
        %1955 = vmatpush1.bf16.msra.mxu0 0
        %1956 = vmatprep.mubr.bf16.mxu0 0
        %1957 = vmatmul.mubr.bf16.gmra.mrb[0].mxu0 %v1922
        %v1958 = vpop.f32.mrb[0].mxu0
        %v1959 = vadd.f32 %v1907, %v1958
        %v1960 = vpop.f32.mrb[0].mxu0
        %v1961 = vpop.f32.mrb[0].mxu0
        %v1962 = vpop.f32.mrb[0].mxu0
        %1963 = vdwg.mxu0
        %v1964 = vmul.f32 %v1959, 0.5
        %v1965 = vrcp.pop 1.4142135
        %v1966 = vmul.f32 %v1959, %v1965
        %v1967 = verf.f32.pop %v1966
        %v1968 = vadd.f32 %v1967, 1.0
        %v1969 = vmul.f32 %v1964, %v1968
        %v1970 = vpack.c.bf16 %v1969, %v1969
        %v1971 = vld [vmem:[%s17] sm:$0xf]
        %v1972 = vld [vmem:[%s17 + $0x4] sm:$0xf]
        %v1973 = vld [vmem:[%s17 + $0x8] sm:$0xf]
        %v1974 = vld [vmem:[%s17 + $0xc] sm:$0xf]
        %v1975 = vld [vmem:[%s17 + $0x10] sm:$0xf]
        %v1976 = vld [vmem:[%s17 + $0x14] sm:$0xf]
        %v1977 = vld [vmem:[%s17 + $0x18] sm:$0xf]
        %v1978 = vld [vmem:[%s17 + $0x1c] sm:$0xf]
        %v1979 = vld [vmem:[%s18] sm:$0x1]
        %v1981 = vlaneseq
        %v1982 = vshrl.u32 %v1981, 7
        %v1983 = vsub.s32 0, %v1982
        %v1984 = vrot.slane %v1979, %v1983
        %v1994 = vunpack.c.l.b16 %v1971
        %v1995 = vunpack.c.l.b16 %v1972
        %v1996 = vunpack.c.l.b16 %v1973
        %v1997 = vunpack.c.l.b16 %v1974
        %v1998 = vunpack.c.l.b16 %v1975
        %v1999 = vunpack.c.l.b16 %v1976
        %v2000 = vunpack.c.l.b16 %v1977
        %v2001 = vunpack.c.l.b16 %v1978
        %v2002 = vpack.c.b16 %v1995, %v1994
        %v2003 = vpack.c.b16 %v1997, %v1996
        %v2004 = vpack.c.b16 %v1999, %v1998
        %v2005 = vpack.c.b16 %v2001, %v2000
        %vm2010 = vcmask 523264
        %v2012 = vsel %vm2010, %v1970, 0
        %2014 = vmatprep.subr.bf16.mxu0 0
        %2015 = vmatpush1.bf16.msra.mxu0 %v2002
        %2016 = vmatprep.subr.bf16.mxu0 0
        %2017 = vmatpush1.bf16.msra.mxu0 %v2003
        %2018 = vmatprep.subr.bf16.mxu0 0
        %2019 = vmatpush1.bf16.msra.mxu0 %v2004
        %2020 = vmatprep.subr.bf16.mxu0 0
        %2021 = vmatpush1.bf16.msra.mxu0 %v2005
        %2022 = vmatprep.subr.bf16.mxu0 0
        %2023 = vmatpush1.bf16.msra.mxu0 0
        %2024 = vmatprep.subr.bf16.mxu0 0
        %2025 = vmatpush1.bf16.msra.mxu0 0
        %2026 = vmatprep.subr.bf16.mxu0 0
        %2027 = vmatpush1.bf16.msra.mxu0 0
        %2028 = vmatprep.subr.bf16.mxu0 0
        %2029 = vmatpush1.bf16.msra.mxu0 0
        %2030 = vmatprep.subr.bf16.mxu0 0
        %2031 = vmatpush1.bf16.msra.mxu0 0
        %2032 = vmatprep.subr.bf16.mxu0 0
        %2033 = vmatpush1.bf16.msra.mxu0 0
        %2034 = vmatprep.subr.bf16.mxu0 0
        %2035 = vmatpush1.bf16.msra.mxu0 0
        %2036 = vmatprep.subr.bf16.mxu0 0
        %2037 = vmatpush1.bf16.msra.mxu0 0
        %2038 = vmatprep.subr.bf16.mxu0 0
        %2039 = vmatpush1.bf16.msra.mxu0 0
        %2040 = vmatprep.subr.bf16.mxu0 0
        %2041 = vmatpush1.bf16.msra.mxu0 0
        %2042 = vmatprep.subr.bf16.mxu0 0
        %2043 = vmatpush1.bf16.msra.mxu0 0
        %2044 = vmatprep.subr.bf16.mxu0 0
        %2045 = vmatpush1.bf16.msra.mxu0 0
        %2046 = vmatprep.mubr.bf16.mxu0 0
        %2047 = vmatmul.mubr.bf16.gmra.mrb[0].mxu0 %v2012
        %v2048 = vpop.f32.mrb[0].mxu0
        %v2049 = vadd.f32 %v1984, %v2048
        %v2050 = vpop.f32.mrb[0].mxu0
        %v2051 = vpop.f32.mrb[0].mxu0
        %v2052 = vpop.f32.mrb[0].mxu0
        %2053 = vdwg.mxu0
        %v2054 = vld [vmem:[%s19] sm:$0xf]
        %v2055 = vld [vmem:[%s19 + $0x4] sm:$0xf]
        %v2056 = vld [vmem:[%s19 + $0x8] sm:$0xf]
        %v2057 = vld [vmem:[%s19 + $0xc] sm:$0xf]
        %v2058 = vld [vmem:[%s20] sm:$0x1]
        %v2060 = vlaneseq
        %v2061 = vshrl.u32 %v2060, 7
        %v2062 = vsub.s32 0, %v2061
        %v2063 = vrot.slane %v2058, %v2062
        %v2069 = vunpack.c.l.b16 %v2054
        %v2070 = vunpack.c.l.b16 %v2055
        %v2071 = vunpack.c.l.b16 %v2056
        %v2072 = vunpack.c.l.b16 %v2057
        %v2073 = vpack.c.b16 %v2070, %v2069
        %v2074 = vpack.c.b16 %v2072, %v2071
        %2077 = vmatprep.subr.bf16.mxu0 0
        %2078 = vmatpush1.bf16.msra.mxu0 %v2073
        %2079 = vmatprep.subr.bf16.mxu0 0
        %2080 = vmatpush1.bf16.msra.mxu0 %v2074
        %2081 = vmatprep.subr.bf16.mxu0 0
        %2082 = vmatpush1.bf16.msra.mxu0 0
        %2083 = vmatprep.subr.bf16.mxu0 0
        %2084 = vmatpush1.bf16.msra.mxu0 0
        %2085 = vmatprep.subr.bf16.mxu0 0
        %2086 = vmatpush1.bf16.msra.mxu0 0
        %2087 = vmatprep.subr.bf16.mxu0 0
        %2088 = vmatpush1.bf16.msra.mxu0 0
        %2089 = vmatprep.subr.bf16.mxu0 0
        %2090 = vmatpush1.bf16.msra.mxu0 0
        %2091 = vmatprep.subr.bf16.mxu0 0
        %2092 = vmatpush1.bf16.msra.mxu0 0
        %2093 = vmatprep.subr.bf16.mxu0 0
        %2094 = vmatpush1.bf16.msra.mxu0 0
        %2095 = vmatprep.subr.bf16.mxu0 0
        %2096 = vmatpush1.bf16.msra.mxu0 0
        %2097 = vmatprep.subr.bf16.mxu0 0
        %2098 = vmatpush1.bf16.msra.mxu0 0
        %2099 = vmatprep.subr.bf16.mxu0 0
        %2100 = vmatpush1.bf16.msra.mxu0 0
        %2101 = vmatprep.subr.bf16.mxu0 0
        %2102 = vmatpush1.bf16.msra.mxu0 0
        %2103 = vmatprep.subr.bf16.mxu0 0
        %2104 = vmatpush1.bf16.msra.mxu0 0
        %2105 = vmatprep.subr.bf16.mxu0 0
        %2106 = vmatpush1.bf16.msra.mxu0 0
        %2107 = vmatprep.subr.bf16.mxu0 0
        %2108 = vmatpush1.bf16.msra.mxu0 0
        %2109 = vmatprep.mubr.bf16.mxu0 0
        %2110 = vmatmul.mubr.bf16.gmra.mrb[0].mxu0 %v1922
        %v2111 = vpop.f32.mrb[0].mxu0
        %v2112 = vadd.f32 %v2063, %v2111
        %v2113 = vpop.f32.mrb[0].mxu0
        %v2114 = vpop.f32.mrb[0].mxu0
        %v2115 = vpop.f32.mrb[0].mxu0
        %2116 = vdwg.mxu0
        %vm2117 = vcmp.gt.f32.partialorder %v2112, 0.0
        %v2118 = vmin.f32 %v2112, 0.0
        %v2119 = vmul.f32 %v2118, 1.442695
        %v2120 = vpow.pop %v2119
        %v2121 = vsub.f32 %v2120, 1.0
        %v2122 = vsel %vm2117, %v2112, %v2121
        %v2123 = vpack.c.bf16 %v2122, %v2122
        %v2124 = vld [vmem:[%s21] sm:$0xf]
        %v2125 = vld [vmem:[%s21 + $0x4] sm:$0xf]
        %v2126 = vld [vmem:[%s22] sm:$0x1]
        %v2128 = vlaneseq
        %v2129 = vshrl.u32 %v2128, 7
        %v2130 = vsub.s32 0, %v2129
        %v2131 = vrot.slane %v2126, %v2130
        %v2135 = vunpack.c.l.b16 %v2124
        %v2136 = vunpack.c.l.b16 %v2125
        %v2137 = vpack.c.b16 %v2136, %v2135
        %vm2139 = vcmask 130048
        %v2141 = vsel %vm2139, %v2123, 0
        %2143 = vmatprep.subr.bf16.mxu0 0
        %2144 = vmatpush1.bf16.msra.mxu0 %v2137
        %2145 = vmatprep.subr.bf16.mxu0 0
        %2146 = vmatpush1.bf16.msra.mxu0 0
        %2147 = vmatprep.subr.bf16.mxu0 0
        %2148 = vmatpush1.bf16.msra.mxu0 0
        %2149 = vmatprep.subr.bf16.mxu0 0
        %2150 = vmatpush1.bf16.msra.mxu0 0
        %2151 = vmatprep.subr.bf16.mxu0 0
        %2152 = vmatpush1.bf16.msra.mxu0 0
        %2153 = vmatprep.subr.bf16.mxu0 0
        %2154 = vmatpush1.bf16.msra.mxu0 0
        %2155 = vmatprep.subr.bf16.mxu0 0
        %2156 = vmatpush1.bf16.msra.mxu0 0
        %2157 = vmatprep.subr.bf16.mxu0 0
        %2158 = vmatpush1.bf16.msra.mxu0 0
        %2159 = vmatprep.subr.bf16.mxu0 0
        %2160 = vmatpush1.bf16.msra.mxu0 0
        %2161 = vmatprep.subr.bf16.mxu0 0
        %2162 = vmatpush1.bf16.msra.mxu0 0
        %2163 = vmatprep.subr.bf16.mxu0 0
        %2164 = vmatpush1.bf16.msra.mxu0 0
        %2165 = vmatprep.subr.bf16.mxu0 0
        %2166 = vmatpush1.bf16.msra.mxu0 0
        %2167 = vmatprep.subr.bf16.mxu0 0
        %2168 = vmatpush1.bf16.msra.mxu0 0
        %2169 = vmatprep.subr.bf16.mxu0 0
        %2170 = vmatpush1.bf16.msra.mxu0 0
        %2171 = vmatprep.subr.bf16.mxu0 0
        %2172 = vmatpush1.bf16.msra.mxu0 0
        %2173 = vmatprep.subr.bf16.mxu0 0
        %2174 = vmatpush1.bf16.msra.mxu0 0
        %2175 = vmatprep.mubr.bf16.mxu0 0
        %2176 = vmatmul.mubr.bf16.gmra.mrb[0].mxu0 %v2141
        %v2177 = vpop.f32.mrb[0].mxu0
        %v2178 = vadd.f32 %v2131, %v2177
        %v2179 = vpop.f32.mrb[0].mxu0
        %v2180 = vpop.f32.mrb[0].mxu0
        %v2181 = vpop.f32.mrb[0].mxu0
        %2182 = vdwg.mxu0
        %v2183 = vadd.f32 %v1896, %v2049
        %v2184 = vadd.f32 %v2183, %v2178
        %v2185 = vld [vmem:[%s23] sm:$0x1]
        %v2186 = vld [vmem:[%s24] sm:$0x1]
        %v2187 = vsel %vm1015, %v2184, 0.0
        %2188 = vadd.xlane.f32.xlu0 %v2187
        %v2189 = vpop.xlane.xlu0 %2188
        %v2190 = vmul.f32 %v2189, %v1872
        %v2191 = vsub.f32 %v2184, %v2190
        %v2192 = vmul.f32 %v2191, %v2191
        %v2193 = vsel %vm1015, %v2192, 0.0
        %2194 = vadd.xlane.f32.xlu0 %v2193
        %v2195 = vpop.xlane.xlu0 %2194
        %v2196 = vmul.f32 %v2195, %v1872
        %v2197 = vadd.f32 %v2196, 1e-05
        %v2198 = vrsqrt.pop %v2197
        %v2199 = vmul.f32 %v2191, %v2198
        %v2201 = vlaneseq
        %v2202 = vshrl.u32 %v2201, 7
        %v2203 = vsub.s32 0, %v2202
        %v2204 = vrot.slane %v2185, %v2203
        %v2206 = vmul.f32 %v2199, %v2204
        %v2208 = vlaneseq
        %v2209 = vshrl.u32 %v2208, 7
        %v2210 = vsub.s32 0, %v2209
        %v2211 = vrot.slane %v2186, %v2210
        %v2213 = vadd.f32 %v2206, %v2211
        %2214 = vst.msk [vmem:[%s769] sm:$0xff] %vm1015, %v2213
        %s2215 = sand.u32 %s591, 1
        %s2216 = scalar_lea.sflag [#allocation5], %s2215
        %s2217 = sand.u32 %s591, 1
        %s2218 = smul.addr %s2217, 8
        %s2219 = scalar_lea.vmem [#allocation4], %s2218
        // Predicated region
        $region125: #{tpu_custom_call.1} parent=119 // pred_check
          %p2220 = pneg %p601
        $region126: #{tpu_custom_call.1} parent=119 // pred_check_branch
          %2222 = sbr.rel (%p2220) target = $region128
        $region127: #{tpu_custom_call.1} parent=119 // pred_region
          %s2224 = ssub.s32 128, 128
          %2225 = vsyncadd %s2216, %s2224
          %s2226 = sadd.s32 %s44, %s43
          %s2227 = smul.addr %s2226, 128
          %s2228 = scalar_lea.hbm %s25, %s2227
          %s2230 = sshll.u32 %s2219, 4
          %s2231 = int_to_ptr.vmem [resolvable:$true] %s2230
          %2233 = dma.vmem_to_hbm [thread:$0]  %s2231, 128, %s2228, %s2216
        $region128: #{tpu_custom_call.1} parent=119 // pred_fallthru
          _
      $region120: #{tpu_custom_call.1} parent=5 // pred_fallthru
        _
      %p2234 = scmp.le.s32.totalorder 2, %s34
      // Predicated region
      $region129: #{tpu_custom_call.1} parent=5 // pred_check
        %p2235 = pneg %p2234
      $region130: #{tpu_custom_call.1} parent=5 // pred_check_branch
        %2237 = sbr.rel (%p2235) target = $region132
      $region131: #{tpu_custom_call.1} parent=5 // pred_region
        %s2238 = ssub.s32 %s34, 2
        // Predicated region
        $region133: #{tpu_custom_call.1} parent=131 // pred_check
          %p2239 = pneg %p607
        $region134: #{tpu_custom_call.1} parent=131 // pred_check_branch
          %2241 = sbr.rel (%p2239) target = $region136
        $region135: #{tpu_custom_call.1} parent=131 // pred_region
          %s2242 = sand.u32 %s592, 1
          %s2243 = scalar_lea.sflag [#allocation5], %s2242
          %s2244 = sand.u32 %s592, 1
          %s2245 = smul.addr %s2244, 8
          %s2246 = scalar_lea.vmem [#allocation4], %s2245
          %2247 = dma.done %s2243, 128
        $region136: #{tpu_custom_call.1} parent=131 // pred_fallthru
          _
      $region132: #{tpu_custom_call.1} parent=5 // pred_fallthru
        _
    $region6: #{tpu_custom_call.1} parent=1 // loop_footer
      %s38 = sadd.s32 1, %s34
    $region7: #{tpu_custom_call.1} parent=1 // loop_footer_branch
      %33 = sbr.rel target = $region3
    $region8: #{tpu_custom_call.1} parent=1 // loop_exit
      _
    %2248 = vsyncpa [#allocation5], 1
    %s2249 = scalar_lea.sflag [#allocation5], 1
    %2250 = vsyncpa %s2249, 1

</llo_original>
